<compile_context>
chip_gen: v6e
topology: v6e:2x2x1
jax: 0.10.0
libtpu: 0.0.40
codegen_flags: <defaults>
</compile_context>

<pallas_src>
import functools

import jax
import jax.numpy as jnp
from jax.experimental import pallas as pl
from jax.experimental.pallas import tpu as pltpu


def make_dueling_q_kernel(n_actions):
    """Kernel closure over the (static) number of actions."""

    def kernel(
        x_ref,                      # (tb, D)        f32  (cast to bf16 in-kernel)
        w1_ref, b1_ref,             # fc1:           (D, 1024) bf16, (1, 1024) f32
        w2q_ref, s2_ref, b2_ref,    # fc2:           (1024, 512) int8, (1, 512) f32, (1, 512) f32
        wvaq_ref, sva_ref, bva_ref, # fc_value|fc_advantage fused: (512, 768) int8 + scales + bias
        wh_ref, bh_ref,             # fused heads:   (768, HP) bf16, (1, HP) f32
        q_ref,                      # output:        (tb, HP) f32 (lane-padded, wrapper slices)
    ):
        # In-kernel activation cast (VPU op, hidden under the weight DMA).
        x = x_ref[...].astype(w1_ref.dtype)

        # fc1 + ReLU  (dropout1 == identity in eval mode)
        h1 = jnp.dot(x, w1_ref[...], preferred_element_type=jnp.float32) + b1_ref[...]
        h1 = jnp.maximum(h1, 0.0).astype(jnp.bfloat16)

        # Dequantize int8 weights -> bf16 (per-output-channel scales).  Weights were
        # DMA'd at half the bytes; dequant is cheap VPU work.  Done every grid step
        # (instead of once via pl.when(program_id==0) + scratch) so it stays correct
        # under megacore "parallel" sharding of the batch grid.
        w2 = (w2q_ref[...].astype(jnp.float32) * s2_ref[...]).astype(jnp.bfloat16)
        wva = (wvaq_ref[...].astype(jnp.float32) * sva_ref[...]).astype(jnp.bfloat16)

        # fc2 + ReLU  (dropout2 == identity in eval mode)
        h2 = jnp.dot(h1, w2, preferred_element_type=jnp.float32) + b2_ref[...]
        h2 = jnp.maximum(h2, 0.0).astype(jnp.bfloat16)

        # fused fc_value | fc_advantage hidden layers: one (512, 768) matmul + ReLU
        y = jnp.dot(h2, wva, preferred_element_type=jnp.float32) + bva_ref[...]
        y = jnp.maximum(y, 0.0).astype(jnp.bfloat16)

        # fused block-diagonal heads on the MXU:
        #   cols [0, A)  = advantage head (fed by y[:, 512:768])
        #   col  A       = value head     (fed by y[:, 0:512])
        #   cols > A     = zero padding (zero weights + zero bias)
        heads = jnp.dot(y, wh_ref[...], preferred_element_type=jnp.float32) + bh_ref[...]

        adv = heads[:, :n_actions]                         # (tb, A)  real advantage cols only
        val = heads[:, n_actions:n_actions + 1]            # (tb, 1)
        adv_mean = jnp.mean(adv, axis=1, keepdims=True)    # mean over the A real columns

        # q = val + (adv - adv_mean); write the full 128-lane padded tile (unmasked vst).
        # Padding / value columns hold harmless garbage and are sliced off in the wrapper.
        q_ref[...] = heads + (val - adv_mean)

    return kernel


@functools.partial(jax.jit, static_argnames=("n_actions",))
def dueling_q_forward(x, packed_params, *, n_actions):
    (w1, b1, w2q, s2, b2, wvaq, sva, bva, wh, bh) = packed_params
    B, D = x.shape
    HP = wh.shape[1]  # lane-padded head width (multiple of 128)

    # Batch tile: whole batch when small; 512-row tiles for large batches (better
    # HBM-roofline utilisation per grid step and fills the MXU M dimension).
    tb = B if B <= 512 else 512
    grid = (pl.cdiv(B, tb),)

    def batch_spec(shape):
        return pl.BlockSpec(shape, lambda i: (i, 0))

    def resident_spec(arr):
        # Full-array block, constant index -> DMA'd once and kept resident.
        # Single-buffered: the default 2nd pipeline buffer is pure VMEM waste here.
        return pl.BlockSpec(arr.shape, lambda i: (0, 0), pipeline_mode=pl.Buffered(1))

    weights = (w1, b1, w2q, s2, b2, wvaq, sva, bva, wh, bh)

    matmul_flops = 2 * B * (D * 1024 + 1024 * 512 + 512 * 768 + 768 * HP)
    bytes_accessed = (
        x.size * x.dtype.itemsize
        + sum(p.size * p.dtype.itemsize for p in weights)
        + B * HP * 4
    )

    q_pad = pl.pallas_call(
        make_dueling_q_kernel(n_actions),
        out_shape=jax.ShapeDtypeStruct((B, HP), jnp.float32),
        grid=grid,
        in_specs=[batch_spec((tb, D))] + [resident_spec(p) for p in weights],
        out_specs=batch_spec((tb, HP)),
        compiler_params=pltpu.CompilerParams(
            # NOTE: on v7x megacore, "parallel" shards the batch grid across the two
            # TensorCores (each re-DMAs the ~1 MiB int8 weight set); kept because the
            # kernel has no cross-step state and large batches gain 2x MXU.
            dimension_semantics=("parallel",),
            vmem_limit_bytes=32 * 1024 * 1024,
        ),
        cost_estimate=pl.CostEstimate(
            flops=matmul_flops,
            transcendentals=0,
            bytes_accessed=bytes_accessed,
        ),
    )(x, *weights)

    return q_pad[:, :n_actions]


def init_params(key, input_dims, n_actions):
    """Deterministic PyTorch-Linear-style init: U(-1/sqrt(fan_in), 1/sqrt(fan_in)). f32."""
    dims = [
        (input_dims, 1024),  # fc1
        (1024, 512),         # fc2
        (512, 512),          # fc_value
        (512, 1),            # value
        (512, 256),          # fc_advantage
        (256, n_actions),    # advantage
    ]
    params = []
    keys = jax.random.split(key, 2 * len(dims))
    for i, (fan_in, fan_out) in enumerate(dims):
        bound = 1.0 / jnp.sqrt(jnp.float32(fan_in))
        w = jax.random.uniform(keys[2 * i], (fan_in, fan_out), jnp.float32, -bound, bound)
        b = jax.random.uniform(keys[2 * i + 1], (1, fan_out), jnp.float32, -bound, bound)
        params += [w, b]
    return tuple(params)


def pack_inference_params(params_f32, weight_dtype=jnp.bfloat16):
    """Fuse the stream hidden layers, int8-quantize the two big weights (per-output-channel
    scales), and build the block-diagonal lane-padded heads matrix."""
    (w1, b1, w2, b2, wv1, bv1, wv2, bv2, wa1, ba1, wa2, ba2) = params_f32
    n_actions = wa2.shape[1]
    v_hidden = wv1.shape[1]      # 512
    a_hidden = wa1.shape[1]      # 256

    # Fused value|advantage hidden layer: (512, 768) -> one MXU pass.
    wva = jnp.concatenate([wv1, wa1], axis=1)          # (512, 768) f32
    bva = jnp.concatenate([bv1, ba1], axis=1)          # (1, 768)   f32

    def quant_int8(w):
        amax = jnp.max(jnp.abs(w), axis=0, keepdims=True)          # per output channel
        scale = jnp.where(amax > 0, amax / 127.0, 1.0)
        wq = jnp.clip(jnp.round(w / scale), -127, 127).astype(jnp.int8)
        return wq, scale.astype(jnp.float32)

    w2q, s2 = quant_int8(w2)        # (1024, 512) int8, (1, 512) f32
    wvaq, sva = quant_int8(wva)     # (512, 768)  int8, (1, 768) f32

    # Block-diagonal fused heads, padded to a multiple of 128 lanes:
    #   rows 0:512   (value stream)     -> column n_actions      (value head)
    #   rows 512:768 (advantage stream) -> columns [0, n_actions) (advantage head)
    hp = max(128, ((n_actions + 1 + 127) // 128) * 128)
    wh = jnp.zeros((v_hidden + a_hidden, hp), jnp.float32)
    wh = wh.at[v_hidden:, :n_actions].set(wa2)
    wh = wh.at[:v_hidden, n_actions].set(wv2[:, 0])
    bh = jnp.zeros((1, hp), jnp.float32)
    bh = bh.at[0, :n_actions].set(ba2[0])
    bh = bh.at[0, n_actions].set(bv2[0, 0])

    return (
        w1.astype(weight_dtype), b1,
        w2q, s2, b2,
        wvaq, sva, bva,
        wh.astype(weight_dtype), bh,
    )


def reference_forward(x, params):
    """Pure-JAX f32 reference of the original (unfused, unquantized) module."""
    (w1, b1, w2, b2, wv1, bv1, wv2, bv2, wa1, ba1, wa2, ba2) = params
    h1 = jax.nn.relu(x @ w1 + b1)
    h2 = jax.nn.relu(h1 @ w2 + b2)
    v = jax.nn.relu(h2 @ wv1 + bv1)
    val = v @ wv2 + bv2
    a = jax.nn.relu(h2 @ wa1 + ba1)
    adv = a @ wa2 + ba2
    return val + (adv - adv.mean(axis=1, keepdims=True))


if __name__ == "__main__":
    B = 8            # batch (use larger batches in the RL loop to amortize weight DMA)
    INPUT_DIMS = 32  # state feature dimension
    N_ACTIONS = 4

    key = jax.random.PRNGKey(0)
    k_x, k_p = jax.random.split(key)
    x = jax.random.normal(k_x, (B, INPUT_DIMS), dtype=jnp.float32)
    params_f32 = init_params(k_p, INPUT_DIMS, N_ACTIONS)
    packed = pack_inference_params(params_f32)

    q = dueling_q_forward(x, packed, n_actions=N_ACTIONS)
    q = jax.block_until_ready(q)

    q_ref = reference_forward(x, params_f32)
    assert q.shape == (B, N_ACTIONS)
    # bf16 activations + int8 per-channel weights (f32 accumulation) -> loose tolerance
    # vs the pure-f32 reference; fine for RL Q-value inference.
    assert jnp.allclose(q, q_ref, atol=5e-2, rtol=5e-2), "mismatch vs reference"

    print("KERNEL_OK")
</pallas_src>

<mosaic_0001>
module attributes {stable_mosaic.version = 11 : i64} {
  func.func @kernel(%arg0: i32, %arg1: memref<8x32xf32, #tpu.memory_space<vmem>>, %arg2: memref<32x1024xbf16, #tpu.memory_space<vmem>>, %arg3: memref<1x1024xf32, #tpu.memory_space<vmem>>, %arg4: memref<1024x512xi8, #tpu.memory_space<vmem>>, %arg5: memref<1x512xf32, #tpu.memory_space<vmem>>, %arg6: memref<1x512xf32, #tpu.memory_space<vmem>>, %arg7: memref<512x768xi8, #tpu.memory_space<vmem>>, %arg8: memref<1x768xf32, #tpu.memory_space<vmem>>, %arg9: memref<1x768xf32, #tpu.memory_space<vmem>>, %arg10: memref<768x128xbf16, #tpu.memory_space<vmem>>, %arg11: memref<1x128xf32, #tpu.memory_space<vmem>>, %arg12: memref<8x128xf32, #tpu.memory_space<vmem>>) attributes {dimension_semantics = [#tpu.dimension_semantics<parallel>], iteration_bounds = array<i64: 1>, scalar_prefetch = 0 : i64, scratch_operands = 0 : i64, tpu.core_type = #tpu.core_type<tc>, window_params = [{transform_indices = @transform_0, window_bounds = array<i64: 8, 32>}, {pipeline_mode = #tpu.pipeline_mode<synchronous>, transform_indices = @transform_1, window_bounds = array<i64: 32, 1024>}, {pipeline_mode = #tpu.pipeline_mode<synchronous>, transform_indices = @transform_2, window_bounds = array<i64: 1, 1024>}, {pipeline_mode = #tpu.pipeline_mode<synchronous>, transform_indices = @transform_3, window_bounds = array<i64: 1024, 512>}, {pipeline_mode = #tpu.pipeline_mode<synchronous>, transform_indices = @transform_4, window_bounds = array<i64: 1, 512>}, {pipeline_mode = #tpu.pipeline_mode<synchronous>, transform_indices = @transform_5, window_bounds = array<i64: 1, 512>}, {pipeline_mode = #tpu.pipeline_mode<synchronous>, transform_indices = @transform_6, window_bounds = array<i64: 512, 768>}, {pipeline_mode = #tpu.pipeline_mode<synchronous>, transform_indices = @transform_7, window_bounds = array<i64: 1, 768>}, {pipeline_mode = #tpu.pipeline_mode<synchronous>, transform_indices = @transform_8, window_bounds = array<i64: 1, 768>}, {pipeline_mode = #tpu.pipeline_mode<synchronous>, transform_indices = @transform_9, window_bounds = array<i64: 768, 128>}, {pipeline_mode = #tpu.pipeline_mode<synchronous>, transform_indices = @transform_10, window_bounds = array<i64: 1, 128>}, {transform_indices = @transform_11, window_bounds = array<i64: 8, 128>}]} {
    %c0 = arith.constant 0 : index
    %c0_0 = arith.constant 0 : index
    %0 = vector.load %arg1[%c0, %c0_0] : memref<8x32xf32, #tpu.memory_space<vmem>>, vector<8x32xf32>
    %1 = arith.truncf %0 : vector<8x32xf32> to vector<8x32xbf16>
    %c0_1 = arith.constant 0 : index
    %c0_2 = arith.constant 0 : index
    %2 = vector.load %arg2[%c0_1, %c0_2] : memref<32x1024xbf16, #tpu.memory_space<vmem>>, vector<32x1024xbf16>
    %cst = arith.constant dense<0.000000e+00> : vector<8x1024xf32>
    %3 = tpu.matmul %1, %2, %cst {dimension_numbers = #tpu.dot_dimension_numbers<[1], [0], [0], [1], [0, 0, 1, 1], [], []>} : vector<8x32xbf16>, vector<32x1024xbf16>, vector<8x1024xf32> -> vector<8x1024xf32>
    %c0_3 = arith.constant 0 : index
    %c0_4 = arith.constant 0 : index
    %4 = vector.load %arg3[%c0_3, %c0_4] : memref<1x1024xf32, #tpu.memory_space<vmem>>, vector<1x1024xf32>
    %5 = vector.broadcast %4 : vector<1x1024xf32> to vector<8x1024xf32>
    %6 = arith.addf %3, %5 : vector<8x1024xf32>
    %cst_5 = arith.constant 0.000000e+00 : f32
    %7 = vector.broadcast %cst_5 : f32 to vector<8x1024xf32>
    %8 = arith.maximumf %6, %7 : vector<8x1024xf32>
    %9 = arith.truncf %8 : vector<8x1024xf32> to vector<8x1024xbf16>
    %c0_6 = arith.constant 0 : index
    %c0_7 = arith.constant 0 : index
    %10 = vector.load %arg4[%c0_6, %c0_7] : memref<1024x512xi8, #tpu.memory_space<vmem>>, vector<1024x512xi8>
    %11 = arith.sitofp %10 : vector<1024x512xi8> to vector<1024x512xf32>
    %c0_8 = arith.constant 0 : index
    %c0_9 = arith.constant 0 : index
    %12 = vector.load %arg5[%c0_8, %c0_9] : memref<1x512xf32, #tpu.memory_space<vmem>>, vector<1x512xf32>
    %13 = vector.broadcast %12 : vector<1x512xf32> to vector<1024x512xf32>
    %14 = arith.mulf %11, %13 : vector<1024x512xf32>
    %15 = arith.truncf %14 : vector<1024x512xf32> to vector<1024x512xbf16>
    %c0_10 = arith.constant 0 : index
    %c0_11 = arith.constant 0 : index
    %16 = vector.load %arg7[%c0_10, %c0_11] : memref<512x768xi8, #tpu.memory_space<vmem>>, vector<512x768xi8>
    %17 = arith.sitofp %16 : vector<512x768xi8> to vector<512x768xf32>
    %c0_12 = arith.constant 0 : index
    %c0_13 = arith.constant 0 : index
    %18 = vector.load %arg8[%c0_12, %c0_13] : memref<1x768xf32, #tpu.memory_space<vmem>>, vector<1x768xf32>
    %19 = vector.broadcast %18 : vector<1x768xf32> to vector<512x768xf32>
    %20 = arith.mulf %17, %19 : vector<512x768xf32>
    %21 = arith.truncf %20 : vector<512x768xf32> to vector<512x768xbf16>
    %cst_14 = arith.constant dense<0.000000e+00> : vector<8x512xf32>
    %22 = tpu.matmul %9, %15, %cst_14 {dimension_numbers = #tpu.dot_dimension_numbers<[1], [0], [0], [1], [0, 0, 1, 1], [], []>} : vector<8x1024xbf16>, vector<1024x512xbf16>, vector<8x512xf32> -> vector<8x512xf32>
    %c0_15 = arith.constant 0 : index
    %c0_16 = arith.constant 0 : index
    %23 = vector.load %arg6[%c0_15, %c0_16] : memref<1x512xf32, #tpu.memory_space<vmem>>, vector<1x512xf32>
    %24 = vector.broadcast %23 : vector<1x512xf32> to vector<8x512xf32>
    %25 = arith.addf %22, %24 : vector<8x512xf32>
    %cst_17 = arith.constant 0.000000e+00 : f32
    %26 = vector.broadcast %cst_17 : f32 to vector<8x512xf32>
    %27 = arith.maximumf %25, %26 : vector<8x512xf32>
    %28 = arith.truncf %27 : vector<8x512xf32> to vector<8x512xbf16>
    %cst_18 = arith.constant dense<0.000000e+00> : vector<8x768xf32>
    %29 = tpu.matmul %28, %21, %cst_18 {dimension_numbers = #tpu.dot_dimension_numbers<[1], [0], [0], [1], [0, 0, 1, 1], [], []>} : vector<8x512xbf16>, vector<512x768xbf16>, vector<8x768xf32> -> vector<8x768xf32>
    %c0_19 = arith.constant 0 : index
    %c0_20 = arith.constant 0 : index
    %30 = vector.load %arg9[%c0_19, %c0_20] : memref<1x768xf32, #tpu.memory_space<vmem>>, vector<1x768xf32>
    %31 = vector.broadcast %30 : vector<1x768xf32> to vector<8x768xf32>
    %32 = arith.addf %29, %31 : vector<8x768xf32>
    %cst_21 = arith.constant 0.000000e+00 : f32
    %33 = vector.broadcast %cst_21 : f32 to vector<8x768xf32>
    %34 = arith.maximumf %32, %33 : vector<8x768xf32>
    %35 = arith.truncf %34 : vector<8x768xf32> to vector<8x768xbf16>
    %c0_22 = arith.constant 0 : index
    %c0_23 = arith.constant 0 : index
    %36 = vector.load %arg10[%c0_22, %c0_23] : memref<768x128xbf16, #tpu.memory_space<vmem>>, vector<768x128xbf16>
    %cst_24 = arith.constant dense<0.000000e+00> : vector<8x128xf32>
    %37 = tpu.matmul %35, %36, %cst_24 {dimension_numbers = #tpu.dot_dimension_numbers<[1], [0], [0], [1], [0, 0, 1, 1], [], []>} : vector<8x768xbf16>, vector<768x128xbf16>, vector<8x128xf32> -> vector<8x128xf32>
    %c0_25 = arith.constant 0 : index
    %c0_26 = arith.constant 0 : index
    %38 = vector.load %arg11[%c0_25, %c0_26] : memref<1x128xf32, #tpu.memory_space<vmem>>, vector<1x128xf32>
    %39 = vector.broadcast %38 : vector<1x128xf32> to vector<8x128xf32>
    %40 = arith.addf %37, %39 : vector<8x128xf32>
    %41 = vector.extract_strided_slice %40 {offsets = [0, 0], sizes = [8, 4], strides = [1, 1]} : vector<8x128xf32> to vector<8x4xf32>
    %42 = vector.extract_strided_slice %40 {offsets = [0, 4], sizes = [8, 1], strides = [1, 1]} : vector<8x128xf32> to vector<8x1xf32>
    %cst_27 = arith.constant dense<0.000000e+00> : vector<8xf32>
    %43 = vector.multi_reduction <add>, %41, %cst_27 [1] : vector<8x4xf32> to vector<8xf32>
    %44 = vector.shape_cast %43 : vector<8xf32> to vector<8x1xf32>
    %cst_28 = arith.constant 4.000000e+00 : f32
    %45 = vector.broadcast %cst_28 : f32 to vector<8x1xf32>
    %46 = arith.divf %44, %45 : vector<8x1xf32>
    %47 = arith.subf %42, %46 : vector<8x1xf32>
    %48 = vector.broadcast %47 : vector<8x1xf32> to vector<8x128xf32>
    %49 = arith.addf %40, %48 : vector<8x128xf32>
    %c0_29 = arith.constant 0 : index
    %c0_30 = arith.constant 0 : index
    %50 = vector.load %arg12[%c0_29, %c0_30] : memref<8x128xf32, #tpu.memory_space<vmem>>, vector<8x128xf32>
    tpu.vector_store %arg12[%c0_29, %c0_30], %49 {strides = array<i32>} : memref<8x128xf32, #tpu.memory_space<vmem>>, vector<8x128xf32>,
    return
  }
  func.func @transform_0(%arg0: i32) -> (i32, i32) {
    %c0_i32 = arith.constant 0 : i32
    %c0_i32_0 = arith.constant 0 : i32
    return %arg0, %c0_i32 : i32, i32
  }
  func.func @transform_1(%arg0: i32) -> (i32, i32) {
    %c0_i32 = arith.constant 0 : i32
    %c0_i32_0 = arith.constant 0 : i32
    %c0_i32_1 = arith.constant 0 : i32
    return %c0_i32, %c0_i32_0 : i32, i32
  }
  func.func @transform_2(%arg0: i32) -> (i32, i32) {
    %c0_i32 = arith.constant 0 : i32
    %c0_i32_0 = arith.constant 0 : i32
    %c0_i32_1 = arith.constant 0 : i32
    return %c0_i32, %c0_i32_0 : i32, i32
  }
  func.func @transform_3(%arg0: i32) -> (i32, i32) {
    %c0_i32 = arith.constant 0 : i32
    %c0_i32_0 = arith.constant 0 : i32
    %c0_i32_1 = arith.constant 0 : i32
    return %c0_i32, %c0_i32_0 : i32, i32
  }
  func.func @transform_4(%arg0: i32) -> (i32, i32) {
    %c0_i32 = arith.constant 0 : i32
    %c0_i32_0 = arith.constant 0 : i32
    %c0_i32_1 = arith.constant 0 : i32
    return %c0_i32, %c0_i32_0 : i32, i32
  }
  func.func @transform_5(%arg0: i32) -> (i32, i32) {
    %c0_i32 = arith.constant 0 : i32
    %c0_i32_0 = arith.constant 0 : i32
    %c0_i32_1 = arith.constant 0 : i32
    return %c0_i32, %c0_i32_0 : i32, i32
  }
  func.func @transform_6(%arg0: i32) -> (i32, i32) {
    %c0_i32 = arith.constant 0 : i32
    %c0_i32_0 = arith.constant 0 : i32
    %c0_i32_1 = arith.constant 0 : i32
    return %c0_i32, %c0_i32_0 : i32, i32
  }
  func.func @transform_7(%arg0: i32) -> (i32, i32) {
    %c0_i32 = arith.constant 0 : i32
    %c0_i32_0 = arith.constant 0 : i32
    %c0_i32_1 = arith.constant 0 : i32
    return %c0_i32, %c0_i32_0 : i32, i32
  }
  func.func @transform_8(%arg0: i32) -> (i32, i32) {
    %c0_i32 = arith.constant 0 : i32
    %c0_i32_0 = arith.constant 0 : i32
    %c0_i32_1 = arith.constant 0 : i32
    return %c0_i32, %c0_i32_0 : i32, i32
  }
  func.func @transform_9(%arg0: i32) -> (i32, i32) {
    %c0_i32 = arith.constant 0 : i32
    %c0_i32_0 = arith.constant 0 : i32
    %c0_i32_1 = arith.constant 0 : i32
    return %c0_i32, %c0_i32_0 : i32, i32
  }
  func.func @transform_10(%arg0: i32) -> (i32, i32) {
    %c0_i32 = arith.constant 0 : i32
    %c0_i32_0 = arith.constant 0 : i32
    %c0_i32_1 = arith.constant 0 : i32
    return %c0_i32, %c0_i32_0 : i32, i32
  }
  func.func @transform_11(%arg0: i32) -> (i32, i32) {
    %c0_i32 = arith.constant 0 : i32
    %c0_i32_0 = arith.constant 0 : i32
    return %arg0, %c0_i32 : i32, i32
  }
}

</mosaic_0001>

<llo_original>
// kernel: dueling_q_forward.1
$region0: #{dueling_q_forward.1}
  #allocation0 [shape = 'u32[]', space=smem, size = 0x4, offset = 0x4, fixed_abs, tag = 'smem constant byte address 0x4 - core index']
  #allocation1 [shape = 'u32[144,128]{1,0:T(1,128)}', space=vmem, size = 0x12000, scoped, tag = 'internal scratch']
  %s0 = inlined_call_operand.hbm [shape: f32[8,32], index: 0, kind: input, shape index: {}]
  %s1 = inlined_call_operand.hbm [shape: bf16[32,1024], index: 1, kind: input, shape index: {}]
  %s2 = inlined_call_operand.hbm [shape: f32[1,1024], index: 2, kind: input, shape index: {}]
  %s3 = inlined_call_operand.hbm [shape: s8[1024,512], index: 3, kind: input, shape index: {}]
  %s4 = inlined_call_operand.hbm [shape: f32[1,512], index: 4, kind: input, shape index: {}]
  %s5 = inlined_call_operand.hbm [shape: f32[1,512], index: 5, kind: input, shape index: {}]
  %s6 = inlined_call_operand.hbm [shape: s8[512,768], index: 6, kind: input, shape index: {}]
  %s7 = inlined_call_operand.vmem [shape: f32[1,768], index: 7, kind: input, shape index: {}]
  %s8 = inlined_call_operand.vmem [shape: f32[1,768], index: 8, kind: input, shape index: {}]
  %s9 = inlined_call_operand.hbm [shape: bf16[768,128], index: 9, kind: input, shape index: {}]
  %s10 = inlined_call_operand.vmem [shape: f32[1,128], index: 10, kind: input, shape index: {}]
  %s11 = inlined_call_operand.vmem [shape: f32[8,128], index: 11, kind: output, shape index: {}]
  %s12 = sld [smem:[#allocation0]]
  $region86: #{dueling_q_forward.1} parent=0
    _
  %s14 = ssub.s32 1, %s12
  %s15 = scalar_select 0, %s14, %s12
  $region1: #{dueling_q_forward.1} parent=0
    #allocation2 [shape = 'u8[4096]{0}', space=vmem, size = 0x1000, scoped, tag = 'input window, operand 0, single buffered']
    #allocation3 [shape = 's32[1]{0}', space=sflag, size = 0x4, scoped, tag = 'scoped memory for dueling_q_forward.1']
    #allocation4 [shape = 'u8[65536]{0}', space=vmem, size = 0x10000, scoped, tag = 'input window, operand 1, single buffered']
    #allocation5 [shape = 's32[1]{0}', space=sflag, size = 0x4, scoped, tag = 'scoped memory for dueling_q_forward.1']
    #allocation6 [shape = 'u8[4096]{0}', space=vmem, size = 0x1000, scoped, tag = 'input window, operand 2, single buffered']
    #allocation7 [shape = 'u8[524288]{0}', space=vmem, size = 0x80000, scoped, tag = 'input window, operand 3, single buffered']
    #allocation8 [shape = 's32[1]{0}', space=sflag, size = 0x4, scoped, tag = 'scoped memory for dueling_q_forward.1']
    #allocation9 [shape = 'u8[2048]{0}', space=vmem, size = 0x800, scoped, tag = 'input window, operand 4, single buffered']
    #allocation10 [shape = 'u8[2048]{0}', space=vmem, size = 0x800, scoped, tag = 'input window, operand 5, single buffered']
    #allocation11 [shape = 's32[1]{0}', space=sflag, size = 0x4, scoped, tag = 'scoped memory for dueling_q_forward.1']
    #allocation12 [shape = 'u8[393216]{0}', space=vmem, size = 0x60000, scoped, tag = 'input window, operand 6, single buffered']
    #allocation13 [shape = 'u8[196608]{0}', space=vmem, size = 0x30000, scoped, tag = 'input window, operand 9, single buffered']
    #allocation14 [shape = 's32[1]{0}', space=sflag, size = 0x4, scoped, tag = 'scoped memory for dueling_q_forward.1']
    %16 = vsyncpa [#allocation3], 0
    %17 = vsyncpa [#allocation5], 0
    %18 = vsyncpa [#allocation8], 0
    %19 = vsyncpa [#allocation11], 0
    %20 = vsyncpa [#allocation14], 0
    // Predicated region
    $region2: #{dueling_q_forward.1} parent=1 // pred_check
      _
    $region3: #{dueling_q_forward.1} parent=1 // pred_check_branch
      %22 = sbr.rel (0) target = $region5
    $region4: #{dueling_q_forward.1} parent=1 // pred_region
      %s24 = ssub.s32 128, 128
      %25 = vsyncadd [#allocation3], %s24
      %s27 = sshll.u32 [#allocation2], 4
      %s28 = int_to_ptr.vmem [resolvable:$true] %s27
      %30 = dma.hbm_to_vmem [thread:$0]  %s0, 128, %s28, [#allocation3]
    $region5: #{dueling_q_forward.1} parent=1 // pred_fallthru
      _
    // Predicated region
    $region6: #{dueling_q_forward.1} parent=1 // pred_check
      _
    $region7: #{dueling_q_forward.1} parent=1 // pred_check_branch
      %32 = sbr.rel (0) target = $region9
    $region8: #{dueling_q_forward.1} parent=1 // pred_region
      %s34 = ssub.s32 2048, 2048
      %35 = vsyncadd [#allocation5], %s34
      %s36 = sshll.u32 [#allocation4], 4
      %s37 = int_to_ptr.vmem [resolvable:$true] %s36
      %42 = dma.hbm_to_vmem [thread:$0]  %s1, 2048, %s37, [#allocation5], 512, 512, 32
    $region9: #{dueling_q_forward.1} parent=1 // pred_fallthru
      _
    // Predicated region
    $region10: #{dueling_q_forward.1} parent=1 // pred_check
      _
    $region11: #{dueling_q_forward.1} parent=1 // pred_check_branch
      %44 = sbr.rel (0) target = $region13
    $region12: #{dueling_q_forward.1} parent=1 // pred_region
      %s46 = ssub.s32 128, 128
      %47 = vsyncadd [#allocation5], %s46
      %s49 = sshll.u32 [#allocation6], 4
      %s50 = int_to_ptr.vmem [resolvable:$true] %s49
      %52 = dma.hbm_to_vmem [thread:$0]  %s2, 128, %s50, [#allocation5]
    $region13: #{dueling_q_forward.1} parent=1 // pred_fallthru
      _
    // Predicated region
    $region14: #{dueling_q_forward.1} parent=1 // pred_check
      _
    $region15: #{dueling_q_forward.1} parent=1 // pred_check_branch
      %54 = sbr.rel (0) target = $region17
    $region16: #{dueling_q_forward.1} parent=1 // pred_region
      %s56 = ssub.s32 16384, 16384
      %57 = vsyncadd [#allocation8], %s56
      %s58 = sshll.u32 [#allocation7], 4
      %s59 = int_to_ptr.vmem [resolvable:$true] %s58
      %64 = dma.hbm_to_vmem [thread:$0]  %s3, 16384, %s59, [#allocation8], 512, 512, 32
    $region17: #{dueling_q_forward.1} parent=1 // pred_fallthru
      _
    // Predicated region
    $region18: #{dueling_q_forward.1} parent=1 // pred_check
      _
    $region19: #{dueling_q_forward.1} parent=1 // pred_check_branch
      %66 = sbr.rel (0) target = $region21
    $region20: #{dueling_q_forward.1} parent=1 // pred_region
      %s68 = ssub.s32 64, 64
      %69 = vsyncadd [#allocation8], %s68
      %s71 = sshll.u32 [#allocation9], 4
      %s72 = int_to_ptr.vmem [resolvable:$true] %s71
      %74 = dma.hbm_to_vmem [thread:$0]  %s4, 64, %s72, [#allocation8]
    $region21: #{dueling_q_forward.1} parent=1 // pred_fallthru
      _
    // Predicated region
    $region22: #{dueling_q_forward.1} parent=1 // pred_check
      _
    $region23: #{dueling_q_forward.1} parent=1 // pred_check_branch
      %76 = sbr.rel (0) target = $region25
    $region24: #{dueling_q_forward.1} parent=1 // pred_region
      %s78 = ssub.s32 64, 64
      %79 = vsyncadd [#allocation11], %s78
      %s81 = sshll.u32 [#allocation10], 4
      %s82 = int_to_ptr.vmem [resolvable:$true] %s81
      %84 = dma.hbm_to_vmem [thread:$0]  %s5, 64, %s82, [#allocation11]
    $region25: #{dueling_q_forward.1} parent=1 // pred_fallthru
      _
    // Predicated region
    $region26: #{dueling_q_forward.1} parent=1 // pred_check
      _
    $region27: #{dueling_q_forward.1} parent=1 // pred_check_branch
      %86 = sbr.rel (0) target = $region29
    $region28: #{dueling_q_forward.1} parent=1 // pred_region
      %s88 = ssub.s32 12288, 12288
      %89 = vsyncadd [#allocation11], %s88
      %s90 = sshll.u32 [#allocation12], 4
      %s91 = int_to_ptr.vmem [resolvable:$true] %s90
      %96 = dma.hbm_to_vmem [thread:$0]  %s6, 12288, %s91, [#allocation11], 768, 768, 48
    $region29: #{dueling_q_forward.1} parent=1 // pred_fallthru
      _
    // Predicated region
    $region30: #{dueling_q_forward.1} parent=1 // pred_check
      _
    $region31: #{dueling_q_forward.1} parent=1 // pred_check_branch
      %98 = sbr.rel (0) target = $region33
    $region32: #{dueling_q_forward.1} parent=1 // pred_region
      _
    $region33: #{dueling_q_forward.1} parent=1 // pred_fallthru
      _
    // Predicated region
    $region34: #{dueling_q_forward.1} parent=1 // pred_check
      _
    $region35: #{dueling_q_forward.1} parent=1 // pred_check_branch
      %100 = sbr.rel (0) target = $region37
    $region36: #{dueling_q_forward.1} parent=1 // pred_region
      _
    $region37: #{dueling_q_forward.1} parent=1 // pred_fallthru
      _
    // Predicated region
    $region38: #{dueling_q_forward.1} parent=1 // pred_check
      _
    $region39: #{dueling_q_forward.1} parent=1 // pred_check_branch
      %102 = sbr.rel (0) target = $region41
    $region40: #{dueling_q_forward.1} parent=1 // pred_region
      %s104 = ssub.s32 6144, 6144
      %105 = vsyncadd [#allocation14], %s104
      %s106 = sshll.u32 [#allocation13], 4
      %s107 = int_to_ptr.vmem [resolvable:$true] %s106
      %112 = dma.hbm_to_vmem [thread:$0]  %s9, 6144, %s107, [#allocation14], 64, 64, 4
    $region41: #{dueling_q_forward.1} parent=1 // pred_fallthru
      _
    // Predicated region
    $region42: #{dueling_q_forward.1} parent=1 // pred_check
      _
    $region43: #{dueling_q_forward.1} parent=1 // pred_check_branch
      %114 = sbr.rel (0) target = $region45
    $region44: #{dueling_q_forward.1} parent=1 // pred_region
      _
    $region45: #{dueling_q_forward.1} parent=1 // pred_fallthru
      _
    // Predicated region
    $region46: #{dueling_q_forward.1} parent=1 // pred_check
      _
    $region47: #{dueling_q_forward.1} parent=1 // pred_check_branch
      %116 = sbr.rel (0) target = $region49
    $region48: #{dueling_q_forward.1} parent=1 // pred_region
      %117 = dma.done [#allocation3], 128
    $region49: #{dueling_q_forward.1} parent=1 // pred_fallthru
      _
    // Predicated region
    $region50: #{dueling_q_forward.1} parent=1 // pred_check
      _
    $region51: #{dueling_q_forward.1} parent=1 // pred_check_branch
      %119 = sbr.rel (0) target = $region53
    $region52: #{dueling_q_forward.1} parent=1 // pred_region
      %120 = dma.done [#allocation5], 2048
    $region53: #{dueling_q_forward.1} parent=1 // pred_fallthru
      _
    // Predicated region
    $region54: #{dueling_q_forward.1} parent=1 // pred_check
      _
    $region55: #{dueling_q_forward.1} parent=1 // pred_check_branch
      %122 = sbr.rel (0) target = $region57
    $region56: #{dueling_q_forward.1} parent=1 // pred_region
      %123 = dma.done [#allocation5], 128
    $region57: #{dueling_q_forward.1} parent=1 // pred_fallthru
      _
    // Predicated region
    $region58: #{dueling_q_forward.1} parent=1 // pred_check
      _
    $region59: #{dueling_q_forward.1} parent=1 // pred_check_branch
      %125 = sbr.rel (0) target = $region61
    $region60: #{dueling_q_forward.1} parent=1 // pred_region
      %126 = dma.done [#allocation8], 16384
    $region61: #{dueling_q_forward.1} parent=1 // pred_fallthru
      _
    // Predicated region
    $region62: #{dueling_q_forward.1} parent=1 // pred_check
      _
    $region63: #{dueling_q_forward.1} parent=1 // pred_check_branch
      %128 = sbr.rel (0) target = $region65
    $region64: #{dueling_q_forward.1} parent=1 // pred_region
      %129 = dma.done [#allocation8], 64
    $region65: #{dueling_q_forward.1} parent=1 // pred_fallthru
      _
    // Predicated region
    $region66: #{dueling_q_forward.1} parent=1 // pred_check
      _
    $region67: #{dueling_q_forward.1} parent=1 // pred_check_branch
      %131 = sbr.rel (0) target = $region69
    $region68: #{dueling_q_forward.1} parent=1 // pred_region
      %132 = dma.done [#allocation11], 64
    $region69: #{dueling_q_forward.1} parent=1 // pred_fallthru
      _
    // Predicated region
    $region70: #{dueling_q_forward.1} parent=1 // pred_check
      _
    $region71: #{dueling_q_forward.1} parent=1 // pred_check_branch
      %134 = sbr.rel (0) target = $region73
    $region72: #{dueling_q_forward.1} parent=1 // pred_region
      %135 = dma.done [#allocation11], 12288
    $region73: #{dueling_q_forward.1} parent=1 // pred_fallthru
      _
    // Predicated region
    $region74: #{dueling_q_forward.1} parent=1 // pred_check
      _
    $region75: #{dueling_q_forward.1} parent=1 // pred_check_branch
      %137 = sbr.rel (0) target = $region77
    $region76: #{dueling_q_forward.1} parent=1 // pred_region
      %138 = dma.done [#allocation14], 6144
    $region77: #{dueling_q_forward.1} parent=1 // pred_fallthru
      _
    %v140 = vld [vmem:[#allocation2] sm:$0xff]
    %v141 = vpack.c.bf16 %v140, %v140
    %v142 = vld [vmem:[#allocation4] sm:$0xff]
    %v143 = vld [vmem:[#allocation4 + $0x8] sm:$0xff]
    %v144 = vld [vmem:[#allocation4 + $0x10] sm:$0xff]
    %v145 = vld [vmem:[#allocation4 + $0x18] sm:$0xff]
    %v146 = vld [vmem:[#allocation4 + $0x20] sm:$0xff]
    %v147 = vld [vmem:[#allocation4 + $0x28] sm:$0xff]
    %v148 = vld [vmem:[#allocation4 + $0x30] sm:$0xff]
    %v149 = vld [vmem:[#allocation4 + $0x38] sm:$0xff]
    %v150 = vld [vmem:[#allocation4 + $0x40] sm:$0xff]
    %v151 = vld [vmem:[#allocation4 + $0x48] sm:$0xff]
    %v152 = vld [vmem:[#allocation4 + $0x50] sm:$0xff]
    %v153 = vld [vmem:[#allocation4 + $0x58] sm:$0xff]
    %v154 = vld [vmem:[#allocation4 + $0x60] sm:$0xff]
    %v155 = vld [vmem:[#allocation4 + $0x68] sm:$0xff]
    %v156 = vld [vmem:[#allocation4 + $0x70] sm:$0xff]
    %v157 = vld [vmem:[#allocation4 + $0x78] sm:$0xff]
    %v158 = vld [vmem:[#allocation6] sm:$0xff]
    %v160 = vlaneseq
    %v161 = vshrl.u32 %v160, 7
    %v162 = vsub.s32 0, %v161
    %v163 = vrot.slane %v158, %v162
    %v164 = vlaneseq
    %v165 = vshrl.u32 %v164, 7
    %v166 = vsub.s32 1, %v165
    %v167 = vrot.slane %v158, %v166
    %v168 = vlaneseq
    %v169 = vshrl.u32 %v168, 7
    %v170 = vsub.s32 2, %v169
    %v171 = vrot.slane %v158, %v170
    %v172 = vlaneseq
    %v173 = vshrl.u32 %v172, 7
    %v174 = vsub.s32 3, %v173
    %v175 = vrot.slane %v158, %v174
    %v176 = vlaneseq
    %v177 = vshrl.u32 %v176, 7
    %v178 = vsub.s32 4, %v177
    %v179 = vrot.slane %v158, %v178
    %v180 = vlaneseq
    %v181 = vshrl.u32 %v180, 7
    %v182 = vsub.s32 5, %v181
    %v183 = vrot.slane %v158, %v182
    %v184 = vlaneseq
    %v185 = vshrl.u32 %v184, 7
    %v186 = vsub.s32 6, %v185
    %v187 = vrot.slane %v158, %v186
    %v188 = vlaneseq
    %v189 = vshrl.u32 %v188, 7
    %v190 = vsub.s32 7, %v189
    %v191 = vrot.slane %v158, %v190
    %v216 = vunpack.c.l.b16 %v142
    %v217 = vunpack.c.h.b16 %v142
    %v218 = vunpack.c.l.b16 %v143
    %v219 = vunpack.c.h.b16 %v143
    %v220 = vunpack.c.l.b16 %v144
    %v221 = vunpack.c.h.b16 %v144
    %v222 = vunpack.c.l.b16 %v145
    %v223 = vunpack.c.h.b16 %v145
    %v224 = vunpack.c.l.b16 %v146
    %v225 = vunpack.c.h.b16 %v146
    %v226 = vunpack.c.l.b16 %v147
    %v227 = vunpack.c.h.b16 %v147
    %v228 = vunpack.c.l.b16 %v148
    %v229 = vunpack.c.h.b16 %v148
    %v230 = vunpack.c.l.b16 %v149
    %v231 = vunpack.c.h.b16 %v149
    %v232 = vunpack.c.l.b16 %v150
    %v233 = vunpack.c.h.b16 %v150
    %v234 = vunpack.c.l.b16 %v151
    %v235 = vunpack.c.h.b16 %v151
    %v236 = vunpack.c.l.b16 %v152
    %v237 = vunpack.c.h.b16 %v152
    %v238 = vunpack.c.l.b16 %v153
    %v239 = vunpack.c.h.b16 %v153
    %v240 = vunpack.c.l.b16 %v154
    %v241 = vunpack.c.h.b16 %v154
    %v242 = vunpack.c.l.b16 %v155
    %v243 = vunpack.c.h.b16 %v155
    %v244 = vunpack.c.l.b16 %v156
    %v245 = vunpack.c.h.b16 %v156
    %v246 = vunpack.c.l.b16 %v157
    %v247 = vunpack.c.h.b16 %v157
    %v248 = vpack.c.b16 %v224, %v216
    %v249 = vpack.c.b16 %v225, %v217
    %v250 = vpack.c.b16 %v226, %v218
    %v251 = vpack.c.b16 %v227, %v219
    %v252 = vpack.c.b16 %v228, %v220
    %v253 = vpack.c.b16 %v229, %v221
    %v254 = vpack.c.b16 %v230, %v222
    %v255 = vpack.c.b16 %v231, %v223
    %v256 = vpack.c.b16 %v240, %v232
    %v257 = vpack.c.b16 %v241, %v233
    %v258 = vpack.c.b16 %v242, %v234
    %v259 = vpack.c.b16 %v243, %v235
    %v260 = vpack.c.b16 %v244, %v236
    %v261 = vpack.c.b16 %v245, %v237
    %v262 = vpack.c.b16 %v246, %v238
    %v263 = vpack.c.b16 %v247, %v239
    %vm280 = vcmask 261120
    %v282 = vsel %vm280, %v141, 0
    %284 = vmatprep.subr.bf16.mxu0 0
    %285 = vmatpush1.bf16.msra.mxu0 0
    %286 = vmatprep.subr.bf16.mxu0 0
    %287 = vmatpush1.bf16.msra.mxu0 0
    %288 = vmatprep.subr.bf16.mxu0 0
    %289 = vmatpush1.bf16.msra.mxu0 0
    %290 = vmatprep.subr.bf16.mxu0 0
    %291 = vmatpush1.bf16.msra.mxu0 0
    %292 = vmatprep.subr.bf16.mxu0 0
    %293 = vmatpush1.bf16.msra.mxu0 0
    %294 = vmatprep.subr.bf16.mxu0 0
    %295 = vmatpush1.bf16.msra.mxu0 0
    %296 = vmatprep.subr.bf16.mxu0 %v257
    %297 = vmatpush1.bf16.msra.mxu0 %v256
    %298 = vmatprep.subr.bf16.mxu0 %v249
    %299 = vmatpush1.bf16.msra.mxu0 %v248
    %300 = vmatprep.subr.bf16.mxu0 0
    %301 = vmatpush2.bf16.msra.mxu0 0
    %302 = vmatprep.subr.bf16.mxu0 0
    %303 = vmatpush2.bf16.msra.mxu0 0
    %304 = vmatprep.subr.bf16.mxu0 0
    %305 = vmatpush2.bf16.msra.mxu0 0
    %306 = vmatprep.subr.bf16.mxu0 0
    %307 = vmatpush2.bf16.msra.mxu0 0
    %308 = vmatprep.subr.bf16.mxu0 0
    %309 = vmatpush2.bf16.msra.mxu0 0
    %310 = vmatprep.subr.bf16.mxu0 0
    %311 = vmatpush2.bf16.msra.mxu0 0
    %312 = vmatprep.subr.bf16.mxu0 0
    %313 = vmatpush2.bf16.msra.mxu0 0
    %314 = vmatprep.subr.bf16.mxu0 0
    %315 = vmatpush2.bf16.msra.mxu0 0
    %316 = vmatprep.mubr.bf16.mxu0 0
    %317 = vmatmul.mubr.bf16.gmra.mxu0 %v282
    %v318 = vpop.f32.mrf.mxu0
    %v319 = vadd.f32 %v163, %v318
    %v320 = vpop.f32.mrf.mxu0
    %v321 = vadd.f32 %v167, %v320
    %v322 = vpop.f32.mrf.mxu0
    %v323 = vpop.f32.mrf.mxu0
    %324 = vdwg.mxu0
    %325 = vmatprep.subr.bf16.mxu0 0
    %326 = vmatpush1.bf16.msra.mxu0 0
    %327 = vmatprep.subr.bf16.mxu0 0
    %328 = vmatpush1.bf16.msra.mxu0 0
    %329 = vmatprep.subr.bf16.mxu0 0
    %330 = vmatpush1.bf16.msra.mxu0 0
    %331 = vmatprep.subr.bf16.mxu0 0
    %332 = vmatpush1.bf16.msra.mxu0 0
    %333 = vmatprep.subr.bf16.mxu0 0
    %334 = vmatpush1.bf16.msra.mxu0 0
    %335 = vmatprep.subr.bf16.mxu0 0
    %336 = vmatpush1.bf16.msra.mxu0 0
    %337 = vmatprep.subr.bf16.mxu0 %v259
    %338 = vmatpush1.bf16.msra.mxu0 %v258
    %339 = vmatprep.subr.bf16.mxu0 %v251
    %340 = vmatpush1.bf16.msra.mxu0 %v250
    %341 = vmatprep.subr.bf16.mxu0 0
    %342 = vmatpush2.bf16.msra.mxu0 0
    %343 = vmatprep.subr.bf16.mxu0 0
    %344 = vmatpush2.bf16.msra.mxu0 0
    %345 = vmatprep.subr.bf16.mxu0 0
    %346 = vmatpush2.bf16.msra.mxu0 0
    %347 = vmatprep.subr.bf16.mxu0 0
    %348 = vmatpush2.bf16.msra.mxu0 0
    %349 = vmatprep.subr.bf16.mxu0 0
    %350 = vmatpush2.bf16.msra.mxu0 0
    %351 = vmatprep.subr.bf16.mxu0 0
    %352 = vmatpush2.bf16.msra.mxu0 0
    %353 = vmatprep.subr.bf16.mxu0 0
    %354 = vmatpush2.bf16.msra.mxu0 0
    %355 = vmatprep.subr.bf16.mxu0 0
    %356 = vmatpush2.bf16.msra.mxu0 0
    %357 = vmatprep.mubr.bf16.mxu0 0
    %358 = vmatmul.mubr.bf16.gmra.mxu0 %v282
    %v359 = vpop.f32.mrf.mxu0
    %v360 = vadd.f32 %v171, %v359
    %v361 = vpop.f32.mrf.mxu0
    %v362 = vadd.f32 %v175, %v361
    %v363 = vpop.f32.mrf.mxu0
    %v364 = vpop.f32.mrf.mxu0
    %365 = vdwg.mxu0
    %366 = vmatprep.subr.bf16.mxu0 0
    %367 = vmatpush1.bf16.msra.mxu0 0
    %368 = vmatprep.subr.bf16.mxu0 0
    %369 = vmatpush1.bf16.msra.mxu0 0
    %370 = vmatprep.subr.bf16.mxu0 0
    %371 = vmatpush1.bf16.msra.mxu0 0
    %372 = vmatprep.subr.bf16.mxu0 0
    %373 = vmatpush1.bf16.msra.mxu0 0
    %374 = vmatprep.subr.bf16.mxu0 0
    %375 = vmatpush1.bf16.msra.mxu0 0
    %376 = vmatprep.subr.bf16.mxu0 0
    %377 = vmatpush1.bf16.msra.mxu0 0
    %378 = vmatprep.subr.bf16.mxu0 %v261
    %379 = vmatpush1.bf16.msra.mxu0 %v260
    %380 = vmatprep.subr.bf16.mxu0 %v253
    %381 = vmatpush1.bf16.msra.mxu0 %v252
    %382 = vmatprep.subr.bf16.mxu0 0
    %383 = vmatpush2.bf16.msra.mxu0 0
    %384 = vmatprep.subr.bf16.mxu0 0
    %385 = vmatpush2.bf16.msra.mxu0 0
    %386 = vmatprep.subr.bf16.mxu0 0
    %387 = vmatpush2.bf16.msra.mxu0 0
    %388 = vmatprep.subr.bf16.mxu0 0
    %389 = vmatpush2.bf16.msra.mxu0 0
    %390 = vmatprep.subr.bf16.mxu0 0
    %391 = vmatpush2.bf16.msra.mxu0 0
    %392 = vmatprep.subr.bf16.mxu0 0
    %393 = vmatpush2.bf16.msra.mxu0 0
    %394 = vmatprep.subr.bf16.mxu0 0
    %395 = vmatpush2.bf16.msra.mxu0 0
    %396 = vmatprep.subr.bf16.mxu0 0
    %397 = vmatpush2.bf16.msra.mxu0 0
    %398 = vmatprep.mubr.bf16.mxu0 0
    %399 = vmatmul.mubr.bf16.gmra.mxu0 %v282
    %v400 = vpop.f32.mrf.mxu0
    %v401 = vadd.f32 %v179, %v400
    %v402 = vpop.f32.mrf.mxu0
    %v403 = vadd.f32 %v183, %v402
    %v404 = vpop.f32.mrf.mxu0
    %v405 = vpop.f32.mrf.mxu0
    %406 = vdwg.mxu0
    %407 = vmatprep.subr.bf16.mxu0 0
    %408 = vmatpush1.bf16.msra.mxu0 0
    %409 = vmatprep.subr.bf16.mxu0 0
    %410 = vmatpush1.bf16.msra.mxu0 0
    %411 = vmatprep.subr.bf16.mxu0 0
    %412 = vmatpush1.bf16.msra.mxu0 0
    %413 = vmatprep.subr.bf16.mxu0 0
    %414 = vmatpush1.bf16.msra.mxu0 0
    %415 = vmatprep.subr.bf16.mxu0 0
    %416 = vmatpush1.bf16.msra.mxu0 0
    %417 = vmatprep.subr.bf16.mxu0 0
    %418 = vmatpush1.bf16.msra.mxu0 0
    %419 = vmatprep.subr.bf16.mxu0 %v263
    %420 = vmatpush1.bf16.msra.mxu0 %v262
    %421 = vmatprep.subr.bf16.mxu0 %v255
    %422 = vmatpush1.bf16.msra.mxu0 %v254
    %423 = vmatprep.subr.bf16.mxu0 0
    %424 = vmatpush2.bf16.msra.mxu0 0
    %425 = vmatprep.subr.bf16.mxu0 0
    %426 = vmatpush2.bf16.msra.mxu0 0
    %427 = vmatprep.subr.bf16.mxu0 0
    %428 = vmatpush2.bf16.msra.mxu0 0
    %429 = vmatprep.subr.bf16.mxu0 0
    %430 = vmatpush2.bf16.msra.mxu0 0
    %431 = vmatprep.subr.bf16.mxu0 0
    %432 = vmatpush2.bf16.msra.mxu0 0
    %433 = vmatprep.subr.bf16.mxu0 0
    %434 = vmatpush2.bf16.msra.mxu0 0
    %435 = vmatprep.subr.bf16.mxu0 0
    %436 = vmatpush2.bf16.msra.mxu0 0
    %437 = vmatprep.subr.bf16.mxu0 0
    %438 = vmatpush2.bf16.msra.mxu0 0
    %439 = vmatprep.mubr.bf16.mxu0 0
    %440 = vmatmul.mubr.bf16.gmra.mxu0 %v282
    %v441 = vpop.f32.mrf.mxu0
    %v442 = vadd.f32 %v187, %v441
    %v443 = vpop.f32.mrf.mxu0
    %v444 = vadd.f32 %v191, %v443
    %v445 = vpop.f32.mrf.mxu0
    %v446 = vpop.f32.mrf.mxu0
    %447 = vdwg.mxu0
    %v448 = vmax.f32 %v319, 0.0
    %v449 = vmax.f32 %v321, 0.0
    %v450 = vmax.f32 %v360, 0.0
    %v451 = vmax.f32 %v362, 0.0
    %v452 = vmax.f32 %v401, 0.0
    %v453 = vmax.f32 %v403, 0.0
    %v454 = vmax.f32 %v442, 0.0
    %v455 = vmax.f32 %v444, 0.0
    %v456 = vpack.c.bf16 %v448, %v448
    %v457 = vpack.c.bf16 %v449, %v449
    %v458 = vpack.c.bf16 %v450, %v450
    %v459 = vpack.c.bf16 %v451, %v451
    %v460 = vpack.c.bf16 %v452, %v452
    %v461 = vpack.c.bf16 %v453, %v453
    %v462 = vpack.c.bf16 %v454, %v454
    %v463 = vpack.c.bf16 %v455, %v455
    %v464 = vld [vmem:[#allocation7] sm:$0xff]
    %v465 = vld [vmem:[#allocation7 + $0x8] sm:$0xff]
    %v466 = vld [vmem:[#allocation7 + $0x10] sm:$0xff]
    %v467 = vld [vmem:[#allocation7 + $0x18] sm:$0xff]
    %v468 = vld [vmem:[#allocation7 + $0x20] sm:$0xff]
    %v469 = vld [vmem:[#allocation7 + $0x28] sm:$0xff]
    %v470 = vld [vmem:[#allocation7 + $0x30] sm:$0xff]
    %v471 = vld [vmem:[#allocation7 + $0x38] sm:$0xff]
    %v472 = vld [vmem:[#allocation7 + $0x40] sm:$0xff]
    %v473 = vld [vmem:[#allocation7 + $0x48] sm:$0xff]
    %v474 = vld [vmem:[#allocation7 + $0x50] sm:$0xff]
    %v475 = vld [vmem:[#allocation7 + $0x58] sm:$0xff]
    %v476 = vld [vmem:[#allocation7 + $0x60] sm:$0xff]
    %v477 = vld [vmem:[#allocation7 + $0x68] sm:$0xff]
    %v478 = vld [vmem:[#allocation7 + $0x70] sm:$0xff]
    %v479 = vld [vmem:[#allocation7 + $0x78] sm:$0xff]
    %v480 = vld [vmem:[#allocation7 + $0x80] sm:$0xff]
    %v481 = vld [vmem:[#allocation7 + $0x88] sm:$0xff]
    %v482 = vld [vmem:[#allocation7 + $0x90] sm:$0xff]
    %v483 = vld [vmem:[#allocation7 + $0x98] sm:$0xff]
    %v484 = vld [vmem:[#allocation7 + $0xa0] sm:$0xff]
    %v485 = vld [vmem:[#allocation7 + $0xa8] sm:$0xff]
    %v486 = vld [vmem:[#allocation7 + $0xb0] sm:$0xff]
    %v487 = vld [vmem:[#allocation7 + $0xb8] sm:$0xff]
    %v488 = vld [vmem:[#allocation7 + $0xc0] sm:$0xff]
    %v489 = vld [vmem:[#allocation7 + $0xc8] sm:$0xff]
    %v490 = vld [vmem:[#allocation7 + $0xd0] sm:$0xff]
    %v491 = vld [vmem:[#allocation7 + $0xd8] sm:$0xff]
    %v492 = vld [vmem:[#allocation7 + $0xe0] sm:$0xff]
    %v493 = vld [vmem:[#allocation7 + $0xe8] sm:$0xff]
    %v494 = vld [vmem:[#allocation7 + $0xf0] sm:$0xff]
    %v495 = vld [vmem:[#allocation7 + $0xf8] sm:$0xff]
    %v496 = vld [vmem:[#allocation7 + $0x100] sm:$0xff]
    %v497 = vld [vmem:[#allocation7 + $0x108] sm:$0xff]
    %v498 = vld [vmem:[#allocation7 + $0x110] sm:$0xff]
    %v499 = vld [vmem:[#allocation7 + $0x118] sm:$0xff]
    %v500 = vld [vmem:[#allocation7 + $0x120] sm:$0xff]
    %v501 = vld [vmem:[#allocation7 + $0x128] sm:$0xff]
    %v502 = vld [vmem:[#allocation7 + $0x130] sm:$0xff]
    %v503 = vld [vmem:[#allocation7 + $0x138] sm:$0xff]
    %v504 = vld [vmem:[#allocation7 + $0x140] sm:$0xff]
    %v505 = vld [vmem:[#allocation7 + $0x148] sm:$0xff]
    %v506 = vld [vmem:[#allocation7 + $0x150] sm:$0xff]
    %v507 = vld [vmem:[#allocation7 + $0x158] sm:$0xff]
    %v508 = vld [vmem:[#allocation7 + $0x160] sm:$0xff]
    %v509 = vld [vmem:[#allocation7 + $0x168] sm:$0xff]
    %v510 = vld [vmem:[#allocation7 + $0x170] sm:$0xff]
    %v511 = vld [vmem:[#allocation7 + $0x178] sm:$0xff]
    %v512 = vld [vmem:[#allocation7 + $0x180] sm:$0xff]
    %v513 = vld [vmem:[#allocation7 + $0x188] sm:$0xff]
    %v514 = vld [vmem:[#allocation7 + $0x190] sm:$0xff]
    %v515 = vld [vmem:[#allocation7 + $0x198] sm:$0xff]
    %v516 = vld [vmem:[#allocation7 + $0x1a0] sm:$0xff]
    %v517 = vld [vmem:[#allocation7 + $0x1a8] sm:$0xff]
    %v518 = vld [vmem:[#allocation7 + $0x1b0] sm:$0xff]
    %v519 = vld [vmem:[#allocation7 + $0x1b8] sm:$0xff]
    %v520 = vld [vmem:[#allocation7 + $0x1c0] sm:$0xff]
    %v521 = vld [vmem:[#allocation7 + $0x1c8] sm:$0xff]
    %v522 = vld [vmem:[#allocation7 + $0x1d0] sm:$0xff]
    %v523 = vld [vmem:[#allocation7 + $0x1d8] sm:$0xff]
    %v524 = vld [vmem:[#allocation7 + $0x1e0] sm:$0xff]
    %v525 = vld [vmem:[#allocation7 + $0x1e8] sm:$0xff]
    %v526 = vld [vmem:[#allocation7 + $0x1f0] sm:$0xff]
    %v527 = vld [vmem:[#allocation7 + $0x1f8] sm:$0xff]
    %v528 = vld [vmem:[#allocation7 + $0x200] sm:$0xff]
    %v529 = vld [vmem:[#allocation7 + $0x208] sm:$0xff]
    %v530 = vld [vmem:[#allocation7 + $0x210] sm:$0xff]
    %v531 = vld [vmem:[#allocation7 + $0x218] sm:$0xff]
    %v532 = vld [vmem:[#allocation7 + $0x220] sm:$0xff]
    %v533 = vld [vmem:[#allocation7 + $0x228] sm:$0xff]
    %v534 = vld [vmem:[#allocation7 + $0x230] sm:$0xff]
    %v535 = vld [vmem:[#allocation7 + $0x238] sm:$0xff]
    %v536 = vld [vmem:[#allocation7 + $0x240] sm:$0xff]
    %v537 = vld [vmem:[#allocation7 + $0x248] sm:$0xff]
    %v538 = vld [vmem:[#allocation7 + $0x250] sm:$0xff]
    %v539 = vld [vmem:[#allocation7 + $0x258] sm:$0xff]
    %v540 = vld [vmem:[#allocation7 + $0x260] sm:$0xff]
    %v541 = vld [vmem:[#allocation7 + $0x268] sm:$0xff]
    %v542 = vld [vmem:[#allocation7 + $0x270] sm:$0xff]
    %v543 = vld [vmem:[#allocation7 + $0x278] sm:$0xff]
    %v544 = vld [vmem:[#allocation7 + $0x280] sm:$0xff]
    %v545 = vld [vmem:[#allocation7 + $0x288] sm:$0xff]
    %v546 = vld [vmem:[#allocation7 + $0x290] sm:$0xff]
    %v547 = vld [vmem:[#allocation7 + $0x298] sm:$0xff]
    %v548 = vld [vmem:[#allocation7 + $0x2a0] sm:$0xff]
    %v549 = vld [vmem:[#allocation7 + $0x2a8] sm:$0xff]
    %v550 = vld [vmem:[#allocation7 + $0x2b0] sm:$0xff]
    %v551 = vld [vmem:[#allocation7 + $0x2b8] sm:$0xff]
    %v552 = vld [vmem:[#allocation7 + $0x2c0] sm:$0xff]
    %v553 = vld [vmem:[#allocation7 + $0x2c8] sm:$0xff]
    %v554 = vld [vmem:[#allocation7 + $0x2d0] sm:$0xff]
    %v555 = vld [vmem:[#allocation7 + $0x2d8] sm:$0xff]
    %v556 = vld [vmem:[#allocation7 + $0x2e0] sm:$0xff]
    %v557 = vld [vmem:[#allocation7 + $0x2e8] sm:$0xff]
    %v558 = vld [vmem:[#allocation7 + $0x2f0] sm:$0xff]
    %v559 = vld [vmem:[#allocation7 + $0x2f8] sm:$0xff]
    %v560 = vld [vmem:[#allocation7 + $0x300] sm:$0xff]
    %v561 = vld [vmem:[#allocation7 + $0x308] sm:$0xff]
    %v562 = vld [vmem:[#allocation7 + $0x310] sm:$0xff]
    %v563 = vld [vmem:[#allocation7 + $0x318] sm:$0xff]
    %v564 = vld [vmem:[#allocation7 + $0x320] sm:$0xff]
    %v565 = vld [vmem:[#allocation7 + $0x328] sm:$0xff]
    %v566 = vld [vmem:[#allocation7 + $0x330] sm:$0xff]
    %v567 = vld [vmem:[#allocation7 + $0x338] sm:$0xff]
    %v568 = vld [vmem:[#allocation7 + $0x340] sm:$0xff]
    %v569 = vld [vmem:[#allocation7 + $0x348] sm:$0xff]
    %v570 = vld [vmem:[#allocation7 + $0x350] sm:$0xff]
    %v571 = vld [vmem:[#allocation7 + $0x358] sm:$0xff]
    %v572 = vld [vmem:[#allocation7 + $0x360] sm:$0xff]
    %v573 = vld [vmem:[#allocation7 + $0x368] sm:$0xff]
    %v574 = vld [vmem:[#allocation7 + $0x370] sm:$0xff]
    %v575 = vld [vmem:[#allocation7 + $0x378] sm:$0xff]
    %v576 = vld [vmem:[#allocation7 + $0x380] sm:$0xff]
    %v577 = vld [vmem:[#allocation7 + $0x388] sm:$0xff]
    %v578 = vld [vmem:[#allocation7 + $0x390] sm:$0xff]
    %v579 = vld [vmem:[#allocation7 + $0x398] sm:$0xff]
    %v580 = vld [vmem:[#allocation7 + $0x3a0] sm:$0xff]
    %v581 = vld [vmem:[#allocation7 + $0x3a8] sm:$0xff]
    %v582 = vld [vmem:[#allocation7 + $0x3b0] sm:$0xff]
    %v583 = vld [vmem:[#allocation7 + $0x3b8] sm:$0xff]
    %v584 = vld [vmem:[#allocation7 + $0x3c0] sm:$0xff]
    %v585 = vld [vmem:[#allocation7 + $0x3c8] sm:$0xff]
    %v586 = vld [vmem:[#allocation7 + $0x3d0] sm:$0xff]
    %v587 = vld [vmem:[#allocation7 + $0x3d8] sm:$0xff]
    %v588 = vld [vmem:[#allocation7 + $0x3e0] sm:$0xff]
    %v589 = vld [vmem:[#allocation7 + $0x3e8] sm:$0xff]
    %v590 = vld [vmem:[#allocation7 + $0x3f0] sm:$0xff]
    %v591 = vld [vmem:[#allocation7 + $0x3f8] sm:$0xff]
    %v592 = vunpack.c.0.s8 %v464
    %v593 = vunpack.c.0.s8 %v465
    %v594 = vunpack.c.0.s8 %v466
    %v595 = vunpack.c.0.s8 %v467
    %v596 = vunpack.c.1.s8 %v464
    %v597 = vunpack.c.1.s8 %v465
    %v598 = vunpack.c.1.s8 %v466
    %v599 = vunpack.c.1.s8 %v467
    %v600 = vunpack.c.2.s8 %v464
    %v601 = vunpack.c.2.s8 %v465
    %v602 = vunpack.c.2.s8 %v466
    %v603 = vunpack.c.2.s8 %v467
    %v604 = vunpack.c.3.s8 %v464
    %v605 = vunpack.c.3.s8 %v465
    %v606 = vunpack.c.3.s8 %v466
    %v607 = vunpack.c.3.s8 %v467
    %v608 = vunpack.c.0.s8 %v468
    %v609 = vunpack.c.0.s8 %v469
    %v610 = vunpack.c.0.s8 %v470
    %v611 = vunpack.c.0.s8 %v471
    %v612 = vunpack.c.1.s8 %v468
    %v613 = vunpack.c.1.s8 %v469
    %v614 = vunpack.c.1.s8 %v470
    %v615 = vunpack.c.1.s8 %v471
    %v616 = vunpack.c.2.s8 %v468
    %v617 = vunpack.c.2.s8 %v469
    %v618 = vunpack.c.2.s8 %v470
    %v619 = vunpack.c.2.s8 %v471
    %v620 = vunpack.c.3.s8 %v468
    %v621 = vunpack.c.3.s8 %v469
    %v622 = vunpack.c.3.s8 %v470
    %v623 = vunpack.c.3.s8 %v471
    %v624 = vunpack.c.0.s8 %v472
    %v625 = vunpack.c.0.s8 %v473
    %v626 = vunpack.c.0.s8 %v474
    %v627 = vunpack.c.0.s8 %v475
    %v628 = vunpack.c.1.s8 %v472
    %v629 = vunpack.c.1.s8 %v473
    %v630 = vunpack.c.1.s8 %v474
    %v631 = vunpack.c.1.s8 %v475
    %v632 = vunpack.c.2.s8 %v472
    %v633 = vunpack.c.2.s8 %v473
    %v634 = vunpack.c.2.s8 %v474
    %v635 = vunpack.c.2.s8 %v475
    %v636 = vunpack.c.3.s8 %v472
    %v637 = vunpack.c.3.s8 %v473
    %v638 = vunpack.c.3.s8 %v474
    %v639 = vunpack.c.3.s8 %v475
    %v640 = vunpack.c.0.s8 %v476
    %v641 = vunpack.c.0.s8 %v477
    %v642 = vunpack.c.0.s8 %v478
    %v643 = vunpack.c.0.s8 %v479
    %v644 = vunpack.c.1.s8 %v476
    %v645 = vunpack.c.1.s8 %v477
    %v646 = vunpack.c.1.s8 %v478
    %v647 = vunpack.c.1.s8 %v479
    %v648 = vunpack.c.2.s8 %v476
    %v649 = vunpack.c.2.s8 %v477
    %v650 = vunpack.c.2.s8 %v478
    %v651 = vunpack.c.2.s8 %v479
    %v652 = vunpack.c.3.s8 %v476
    %v653 = vunpack.c.3.s8 %v477
    %v654 = vunpack.c.3.s8 %v478
    %v655 = vunpack.c.3.s8 %v479
    %v656 = vunpack.c.0.s8 %v480
    %v657 = vunpack.c.0.s8 %v481
    %v658 = vunpack.c.0.s8 %v482
    %v659 = vunpack.c.0.s8 %v483
    %v660 = vunpack.c.1.s8 %v480
    %v661 = vunpack.c.1.s8 %v481
    %v662 = vunpack.c.1.s8 %v482
    %v663 = vunpack.c.1.s8 %v483
    %v664 = vunpack.c.2.s8 %v480
    %v665 = vunpack.c.2.s8 %v481
    %v666 = vunpack.c.2.s8 %v482
    %v667 = vunpack.c.2.s8 %v483
    %v668 = vunpack.c.3.s8 %v480
    %v669 = vunpack.c.3.s8 %v481
    %v670 = vunpack.c.3.s8 %v482
    %v671 = vunpack.c.3.s8 %v483
    %v672 = vunpack.c.0.s8 %v484
    %v673 = vunpack.c.0.s8 %v485
    %v674 = vunpack.c.0.s8 %v486
    %v675 = vunpack.c.0.s8 %v487
    %v676 = vunpack.c.1.s8 %v484
    %v677 = vunpack.c.1.s8 %v485
    %v678 = vunpack.c.1.s8 %v486
    %v679 = vunpack.c.1.s8 %v487
    %v680 = vunpack.c.2.s8 %v484
    %v681 = vunpack.c.2.s8 %v485
    %v682 = vunpack.c.2.s8 %v486
    %v683 = vunpack.c.2.s8 %v487
    %v684 = vunpack.c.3.s8 %v484
    %v685 = vunpack.c.3.s8 %v485
    %v686 = vunpack.c.3.s8 %v486
    %v687 = vunpack.c.3.s8 %v487
    %v688 = vunpack.c.0.s8 %v488
    %v689 = vunpack.c.0.s8 %v489
    %v690 = vunpack.c.0.s8 %v490
    %v691 = vunpack.c.0.s8 %v491
    %v692 = vunpack.c.1.s8 %v488
    %v693 = vunpack.c.1.s8 %v489
    %v694 = vunpack.c.1.s8 %v490
    %v695 = vunpack.c.1.s8 %v491
    %v696 = vunpack.c.2.s8 %v488
    %v697 = vunpack.c.2.s8 %v489
    %v698 = vunpack.c.2.s8 %v490
    %v699 = vunpack.c.2.s8 %v491
    %v700 = vunpack.c.3.s8 %v488
    %v701 = vunpack.c.3.s8 %v489
    %v702 = vunpack.c.3.s8 %v490
    %v703 = vunpack.c.3.s8 %v491
    %v704 = vunpack.c.0.s8 %v492
    %v705 = vunpack.c.0.s8 %v493
    %v706 = vunpack.c.0.s8 %v494
    %v707 = vunpack.c.0.s8 %v495
    %v708 = vunpack.c.1.s8 %v492
    %v709 = vunpack.c.1.s8 %v493
    %v710 = vunpack.c.1.s8 %v494
    %v711 = vunpack.c.1.s8 %v495
    %v712 = vunpack.c.2.s8 %v492
    %v713 = vunpack.c.2.s8 %v493
    %v714 = vunpack.c.2.s8 %v494
    %v715 = vunpack.c.2.s8 %v495
    %v716 = vunpack.c.3.s8 %v492
    %v717 = vunpack.c.3.s8 %v493
    %v718 = vunpack.c.3.s8 %v494
    %v719 = vunpack.c.3.s8 %v495
    %v720 = vunpack.c.0.s8 %v496
    %v721 = vunpack.c.0.s8 %v497
    %v722 = vunpack.c.0.s8 %v498
    %v723 = vunpack.c.0.s8 %v499
    %v724 = vunpack.c.1.s8 %v496
    %v725 = vunpack.c.1.s8 %v497
    %v726 = vunpack.c.1.s8 %v498
    %v727 = vunpack.c.1.s8 %v499
    %v728 = vunpack.c.2.s8 %v496
    %v729 = vunpack.c.2.s8 %v497
    %v730 = vunpack.c.2.s8 %v498
    %v731 = vunpack.c.2.s8 %v499
    %v732 = vunpack.c.3.s8 %v496
    %v733 = vunpack.c.3.s8 %v497
    %v734 = vunpack.c.3.s8 %v498
    %v735 = vunpack.c.3.s8 %v499
    %v736 = vunpack.c.0.s8 %v500
    %v737 = vunpack.c.0.s8 %v501
    %v738 = vunpack.c.0.s8 %v502
    %v739 = vunpack.c.0.s8 %v503
    %v740 = vunpack.c.1.s8 %v500
    %v741 = vunpack.c.1.s8 %v501
    %v742 = vunpack.c.1.s8 %v502
    %v743 = vunpack.c.1.s8 %v503
    %v744 = vunpack.c.2.s8 %v500
    %v745 = vunpack.c.2.s8 %v501
    %v746 = vunpack.c.2.s8 %v502
    %v747 = vunpack.c.2.s8 %v503
    %v748 = vunpack.c.3.s8 %v500
    %v749 = vunpack.c.3.s8 %v501
    %v750 = vunpack.c.3.s8 %v502
    %v751 = vunpack.c.3.s8 %v503
    %v752 = vunpack.c.0.s8 %v504
    %v753 = vunpack.c.0.s8 %v505
    %v754 = vunpack.c.0.s8 %v506
    %v755 = vunpack.c.0.s8 %v507
    %v756 = vunpack.c.1.s8 %v504
    %v757 = vunpack.c.1.s8 %v505
    %v758 = vunpack.c.1.s8 %v506
    %v759 = vunpack.c.1.s8 %v507
    %v760 = vunpack.c.2.s8 %v504
    %v761 = vunpack.c.2.s8 %v505
    %v762 = vunpack.c.2.s8 %v506
    %v763 = vunpack.c.2.s8 %v507
    %v764 = vunpack.c.3.s8 %v504
    %v765 = vunpack.c.3.s8 %v505
    %v766 = vunpack.c.3.s8 %v506
    %v767 = vunpack.c.3.s8 %v507
    %v768 = vunpack.c.0.s8 %v508
    %v769 = vunpack.c.0.s8 %v509
    %v770 = vunpack.c.0.s8 %v510
    %v771 = vunpack.c.0.s8 %v511
    %v772 = vunpack.c.1.s8 %v508
    %v773 = vunpack.c.1.s8 %v509
    %v774 = vunpack.c.1.s8 %v510
    %v775 = vunpack.c.1.s8 %v511
    %v776 = vunpack.c.2.s8 %v508
    %v777 = vunpack.c.2.s8 %v509
    %v778 = vunpack.c.2.s8 %v510
    %v779 = vunpack.c.2.s8 %v511
    %v780 = vunpack.c.3.s8 %v508
    %v781 = vunpack.c.3.s8 %v509
    %v782 = vunpack.c.3.s8 %v510
    %v783 = vunpack.c.3.s8 %v511
    %v784 = vunpack.c.0.s8 %v512
    %v785 = vunpack.c.0.s8 %v513
    %v786 = vunpack.c.0.s8 %v514
    %v787 = vunpack.c.0.s8 %v515
    %v788 = vunpack.c.1.s8 %v512
    %v789 = vunpack.c.1.s8 %v513
    %v790 = vunpack.c.1.s8 %v514
    %v791 = vunpack.c.1.s8 %v515
    %v792 = vunpack.c.2.s8 %v512
    %v793 = vunpack.c.2.s8 %v513
    %v794 = vunpack.c.2.s8 %v514
    %v795 = vunpack.c.2.s8 %v515
    %v796 = vunpack.c.3.s8 %v512
    %v797 = vunpack.c.3.s8 %v513
    %v798 = vunpack.c.3.s8 %v514
    %v799 = vunpack.c.3.s8 %v515
    %v800 = vunpack.c.0.s8 %v516
    %v801 = vunpack.c.0.s8 %v517
    %v802 = vunpack.c.0.s8 %v518
    %v803 = vunpack.c.0.s8 %v519
    %v804 = vunpack.c.1.s8 %v516
    %v805 = vunpack.c.1.s8 %v517
    %v806 = vunpack.c.1.s8 %v518
    %v807 = vunpack.c.1.s8 %v519
    %v808 = vunpack.c.2.s8 %v516
    %v809 = vunpack.c.2.s8 %v517
    %v810 = vunpack.c.2.s8 %v518
    %v811 = vunpack.c.2.s8 %v519
    %v812 = vunpack.c.3.s8 %v516
    %v813 = vunpack.c.3.s8 %v517
    %v814 = vunpack.c.3.s8 %v518
    %v815 = vunpack.c.3.s8 %v519
    %v816 = vunpack.c.0.s8 %v520
    %v817 = vunpack.c.0.s8 %v521
    %v818 = vunpack.c.0.s8 %v522
    %v819 = vunpack.c.0.s8 %v523
    %v820 = vunpack.c.1.s8 %v520
    %v821 = vunpack.c.1.s8 %v521
    %v822 = vunpack.c.1.s8 %v522
    %v823 = vunpack.c.1.s8 %v523
    %v824 = vunpack.c.2.s8 %v520
    %v825 = vunpack.c.2.s8 %v521
    %v826 = vunpack.c.2.s8 %v522
    %v827 = vunpack.c.2.s8 %v523
    %v828 = vunpack.c.3.s8 %v520
    %v829 = vunpack.c.3.s8 %v521
    %v830 = vunpack.c.3.s8 %v522
    %v831 = vunpack.c.3.s8 %v523
    %v832 = vunpack.c.0.s8 %v524
    %v833 = vunpack.c.0.s8 %v525
    %v834 = vunpack.c.0.s8 %v526
    %v835 = vunpack.c.0.s8 %v527
    %v836 = vunpack.c.1.s8 %v524
    %v837 = vunpack.c.1.s8 %v525
    %v838 = vunpack.c.1.s8 %v526
    %v839 = vunpack.c.1.s8 %v527
    %v840 = vunpack.c.2.s8 %v524
    %v841 = vunpack.c.2.s8 %v525
    %v842 = vunpack.c.2.s8 %v526
    %v843 = vunpack.c.2.s8 %v527
    %v844 = vunpack.c.3.s8 %v524
    %v845 = vunpack.c.3.s8 %v525
    %v846 = vunpack.c.3.s8 %v526
    %v847 = vunpack.c.3.s8 %v527
    %v848 = vunpack.c.0.s8 %v528
    %v849 = vunpack.c.0.s8 %v529
    %v850 = vunpack.c.0.s8 %v530
    %v851 = vunpack.c.0.s8 %v531
    %v852 = vunpack.c.1.s8 %v528
    %v853 = vunpack.c.1.s8 %v529
    %v854 = vunpack.c.1.s8 %v530
    %v855 = vunpack.c.1.s8 %v531
    %v856 = vunpack.c.2.s8 %v528
    %v857 = vunpack.c.2.s8 %v529
    %v858 = vunpack.c.2.s8 %v530
    %v859 = vunpack.c.2.s8 %v531
    %v860 = vunpack.c.3.s8 %v528
    %v861 = vunpack.c.3.s8 %v529
    %v862 = vunpack.c.3.s8 %v530
    %v863 = vunpack.c.3.s8 %v531
    %v864 = vunpack.c.0.s8 %v532
    %v865 = vunpack.c.0.s8 %v533
    %v866 = vunpack.c.0.s8 %v534
    %v867 = vunpack.c.0.s8 %v535
    %v868 = vunpack.c.1.s8 %v532
    %v869 = vunpack.c.1.s8 %v533
    %v870 = vunpack.c.1.s8 %v534
    %v871 = vunpack.c.1.s8 %v535
    %v872 = vunpack.c.2.s8 %v532
    %v873 = vunpack.c.2.s8 %v533
    %v874 = vunpack.c.2.s8 %v534
    %v875 = vunpack.c.2.s8 %v535
    %v876 = vunpack.c.3.s8 %v532
    %v877 = vunpack.c.3.s8 %v533
    %v878 = vunpack.c.3.s8 %v534
    %v879 = vunpack.c.3.s8 %v535
    %v880 = vunpack.c.0.s8 %v536
    %v881 = vunpack.c.0.s8 %v537
    %v882 = vunpack.c.0.s8 %v538
    %v883 = vunpack.c.0.s8 %v539
    %v884 = vunpack.c.1.s8 %v536
    %v885 = vunpack.c.1.s8 %v537
    %v886 = vunpack.c.1.s8 %v538
    %v887 = vunpack.c.1.s8 %v539
    %v888 = vunpack.c.2.s8 %v536
    %v889 = vunpack.c.2.s8 %v537
    %v890 = vunpack.c.2.s8 %v538
    %v891 = vunpack.c.2.s8 %v539
    %v892 = vunpack.c.3.s8 %v536
    %v893 = vunpack.c.3.s8 %v537
    %v894 = vunpack.c.3.s8 %v538
    %v895 = vunpack.c.3.s8 %v539
    %v896 = vunpack.c.0.s8 %v540
    %v897 = vunpack.c.0.s8 %v541
    %v898 = vunpack.c.0.s8 %v542
    %v899 = vunpack.c.0.s8 %v543
    %v900 = vunpack.c.1.s8 %v540
    %v901 = vunpack.c.1.s8 %v541
    %v902 = vunpack.c.1.s8 %v542
    %v903 = vunpack.c.1.s8 %v543
    %v904 = vunpack.c.2.s8 %v540
    %v905 = vunpack.c.2.s8 %v541
    %v906 = vunpack.c.2.s8 %v542
    %v907 = vunpack.c.2.s8 %v543
    %v908 = vunpack.c.3.s8 %v540
    %v909 = vunpack.c.3.s8 %v541
    %v910 = vunpack.c.3.s8 %v542
    %v911 = vunpack.c.3.s8 %v543
    %v912 = vunpack.c.0.s8 %v544
    %v913 = vunpack.c.0.s8 %v545
    %v914 = vunpack.c.0.s8 %v546
    %v915 = vunpack.c.0.s8 %v547
    %v916 = vunpack.c.1.s8 %v544
    %v917 = vunpack.c.1.s8 %v545
    %v918 = vunpack.c.1.s8 %v546
    %v919 = vunpack.c.1.s8 %v547
    %v920 = vunpack.c.2.s8 %v544
    %v921 = vunpack.c.2.s8 %v545
    %v922 = vunpack.c.2.s8 %v546
    %v923 = vunpack.c.2.s8 %v547
    %v924 = vunpack.c.3.s8 %v544
    %v925 = vunpack.c.3.s8 %v545
    %v926 = vunpack.c.3.s8 %v546
    %v927 = vunpack.c.3.s8 %v547
    %v928 = vunpack.c.0.s8 %v548
    %v929 = vunpack.c.0.s8 %v549
    %v930 = vunpack.c.0.s8 %v550
    %v931 = vunpack.c.0.s8 %v551
    %v932 = vunpack.c.1.s8 %v548
    %v933 = vunpack.c.1.s8 %v549
    %v934 = vunpack.c.1.s8 %v550
    %v935 = vunpack.c.1.s8 %v551
    %v936 = vunpack.c.2.s8 %v548
    %v937 = vunpack.c.2.s8 %v549
    %v938 = vunpack.c.2.s8 %v550
    %v939 = vunpack.c.2.s8 %v551
    %v940 = vunpack.c.3.s8 %v548
    %v941 = vunpack.c.3.s8 %v549
    %v942 = vunpack.c.3.s8 %v550
    %v943 = vunpack.c.3.s8 %v551
    %v944 = vunpack.c.0.s8 %v552
    %v945 = vunpack.c.0.s8 %v553
    %v946 = vunpack.c.0.s8 %v554
    %v947 = vunpack.c.0.s8 %v555
    %v948 = vunpack.c.1.s8 %v552
    %v949 = vunpack.c.1.s8 %v553
    %v950 = vunpack.c.1.s8 %v554
    %v951 = vunpack.c.1.s8 %v555
    %v952 = vunpack.c.2.s8 %v552
    %v953 = vunpack.c.2.s8 %v553
    %v954 = vunpack.c.2.s8 %v554
    %v955 = vunpack.c.2.s8 %v555
    %v956 = vunpack.c.3.s8 %v552
    %v957 = vunpack.c.3.s8 %v553
    %v958 = vunpack.c.3.s8 %v554
    %v959 = vunpack.c.3.s8 %v555
    %v960 = vunpack.c.0.s8 %v556
    %v961 = vunpack.c.0.s8 %v557
    %v962 = vunpack.c.0.s8 %v558
    %v963 = vunpack.c.0.s8 %v559
    %v964 = vunpack.c.1.s8 %v556
    %v965 = vunpack.c.1.s8 %v557
    %v966 = vunpack.c.1.s8 %v558
    %v967 = vunpack.c.1.s8 %v559
    %v968 = vunpack.c.2.s8 %v556
    %v969 = vunpack.c.2.s8 %v557
    %v970 = vunpack.c.2.s8 %v558
    %v971 = vunpack.c.2.s8 %v559
    %v972 = vunpack.c.3.s8 %v556
    %v973 = vunpack.c.3.s8 %v557
    %v974 = vunpack.c.3.s8 %v558
    %v975 = vunpack.c.3.s8 %v559
    %v976 = vunpack.c.0.s8 %v560
    %v977 = vunpack.c.0.s8 %v561
    %v978 = vunpack.c.0.s8 %v562
    %v979 = vunpack.c.0.s8 %v563
    %v980 = vunpack.c.1.s8 %v560
    %v981 = vunpack.c.1.s8 %v561
    %v982 = vunpack.c.1.s8 %v562
    %v983 = vunpack.c.1.s8 %v563
    %v984 = vunpack.c.2.s8 %v560
    %v985 = vunpack.c.2.s8 %v561
    %v986 = vunpack.c.2.s8 %v562
    %v987 = vunpack.c.2.s8 %v563
    %v988 = vunpack.c.3.s8 %v560
    %v989 = vunpack.c.3.s8 %v561
    %v990 = vunpack.c.3.s8 %v562
    %v991 = vunpack.c.3.s8 %v563
    %v992 = vunpack.c.0.s8 %v564
    %v993 = vunpack.c.0.s8 %v565
    %v994 = vunpack.c.0.s8 %v566
    %v995 = vunpack.c.0.s8 %v567
    %v996 = vunpack.c.1.s8 %v564
    %v997 = vunpack.c.1.s8 %v565
    %v998 = vunpack.c.1.s8 %v566
    %v999 = vunpack.c.1.s8 %v567
    %v1000 = vunpack.c.2.s8 %v564
    %v1001 = vunpack.c.2.s8 %v565
    %v1002 = vunpack.c.2.s8 %v566
    %v1003 = vunpack.c.2.s8 %v567
    %v1004 = vunpack.c.3.s8 %v564
    %v1005 = vunpack.c.3.s8 %v565
    %v1006 = vunpack.c.3.s8 %v566
    %v1007 = vunpack.c.3.s8 %v567
    %v1008 = vunpack.c.0.s8 %v568
    %v1009 = vunpack.c.0.s8 %v569
    %v1010 = vunpack.c.0.s8 %v570
    %v1011 = vunpack.c.0.s8 %v571
    %v1012 = vunpack.c.1.s8 %v568
    %v1013 = vunpack.c.1.s8 %v569
    %v1014 = vunpack.c.1.s8 %v570
    %v1015 = vunpack.c.1.s8 %v571
    %v1016 = vunpack.c.2.s8 %v568
    %v1017 = vunpack.c.2.s8 %v569
    %v1018 = vunpack.c.2.s8 %v570
    %v1019 = vunpack.c.2.s8 %v571
    %v1020 = vunpack.c.3.s8 %v568
    %v1021 = vunpack.c.3.s8 %v569
    %v1022 = vunpack.c.3.s8 %v570
    %v1023 = vunpack.c.3.s8 %v571
    %v1024 = vunpack.c.0.s8 %v572
    %v1025 = vunpack.c.0.s8 %v573
    %v1026 = vunpack.c.0.s8 %v574
    %v1027 = vunpack.c.0.s8 %v575
    %v1028 = vunpack.c.1.s8 %v572
    %v1029 = vunpack.c.1.s8 %v573
    %v1030 = vunpack.c.1.s8 %v574
    %v1031 = vunpack.c.1.s8 %v575
    %v1032 = vunpack.c.2.s8 %v572
    %v1033 = vunpack.c.2.s8 %v573
    %v1034 = vunpack.c.2.s8 %v574
    %v1035 = vunpack.c.2.s8 %v575
    %v1036 = vunpack.c.3.s8 %v572
    %v1037 = vunpack.c.3.s8 %v573
    %v1038 = vunpack.c.3.s8 %v574
    %v1039 = vunpack.c.3.s8 %v575
    %v1040 = vunpack.c.0.s8 %v576
    %v1041 = vunpack.c.0.s8 %v577
    %v1042 = vunpack.c.0.s8 %v578
    %v1043 = vunpack.c.0.s8 %v579
    %v1044 = vunpack.c.1.s8 %v576
    %v1045 = vunpack.c.1.s8 %v577
    %v1046 = vunpack.c.1.s8 %v578
    %v1047 = vunpack.c.1.s8 %v579
    %v1048 = vunpack.c.2.s8 %v576
    %v1049 = vunpack.c.2.s8 %v577
    %v1050 = vunpack.c.2.s8 %v578
    %v1051 = vunpack.c.2.s8 %v579
    %v1052 = vunpack.c.3.s8 %v576
    %v1053 = vunpack.c.3.s8 %v577
    %v1054 = vunpack.c.3.s8 %v578
    %v1055 = vunpack.c.3.s8 %v579
    %v1056 = vunpack.c.0.s8 %v580
    %v1057 = vunpack.c.0.s8 %v581
    %v1058 = vunpack.c.0.s8 %v582
    %v1059 = vunpack.c.0.s8 %v583
    %v1060 = vunpack.c.1.s8 %v580
    %v1061 = vunpack.c.1.s8 %v581
    %v1062 = vunpack.c.1.s8 %v582
    %v1063 = vunpack.c.1.s8 %v583
    %v1064 = vunpack.c.2.s8 %v580
    %v1065 = vunpack.c.2.s8 %v581
    %v1066 = vunpack.c.2.s8 %v582
    %v1067 = vunpack.c.2.s8 %v583
    %v1068 = vunpack.c.3.s8 %v580
    %v1069 = vunpack.c.3.s8 %v581
    %v1070 = vunpack.c.3.s8 %v582
    %v1071 = vunpack.c.3.s8 %v583
    %v1072 = vunpack.c.0.s8 %v584
    %v1073 = vunpack.c.0.s8 %v585
    %v1074 = vunpack.c.0.s8 %v586
    %v1075 = vunpack.c.0.s8 %v587
    %v1076 = vunpack.c.1.s8 %v584
    %v1077 = vunpack.c.1.s8 %v585
    %v1078 = vunpack.c.1.s8 %v586
    %v1079 = vunpack.c.1.s8 %v587
    %v1080 = vunpack.c.2.s8 %v584
    %v1081 = vunpack.c.2.s8 %v585
    %v1082 = vunpack.c.2.s8 %v586
    %v1083 = vunpack.c.2.s8 %v587
    %v1084 = vunpack.c.3.s8 %v584
    %v1085 = vunpack.c.3.s8 %v585
    %v1086 = vunpack.c.3.s8 %v586
    %v1087 = vunpack.c.3.s8 %v587
    %v1088 = vunpack.c.0.s8 %v588
    %v1089 = vunpack.c.0.s8 %v589
    %v1090 = vunpack.c.0.s8 %v590
    %v1091 = vunpack.c.0.s8 %v591
    %v1092 = vunpack.c.1.s8 %v588
    %v1093 = vunpack.c.1.s8 %v589
    %v1094 = vunpack.c.1.s8 %v590
    %v1095 = vunpack.c.1.s8 %v591
    %v1096 = vunpack.c.2.s8 %v588
    %v1097 = vunpack.c.2.s8 %v589
    %v1098 = vunpack.c.2.s8 %v590
    %v1099 = vunpack.c.2.s8 %v591
    %v1100 = vunpack.c.3.s8 %v588
    %v1101 = vunpack.c.3.s8 %v589
    %v1102 = vunpack.c.3.s8 %v590
    %v1103 = vunpack.c.3.s8 %v591
    %v1104 = vcvt.s32.f32 %v592
    %v1105 = vcvt.s32.f32 %v593
    %v1106 = vcvt.s32.f32 %v594
    %v1107 = vcvt.s32.f32 %v595
    %v1108 = vcvt.s32.f32 %v596
    %v1109 = vcvt.s32.f32 %v597
    %v1110 = vcvt.s32.f32 %v598
    %v1111 = vcvt.s32.f32 %v599
    %v1112 = vcvt.s32.f32 %v600
    %v1113 = vcvt.s32.f32 %v601
    %v1114 = vcvt.s32.f32 %v602
    %v1115 = vcvt.s32.f32 %v603
    %v1116 = vcvt.s32.f32 %v604
    %v1117 = vcvt.s32.f32 %v605
    %v1118 = vcvt.s32.f32 %v606
    %v1119 = vcvt.s32.f32 %v607
    %v1120 = vcvt.s32.f32 %v608
    %v1121 = vcvt.s32.f32 %v609
    %v1122 = vcvt.s32.f32 %v610
    %v1123 = vcvt.s32.f32 %v611
    %v1124 = vcvt.s32.f32 %v612
    %v1125 = vcvt.s32.f32 %v613
    %v1126 = vcvt.s32.f32 %v614
    %v1127 = vcvt.s32.f32 %v615
    %v1128 = vcvt.s32.f32 %v616
    %v1129 = vcvt.s32.f32 %v617
    %v1130 = vcvt.s32.f32 %v618
    %v1131 = vcvt.s32.f32 %v619
    %v1132 = vcvt.s32.f32 %v620
    %v1133 = vcvt.s32.f32 %v621
    %v1134 = vcvt.s32.f32 %v622
    %v1135 = vcvt.s32.f32 %v623
    %v1136 = vcvt.s32.f32 %v624
    %v1137 = vcvt.s32.f32 %v625
    %v1138 = vcvt.s32.f32 %v626
    %v1139 = vcvt.s32.f32 %v627
    %v1140 = vcvt.s32.f32 %v628
    %v1141 = vcvt.s32.f32 %v629
    %v1142 = vcvt.s32.f32 %v630
    %v1143 = vcvt.s32.f32 %v631
    %v1144 = vcvt.s32.f32 %v632
    %v1145 = vcvt.s32.f32 %v633
    %v1146 = vcvt.s32.f32 %v634
    %v1147 = vcvt.s32.f32 %v635
    %v1148 = vcvt.s32.f32 %v636
    %v1149 = vcvt.s32.f32 %v637
    %v1150 = vcvt.s32.f32 %v638
    %v1151 = vcvt.s32.f32 %v639
    %v1152 = vcvt.s32.f32 %v640
    %v1153 = vcvt.s32.f32 %v641
    %v1154 = vcvt.s32.f32 %v642
    %v1155 = vcvt.s32.f32 %v643
    %v1156 = vcvt.s32.f32 %v644
    %v1157 = vcvt.s32.f32 %v645
    %v1158 = vcvt.s32.f32 %v646
    %v1159 = vcvt.s32.f32 %v647
    %v1160 = vcvt.s32.f32 %v648
    %v1161 = vcvt.s32.f32 %v649
    %v1162 = vcvt.s32.f32 %v650
    %v1163 = vcvt.s32.f32 %v651
    %v1164 = vcvt.s32.f32 %v652
    %v1165 = vcvt.s32.f32 %v653
    %v1166 = vcvt.s32.f32 %v654
    %v1167 = vcvt.s32.f32 %v655
    %v1168 = vcvt.s32.f32 %v656
    %v1169 = vcvt.s32.f32 %v657
    %v1170 = vcvt.s32.f32 %v658
    %v1171 = vcvt.s32.f32 %v659
    %v1172 = vcvt.s32.f32 %v660
    %v1173 = vcvt.s32.f32 %v661
    %v1174 = vcvt.s32.f32 %v662
    %v1175 = vcvt.s32.f32 %v663
    %v1176 = vcvt.s32.f32 %v664
    %v1177 = vcvt.s32.f32 %v665
    %v1178 = vcvt.s32.f32 %v666
    %v1179 = vcvt.s32.f32 %v667
    %v1180 = vcvt.s32.f32 %v668
    %v1181 = vcvt.s32.f32 %v669
    %v1182 = vcvt.s32.f32 %v670
    %v1183 = vcvt.s32.f32 %v671
    %v1184 = vcvt.s32.f32 %v672
    %v1185 = vcvt.s32.f32 %v673
    %v1186 = vcvt.s32.f32 %v674
    %v1187 = vcvt.s32.f32 %v675
    %v1188 = vcvt.s32.f32 %v676
    %v1189 = vcvt.s32.f32 %v677
    %v1190 = vcvt.s32.f32 %v678
    %v1191 = vcvt.s32.f32 %v679
    %v1192 = vcvt.s32.f32 %v680
    %v1193 = vcvt.s32.f32 %v681
    %v1194 = vcvt.s32.f32 %v682
    %v1195 = vcvt.s32.f32 %v683
    %v1196 = vcvt.s32.f32 %v684
    %v1197 = vcvt.s32.f32 %v685
    %v1198 = vcvt.s32.f32 %v686
    %v1199 = vcvt.s32.f32 %v687
    %v1200 = vcvt.s32.f32 %v688
    %v1201 = vcvt.s32.f32 %v689
    %v1202 = vcvt.s32.f32 %v690
    %v1203 = vcvt.s32.f32 %v691
    %v1204 = vcvt.s32.f32 %v692
    %v1205 = vcvt.s32.f32 %v693
    %v1206 = vcvt.s32.f32 %v694
    %v1207 = vcvt.s32.f32 %v695
    %v1208 = vcvt.s32.f32 %v696
    %v1209 = vcvt.s32.f32 %v697
    %v1210 = vcvt.s32.f32 %v698
    %v1211 = vcvt.s32.f32 %v699
    %v1212 = vcvt.s32.f32 %v700
    %v1213 = vcvt.s32.f32 %v701
    %v1214 = vcvt.s32.f32 %v702
    %v1215 = vcvt.s32.f32 %v703
    %v1216 = vcvt.s32.f32 %v704
    %v1217 = vcvt.s32.f32 %v705
    %v1218 = vcvt.s32.f32 %v706
    %v1219 = vcvt.s32.f32 %v707
    %v1220 = vcvt.s32.f32 %v708
    %v1221 = vcvt.s32.f32 %v709
    %v1222 = vcvt.s32.f32 %v710
    %v1223 = vcvt.s32.f32 %v711
    %v1224 = vcvt.s32.f32 %v712
    %v1225 = vcvt.s32.f32 %v713
    %v1226 = vcvt.s32.f32 %v714
    %v1227 = vcvt.s32.f32 %v715
    %v1228 = vcvt.s32.f32 %v716
    %v1229 = vcvt.s32.f32 %v717
    %v1230 = vcvt.s32.f32 %v718
    %v1231 = vcvt.s32.f32 %v719
    %v1232 = vcvt.s32.f32 %v720
    %v1233 = vcvt.s32.f32 %v721
    %v1234 = vcvt.s32.f32 %v722
    %v1235 = vcvt.s32.f32 %v723
    %v1236 = vcvt.s32.f32 %v724
    %v1237 = vcvt.s32.f32 %v725
    %v1238 = vcvt.s32.f32 %v726
    %v1239 = vcvt.s32.f32 %v727
    %v1240 = vcvt.s32.f32 %v728
    %v1241 = vcvt.s32.f32 %v729
    %v1242 = vcvt.s32.f32 %v730
    %v1243 = vcvt.s32.f32 %v731
    %v1244 = vcvt.s32.f32 %v732
    %v1245 = vcvt.s32.f32 %v733
    %v1246 = vcvt.s32.f32 %v734
    %v1247 = vcvt.s32.f32 %v735
    %v1248 = vcvt.s32.f32 %v736
    %v1249 = vcvt.s32.f32 %v737
    %v1250 = vcvt.s32.f32 %v738
    %v1251 = vcvt.s32.f32 %v739
    %v1252 = vcvt.s32.f32 %v740
    %v1253 = vcvt.s32.f32 %v741
    %v1254 = vcvt.s32.f32 %v742
    %v1255 = vcvt.s32.f32 %v743
    %v1256 = vcvt.s32.f32 %v744
    %v1257 = vcvt.s32.f32 %v745
    %v1258 = vcvt.s32.f32 %v746
    %v1259 = vcvt.s32.f32 %v747
    %v1260 = vcvt.s32.f32 %v748
    %v1261 = vcvt.s32.f32 %v749
    %v1262 = vcvt.s32.f32 %v750
    %v1263 = vcvt.s32.f32 %v751
    %v1264 = vcvt.s32.f32 %v752
    %v1265 = vcvt.s32.f32 %v753
    %v1266 = vcvt.s32.f32 %v754
    %v1267 = vcvt.s32.f32 %v755
    %v1268 = vcvt.s32.f32 %v756
    %v1269 = vcvt.s32.f32 %v757
    %v1270 = vcvt.s32.f32 %v758
    %v1271 = vcvt.s32.f32 %v759
    %v1272 = vcvt.s32.f32 %v760
    %v1273 = vcvt.s32.f32 %v761
    %v1274 = vcvt.s32.f32 %v762
    %v1275 = vcvt.s32.f32 %v763
    %v1276 = vcvt.s32.f32 %v764
    %v1277 = vcvt.s32.f32 %v765
    %v1278 = vcvt.s32.f32 %v766
    %v1279 = vcvt.s32.f32 %v767
    %v1280 = vcvt.s32.f32 %v768
    %v1281 = vcvt.s32.f32 %v769
    %v1282 = vcvt.s32.f32 %v770
    %v1283 = vcvt.s32.f32 %v771
    %v1284 = vcvt.s32.f32 %v772
    %v1285 = vcvt.s32.f32 %v773
    %v1286 = vcvt.s32.f32 %v774
    %v1287 = vcvt.s32.f32 %v775
    %v1288 = vcvt.s32.f32 %v776
    %v1289 = vcvt.s32.f32 %v777
    %v1290 = vcvt.s32.f32 %v778
    %v1291 = vcvt.s32.f32 %v779
    %v1292 = vcvt.s32.f32 %v780
    %v1293 = vcvt.s32.f32 %v781
    %v1294 = vcvt.s32.f32 %v782
    %v1295 = vcvt.s32.f32 %v783
    %v1296 = vcvt.s32.f32 %v784
    %v1297 = vcvt.s32.f32 %v785
    %v1298 = vcvt.s32.f32 %v786
    %v1299 = vcvt.s32.f32 %v787
    %v1300 = vcvt.s32.f32 %v788
    %v1301 = vcvt.s32.f32 %v789
    %v1302 = vcvt.s32.f32 %v790
    %v1303 = vcvt.s32.f32 %v791
    %v1304 = vcvt.s32.f32 %v792
    %v1305 = vcvt.s32.f32 %v793
    %v1306 = vcvt.s32.f32 %v794
    %v1307 = vcvt.s32.f32 %v795
    %v1308 = vcvt.s32.f32 %v796
    %v1309 = vcvt.s32.f32 %v797
    %v1310 = vcvt.s32.f32 %v798
    %v1311 = vcvt.s32.f32 %v799
    %v1312 = vcvt.s32.f32 %v800
    %v1313 = vcvt.s32.f32 %v801
    %v1314 = vcvt.s32.f32 %v802
    %v1315 = vcvt.s32.f32 %v803
    %v1316 = vcvt.s32.f32 %v804
    %v1317 = vcvt.s32.f32 %v805
    %v1318 = vcvt.s32.f32 %v806
    %v1319 = vcvt.s32.f32 %v807
    %v1320 = vcvt.s32.f32 %v808
    %v1321 = vcvt.s32.f32 %v809
    %v1322 = vcvt.s32.f32 %v810
    %v1323 = vcvt.s32.f32 %v811
    %v1324 = vcvt.s32.f32 %v812
    %v1325 = vcvt.s32.f32 %v813
    %v1326 = vcvt.s32.f32 %v814
    %v1327 = vcvt.s32.f32 %v815
    %v1328 = vcvt.s32.f32 %v816
    %v1329 = vcvt.s32.f32 %v817
    %v1330 = vcvt.s32.f32 %v818
    %v1331 = vcvt.s32.f32 %v819
    %v1332 = vcvt.s32.f32 %v820
    %v1333 = vcvt.s32.f32 %v821
    %v1334 = vcvt.s32.f32 %v822
    %v1335 = vcvt.s32.f32 %v823
    %v1336 = vcvt.s32.f32 %v824
    %v1337 = vcvt.s32.f32 %v825
    %v1338 = vcvt.s32.f32 %v826
    %v1339 = vcvt.s32.f32 %v827
    %v1340 = vcvt.s32.f32 %v828
    %v1341 = vcvt.s32.f32 %v829
    %v1342 = vcvt.s32.f32 %v830
    %v1343 = vcvt.s32.f32 %v831
    %v1344 = vcvt.s32.f32 %v832
    %v1345 = vcvt.s32.f32 %v833
    %v1346 = vcvt.s32.f32 %v834
    %v1347 = vcvt.s32.f32 %v835
    %v1348 = vcvt.s32.f32 %v836
    %v1349 = vcvt.s32.f32 %v837
    %v1350 = vcvt.s32.f32 %v838
    %v1351 = vcvt.s32.f32 %v839
    %v1352 = vcvt.s32.f32 %v840
    %v1353 = vcvt.s32.f32 %v841
    %v1354 = vcvt.s32.f32 %v842
    %v1355 = vcvt.s32.f32 %v843
    %v1356 = vcvt.s32.f32 %v844
    %v1357 = vcvt.s32.f32 %v845
    %v1358 = vcvt.s32.f32 %v846
    %v1359 = vcvt.s32.f32 %v847
    %v1360 = vcvt.s32.f32 %v848
    %v1361 = vcvt.s32.f32 %v849
    %v1362 = vcvt.s32.f32 %v850
    %v1363 = vcvt.s32.f32 %v851
    %v1364 = vcvt.s32.f32 %v852
    %v1365 = vcvt.s32.f32 %v853
    %v1366 = vcvt.s32.f32 %v854
    %v1367 = vcvt.s32.f32 %v855
    %v1368 = vcvt.s32.f32 %v856
    %v1369 = vcvt.s32.f32 %v857
    %v1370 = vcvt.s32.f32 %v858
    %v1371 = vcvt.s32.f32 %v859
    %v1372 = vcvt.s32.f32 %v860
    %v1373 = vcvt.s32.f32 %v861
    %v1374 = vcvt.s32.f32 %v862
    %v1375 = vcvt.s32.f32 %v863
    %v1376 = vcvt.s32.f32 %v864
    %v1377 = vcvt.s32.f32 %v865
    %v1378 = vcvt.s32.f32 %v866
    %v1379 = vcvt.s32.f32 %v867
    %v1380 = vcvt.s32.f32 %v868
    %v1381 = vcvt.s32.f32 %v869
    %v1382 = vcvt.s32.f32 %v870
    %v1383 = vcvt.s32.f32 %v871
    %v1384 = vcvt.s32.f32 %v872
    %v1385 = vcvt.s32.f32 %v873
    %v1386 = vcvt.s32.f32 %v874
    %v1387 = vcvt.s32.f32 %v875
    %v1388 = vcvt.s32.f32 %v876
    %v1389 = vcvt.s32.f32 %v877
    %v1390 = vcvt.s32.f32 %v878
    %v1391 = vcvt.s32.f32 %v879
    %v1392 = vcvt.s32.f32 %v880
    %v1393 = vcvt.s32.f32 %v881
    %v1394 = vcvt.s32.f32 %v882
    %v1395 = vcvt.s32.f32 %v883
    %v1396 = vcvt.s32.f32 %v884
    %v1397 = vcvt.s32.f32 %v885
    %v1398 = vcvt.s32.f32 %v886
    %v1399 = vcvt.s32.f32 %v887
    %v1400 = vcvt.s32.f32 %v888
    %v1401 = vcvt.s32.f32 %v889
    %v1402 = vcvt.s32.f32 %v890
    %v1403 = vcvt.s32.f32 %v891
    %v1404 = vcvt.s32.f32 %v892
    %v1405 = vcvt.s32.f32 %v893
    %v1406 = vcvt.s32.f32 %v894
    %v1407 = vcvt.s32.f32 %v895
    %v1408 = vcvt.s32.f32 %v896
    %v1409 = vcvt.s32.f32 %v897
    %v1410 = vcvt.s32.f32 %v898
    %v1411 = vcvt.s32.f32 %v899
    %v1412 = vcvt.s32.f32 %v900
    %v1413 = vcvt.s32.f32 %v901
    %v1414 = vcvt.s32.f32 %v902
    %v1415 = vcvt.s32.f32 %v903
    %v1416 = vcvt.s32.f32 %v904
    %v1417 = vcvt.s32.f32 %v905
    %v1418 = vcvt.s32.f32 %v906
    %v1419 = vcvt.s32.f32 %v907
    %v1420 = vcvt.s32.f32 %v908
    %v1421 = vcvt.s32.f32 %v909
    %v1422 = vcvt.s32.f32 %v910
    %v1423 = vcvt.s32.f32 %v911
    %v1424 = vcvt.s32.f32 %v912
    %v1425 = vcvt.s32.f32 %v913
    %v1426 = vcvt.s32.f32 %v914
    %v1427 = vcvt.s32.f32 %v915
    %v1428 = vcvt.s32.f32 %v916
    %v1429 = vcvt.s32.f32 %v917
    %v1430 = vcvt.s32.f32 %v918
    %v1431 = vcvt.s32.f32 %v919
    %v1432 = vcvt.s32.f32 %v920
    %v1433 = vcvt.s32.f32 %v921
    %v1434 = vcvt.s32.f32 %v922
    %v1435 = vcvt.s32.f32 %v923
    %v1436 = vcvt.s32.f32 %v924
    %v1437 = vcvt.s32.f32 %v925
    %v1438 = vcvt.s32.f32 %v926
    %v1439 = vcvt.s32.f32 %v927
    %v1440 = vcvt.s32.f32 %v928
    %v1441 = vcvt.s32.f32 %v929
    %v1442 = vcvt.s32.f32 %v930
    %v1443 = vcvt.s32.f32 %v931
    %v1444 = vcvt.s32.f32 %v932
    %v1445 = vcvt.s32.f32 %v933
    %v1446 = vcvt.s32.f32 %v934
    %v1447 = vcvt.s32.f32 %v935
    %v1448 = vcvt.s32.f32 %v936
    %v1449 = vcvt.s32.f32 %v937
    %v1450 = vcvt.s32.f32 %v938
    %v1451 = vcvt.s32.f32 %v939
    %v1452 = vcvt.s32.f32 %v940
    %v1453 = vcvt.s32.f32 %v941
    %v1454 = vcvt.s32.f32 %v942
    %v1455 = vcvt.s32.f32 %v943
    %v1456 = vcvt.s32.f32 %v944
    %v1457 = vcvt.s32.f32 %v945
    %v1458 = vcvt.s32.f32 %v946
    %v1459 = vcvt.s32.f32 %v947
    %v1460 = vcvt.s32.f32 %v948
    %v1461 = vcvt.s32.f32 %v949
    %v1462 = vcvt.s32.f32 %v950
    %v1463 = vcvt.s32.f32 %v951
    %v1464 = vcvt.s32.f32 %v952
    %v1465 = vcvt.s32.f32 %v953
    %v1466 = vcvt.s32.f32 %v954
    %v1467 = vcvt.s32.f32 %v955
    %v1468 = vcvt.s32.f32 %v956
    %v1469 = vcvt.s32.f32 %v957
    %v1470 = vcvt.s32.f32 %v958
    %v1471 = vcvt.s32.f32 %v959
    %v1472 = vcvt.s32.f32 %v960
    %v1473 = vcvt.s32.f32 %v961
    %v1474 = vcvt.s32.f32 %v962
    %v1475 = vcvt.s32.f32 %v963
    %v1476 = vcvt.s32.f32 %v964
    %v1477 = vcvt.s32.f32 %v965
    %v1478 = vcvt.s32.f32 %v966
    %v1479 = vcvt.s32.f32 %v967
    %v1480 = vcvt.s32.f32 %v968
    %v1481 = vcvt.s32.f32 %v969
    %v1482 = vcvt.s32.f32 %v970
    %v1483 = vcvt.s32.f32 %v971
    %v1484 = vcvt.s32.f32 %v972
    %v1485 = vcvt.s32.f32 %v973
    %v1486 = vcvt.s32.f32 %v974
    %v1487 = vcvt.s32.f32 %v975
    %v1488 = vcvt.s32.f32 %v976
    %v1489 = vcvt.s32.f32 %v977
    %v1490 = vcvt.s32.f32 %v978
    %v1491 = vcvt.s32.f32 %v979
    %v1492 = vcvt.s32.f32 %v980
    %v1493 = vcvt.s32.f32 %v981
    %v1494 = vcvt.s32.f32 %v982
    %v1495 = vcvt.s32.f32 %v983
    %v1496 = vcvt.s32.f32 %v984
    %v1497 = vcvt.s32.f32 %v985
    %v1498 = vcvt.s32.f32 %v986
    %v1499 = vcvt.s32.f32 %v987
    %v1500 = vcvt.s32.f32 %v988
    %v1501 = vcvt.s32.f32 %v989
    %v1502 = vcvt.s32.f32 %v990
    %v1503 = vcvt.s32.f32 %v991
    %v1504 = vcvt.s32.f32 %v992
    %v1505 = vcvt.s32.f32 %v993
    %v1506 = vcvt.s32.f32 %v994
    %v1507 = vcvt.s32.f32 %v995
    %v1508 = vcvt.s32.f32 %v996
    %v1509 = vcvt.s32.f32 %v997
    %v1510 = vcvt.s32.f32 %v998
    %v1511 = vcvt.s32.f32 %v999
    %v1512 = vcvt.s32.f32 %v1000
    %v1513 = vcvt.s32.f32 %v1001
    %v1514 = vcvt.s32.f32 %v1002
    %v1515 = vcvt.s32.f32 %v1003
    %v1516 = vcvt.s32.f32 %v1004
    %v1517 = vcvt.s32.f32 %v1005
    %v1518 = vcvt.s32.f32 %v1006
    %v1519 = vcvt.s32.f32 %v1007
    %v1520 = vcvt.s32.f32 %v1008
    %v1521 = vcvt.s32.f32 %v1009
    %v1522 = vcvt.s32.f32 %v1010
    %v1523 = vcvt.s32.f32 %v1011
    %v1524 = vcvt.s32.f32 %v1012
    %v1525 = vcvt.s32.f32 %v1013
    %v1526 = vcvt.s32.f32 %v1014
    %v1527 = vcvt.s32.f32 %v1015
    %v1528 = vcvt.s32.f32 %v1016
    %v1529 = vcvt.s32.f32 %v1017
    %v1530 = vcvt.s32.f32 %v1018
    %v1531 = vcvt.s32.f32 %v1019
    %v1532 = vcvt.s32.f32 %v1020
    %v1533 = vcvt.s32.f32 %v1021
    %v1534 = vcvt.s32.f32 %v1022
    %v1535 = vcvt.s32.f32 %v1023
    %v1536 = vcvt.s32.f32 %v1024
    %v1537 = vcvt.s32.f32 %v1025
    %v1538 = vcvt.s32.f32 %v1026
    %v1539 = vcvt.s32.f32 %v1027
    %v1540 = vcvt.s32.f32 %v1028
    %v1541 = vcvt.s32.f32 %v1029
    %v1542 = vcvt.s32.f32 %v1030
    %v1543 = vcvt.s32.f32 %v1031
    %v1544 = vcvt.s32.f32 %v1032
    %v1545 = vcvt.s32.f32 %v1033
    %v1546 = vcvt.s32.f32 %v1034
    %v1547 = vcvt.s32.f32 %v1035
    %v1548 = vcvt.s32.f32 %v1036
    %v1549 = vcvt.s32.f32 %v1037
    %v1550 = vcvt.s32.f32 %v1038
    %v1551 = vcvt.s32.f32 %v1039
    %v1552 = vcvt.s32.f32 %v1040
    %v1553 = vcvt.s32.f32 %v1041
    %v1554 = vcvt.s32.f32 %v1042
    %v1555 = vcvt.s32.f32 %v1043
    %v1556 = vcvt.s32.f32 %v1044
    %v1557 = vcvt.s32.f32 %v1045
    %v1558 = vcvt.s32.f32 %v1046
    %v1559 = vcvt.s32.f32 %v1047
    %v1560 = vcvt.s32.f32 %v1048
    %v1561 = vcvt.s32.f32 %v1049
    %v1562 = vcvt.s32.f32 %v1050
    %v1563 = vcvt.s32.f32 %v1051
    %v1564 = vcvt.s32.f32 %v1052
    %v1565 = vcvt.s32.f32 %v1053
    %v1566 = vcvt.s32.f32 %v1054
    %v1567 = vcvt.s32.f32 %v1055
    %v1568 = vcvt.s32.f32 %v1056
    %v1569 = vcvt.s32.f32 %v1057
    %v1570 = vcvt.s32.f32 %v1058
    %v1571 = vcvt.s32.f32 %v1059
    %v1572 = vcvt.s32.f32 %v1060
    %v1573 = vcvt.s32.f32 %v1061
    %v1574 = vcvt.s32.f32 %v1062
    %v1575 = vcvt.s32.f32 %v1063
    %v1576 = vcvt.s32.f32 %v1064
    %v1577 = vcvt.s32.f32 %v1065
    %v1578 = vcvt.s32.f32 %v1066
    %v1579 = vcvt.s32.f32 %v1067
    %v1580 = vcvt.s32.f32 %v1068
    %v1581 = vcvt.s32.f32 %v1069
    %v1582 = vcvt.s32.f32 %v1070
    %v1583 = vcvt.s32.f32 %v1071
    %v1584 = vcvt.s32.f32 %v1072
    %v1585 = vcvt.s32.f32 %v1073
    %v1586 = vcvt.s32.f32 %v1074
    %v1587 = vcvt.s32.f32 %v1075
    %v1588 = vcvt.s32.f32 %v1076
    %v1589 = vcvt.s32.f32 %v1077
    %v1590 = vcvt.s32.f32 %v1078
    %v1591 = vcvt.s32.f32 %v1079
    %v1592 = vcvt.s32.f32 %v1080
    %v1593 = vcvt.s32.f32 %v1081
    %v1594 = vcvt.s32.f32 %v1082
    %v1595 = vcvt.s32.f32 %v1083
    %v1596 = vcvt.s32.f32 %v1084
    %v1597 = vcvt.s32.f32 %v1085
    %v1598 = vcvt.s32.f32 %v1086
    %v1599 = vcvt.s32.f32 %v1087
    %v1600 = vcvt.s32.f32 %v1088
    %v1601 = vcvt.s32.f32 %v1089
    %v1602 = vcvt.s32.f32 %v1090
    %v1603 = vcvt.s32.f32 %v1091
    %v1604 = vcvt.s32.f32 %v1092
    %v1605 = vcvt.s32.f32 %v1093
    %v1606 = vcvt.s32.f32 %v1094
    %v1607 = vcvt.s32.f32 %v1095
    %v1608 = vcvt.s32.f32 %v1096
    %v1609 = vcvt.s32.f32 %v1097
    %v1610 = vcvt.s32.f32 %v1098
    %v1611 = vcvt.s32.f32 %v1099
    %v1612 = vcvt.s32.f32 %v1100
    %v1613 = vcvt.s32.f32 %v1101
    %v1614 = vcvt.s32.f32 %v1102
    %v1615 = vcvt.s32.f32 %v1103
    %v1616 = vld [vmem:[#allocation9] sm:$0xf]
    %v1618 = vlaneseq
    %v1619 = vshrl.u32 %v1618, 7
    %v1620 = vsub.s32 0, %v1619
    %v1621 = vrot.slane %v1616, %v1620
    %v1622 = vlaneseq
    %v1623 = vshrl.u32 %v1622, 7
    %v1624 = vsub.s32 1, %v1623
    %v1625 = vrot.slane %v1616, %v1624
    %v1626 = vlaneseq
    %v1627 = vshrl.u32 %v1626, 7
    %v1628 = vsub.s32 2, %v1627
    %v1629 = vrot.slane %v1616, %v1628
    %v1630 = vlaneseq
    %v1631 = vshrl.u32 %v1630, 7
    %v1632 = vsub.s32 3, %v1631
    %v1633 = vrot.slane %v1616, %v1632
    %v1638 = vmul.f32 %v1104, %v1621
    %v1639 = vmul.f32 %v1105, %v1625
    %v1640 = vmul.f32 %v1106, %v1629
    %v1641 = vmul.f32 %v1107, %v1633
    %v1642 = vmul.f32 %v1108, %v1621
    %v1643 = vmul.f32 %v1109, %v1625
    %v1644 = vmul.f32 %v1110, %v1629
    %v1645 = vmul.f32 %v1111, %v1633
    %v1646 = vmul.f32 %v1112, %v1621
    %v1647 = vmul.f32 %v1113, %v1625
    %v1648 = vmul.f32 %v1114, %v1629
    %v1649 = vmul.f32 %v1115, %v1633
    %v1650 = vmul.f32 %v1116, %v1621
    %v1651 = vmul.f32 %v1117, %v1625
    %v1652 = vmul.f32 %v1118, %v1629
    %v1653 = vmul.f32 %v1119, %v1633
    %v1654 = vmul.f32 %v1120, %v1621
    %v1655 = vmul.f32 %v1121, %v1625
    %v1656 = vmul.f32 %v1122, %v1629
    %v1657 = vmul.f32 %v1123, %v1633
    %v1658 = vmul.f32 %v1124, %v1621
    %v1659 = vmul.f32 %v1125, %v1625
    %v1660 = vmul.f32 %v1126, %v1629
    %v1661 = vmul.f32 %v1127, %v1633
    %v1662 = vmul.f32 %v1128, %v1621
    %v1663 = vmul.f32 %v1129, %v1625
    %v1664 = vmul.f32 %v1130, %v1629
    %v1665 = vmul.f32 %v1131, %v1633
    %v1666 = vmul.f32 %v1132, %v1621
    %v1667 = vmul.f32 %v1133, %v1625
    %v1668 = vmul.f32 %v1134, %v1629
    %v1669 = vmul.f32 %v1135, %v1633
    %v1670 = vmul.f32 %v1136, %v1621
    %v1671 = vmul.f32 %v1137, %v1625
    %v1672 = vmul.f32 %v1138, %v1629
    %v1673 = vmul.f32 %v1139, %v1633
    %v1674 = vmul.f32 %v1140, %v1621
    %v1675 = vmul.f32 %v1141, %v1625
    %v1676 = vmul.f32 %v1142, %v1629
    %v1677 = vmul.f32 %v1143, %v1633
    %v1678 = vmul.f32 %v1144, %v1621
    %v1679 = vmul.f32 %v1145, %v1625
    %v1680 = vmul.f32 %v1146, %v1629
    %v1681 = vmul.f32 %v1147, %v1633
    %v1682 = vmul.f32 %v1148, %v1621
    %v1683 = vmul.f32 %v1149, %v1625
    %v1684 = vmul.f32 %v1150, %v1629
    %v1685 = vmul.f32 %v1151, %v1633
    %v1686 = vmul.f32 %v1152, %v1621
    %v1687 = vmul.f32 %v1153, %v1625
    %v1688 = vmul.f32 %v1154, %v1629
    %v1689 = vmul.f32 %v1155, %v1633
    %v1690 = vmul.f32 %v1156, %v1621
    %v1691 = vmul.f32 %v1157, %v1625
    %v1692 = vmul.f32 %v1158, %v1629
    %v1693 = vmul.f32 %v1159, %v1633
    %v1694 = vmul.f32 %v1160, %v1621
    %v1695 = vmul.f32 %v1161, %v1625
    %v1696 = vmul.f32 %v1162, %v1629
    %v1697 = vmul.f32 %v1163, %v1633
    %v1698 = vmul.f32 %v1164, %v1621
    %v1699 = vmul.f32 %v1165, %v1625
    %v1700 = vmul.f32 %v1166, %v1629
    %v1701 = vmul.f32 %v1167, %v1633
    %v1702 = vmul.f32 %v1168, %v1621
    %v1703 = vmul.f32 %v1169, %v1625
    %v1704 = vmul.f32 %v1170, %v1629
    %v1705 = vmul.f32 %v1171, %v1633
    %v1706 = vmul.f32 %v1172, %v1621
    %v1707 = vmul.f32 %v1173, %v1625
    %v1708 = vmul.f32 %v1174, %v1629
    %v1709 = vmul.f32 %v1175, %v1633
    %v1710 = vmul.f32 %v1176, %v1621
    %v1711 = vmul.f32 %v1177, %v1625
    %v1712 = vmul.f32 %v1178, %v1629
    %v1713 = vmul.f32 %v1179, %v1633
    %v1714 = vmul.f32 %v1180, %v1621
    %v1715 = vmul.f32 %v1181, %v1625
    %v1716 = vmul.f32 %v1182, %v1629
    %v1717 = vmul.f32 %v1183, %v1633
    %v1718 = vmul.f32 %v1184, %v1621
    %v1719 = vmul.f32 %v1185, %v1625
    %v1720 = vmul.f32 %v1186, %v1629
    %v1721 = vmul.f32 %v1187, %v1633
    %v1722 = vmul.f32 %v1188, %v1621
    %v1723 = vmul.f32 %v1189, %v1625
    %v1724 = vmul.f32 %v1190, %v1629
    %v1725 = vmul.f32 %v1191, %v1633
    %v1726 = vmul.f32 %v1192, %v1621
    %v1727 = vmul.f32 %v1193, %v1625
    %v1728 = vmul.f32 %v1194, %v1629
    %v1729 = vmul.f32 %v1195, %v1633
    %v1730 = vmul.f32 %v1196, %v1621
    %v1731 = vmul.f32 %v1197, %v1625
    %v1732 = vmul.f32 %v1198, %v1629
    %v1733 = vmul.f32 %v1199, %v1633
    %v1734 = vmul.f32 %v1200, %v1621
    %v1735 = vmul.f32 %v1201, %v1625
    %v1736 = vmul.f32 %v1202, %v1629
    %v1737 = vmul.f32 %v1203, %v1633
    %v1738 = vmul.f32 %v1204, %v1621
    %v1739 = vmul.f32 %v1205, %v1625
    %v1740 = vmul.f32 %v1206, %v1629
    %v1741 = vmul.f32 %v1207, %v1633
    %v1742 = vmul.f32 %v1208, %v1621
    %v1743 = vmul.f32 %v1209, %v1625
    %v1744 = vmul.f32 %v1210, %v1629
    %v1745 = vmul.f32 %v1211, %v1633
    %v1746 = vmul.f32 %v1212, %v1621
    %v1747 = vmul.f32 %v1213, %v1625
    %v1748 = vmul.f32 %v1214, %v1629
    %v1749 = vmul.f32 %v1215, %v1633
    %v1750 = vmul.f32 %v1216, %v1621
    %v1751 = vmul.f32 %v1217, %v1625
    %v1752 = vmul.f32 %v1218, %v1629
    %v1753 = vmul.f32 %v1219, %v1633
    %v1754 = vmul.f32 %v1220, %v1621
    %v1755 = vmul.f32 %v1221, %v1625
    %v1756 = vmul.f32 %v1222, %v1629
    %v1757 = vmul.f32 %v1223, %v1633
    %v1758 = vmul.f32 %v1224, %v1621
    %v1759 = vmul.f32 %v1225, %v1625
    %v1760 = vmul.f32 %v1226, %v1629
    %v1761 = vmul.f32 %v1227, %v1633
    %v1762 = vmul.f32 %v1228, %v1621
    %v1763 = vmul.f32 %v1229, %v1625
    %v1764 = vmul.f32 %v1230, %v1629
    %v1765 = vmul.f32 %v1231, %v1633
    %v1766 = vmul.f32 %v1232, %v1621
    %v1767 = vmul.f32 %v1233, %v1625
    %v1768 = vmul.f32 %v1234, %v1629
    %v1769 = vmul.f32 %v1235, %v1633
    %v1770 = vmul.f32 %v1236, %v1621
    %v1771 = vmul.f32 %v1237, %v1625
    %v1772 = vmul.f32 %v1238, %v1629
    %v1773 = vmul.f32 %v1239, %v1633
    %v1774 = vmul.f32 %v1240, %v1621
    %v1775 = vmul.f32 %v1241, %v1625
    %v1776 = vmul.f32 %v1242, %v1629
    %v1777 = vmul.f32 %v1243, %v1633
    %v1778 = vmul.f32 %v1244, %v1621
    %v1779 = vmul.f32 %v1245, %v1625
    %v1780 = vmul.f32 %v1246, %v1629
    %v1781 = vmul.f32 %v1247, %v1633
    %v1782 = vmul.f32 %v1248, %v1621
    %v1783 = vmul.f32 %v1249, %v1625
    %v1784 = vmul.f32 %v1250, %v1629
    %v1785 = vmul.f32 %v1251, %v1633
    %v1786 = vmul.f32 %v1252, %v1621
    %v1787 = vmul.f32 %v1253, %v1625
    %v1788 = vmul.f32 %v1254, %v1629
    %v1789 = vmul.f32 %v1255, %v1633
    %v1790 = vmul.f32 %v1256, %v1621
    %v1791 = vmul.f32 %v1257, %v1625
    %v1792 = vmul.f32 %v1258, %v1629
    %v1793 = vmul.f32 %v1259, %v1633
    %v1794 = vmul.f32 %v1260, %v1621
    %v1795 = vmul.f32 %v1261, %v1625
    %v1796 = vmul.f32 %v1262, %v1629
    %v1797 = vmul.f32 %v1263, %v1633
    %v1798 = vmul.f32 %v1264, %v1621
    %v1799 = vmul.f32 %v1265, %v1625
    %v1800 = vmul.f32 %v1266, %v1629
    %v1801 = vmul.f32 %v1267, %v1633
    %v1802 = vmul.f32 %v1268, %v1621
    %v1803 = vmul.f32 %v1269, %v1625
    %v1804 = vmul.f32 %v1270, %v1629
    %v1805 = vmul.f32 %v1271, %v1633
    %v1806 = vmul.f32 %v1272, %v1621
    %v1807 = vmul.f32 %v1273, %v1625
    %v1808 = vmul.f32 %v1274, %v1629
    %v1809 = vmul.f32 %v1275, %v1633
    %v1810 = vmul.f32 %v1276, %v1621
    %v1811 = vmul.f32 %v1277, %v1625
    %v1812 = vmul.f32 %v1278, %v1629
    %v1813 = vmul.f32 %v1279, %v1633
    %v1814 = vmul.f32 %v1280, %v1621
    %v1815 = vmul.f32 %v1281, %v1625
    %v1816 = vmul.f32 %v1282, %v1629
    %v1817 = vmul.f32 %v1283, %v1633
    %v1818 = vmul.f32 %v1284, %v1621
    %v1819 = vmul.f32 %v1285, %v1625
    %v1820 = vmul.f32 %v1286, %v1629
    %v1821 = vmul.f32 %v1287, %v1633
    %v1822 = vmul.f32 %v1288, %v1621
    %v1823 = vmul.f32 %v1289, %v1625
    %v1824 = vmul.f32 %v1290, %v1629
    %v1825 = vmul.f32 %v1291, %v1633
    %v1826 = vmul.f32 %v1292, %v1621
    %v1827 = vmul.f32 %v1293, %v1625
    %v1828 = vmul.f32 %v1294, %v1629
    %v1829 = vmul.f32 %v1295, %v1633
    %v1830 = vmul.f32 %v1296, %v1621
    %v1831 = vmul.f32 %v1297, %v1625
    %v1832 = vmul.f32 %v1298, %v1629
    %v1833 = vmul.f32 %v1299, %v1633
    %v1834 = vmul.f32 %v1300, %v1621
    %v1835 = vmul.f32 %v1301, %v1625
    %v1836 = vmul.f32 %v1302, %v1629
    %v1837 = vmul.f32 %v1303, %v1633
    %v1838 = vmul.f32 %v1304, %v1621
    %v1839 = vmul.f32 %v1305, %v1625
    %v1840 = vmul.f32 %v1306, %v1629
    %v1841 = vmul.f32 %v1307, %v1633
    %v1842 = vmul.f32 %v1308, %v1621
    %v1843 = vmul.f32 %v1309, %v1625
    %v1844 = vmul.f32 %v1310, %v1629
    %v1845 = vmul.f32 %v1311, %v1633
    %v1846 = vmul.f32 %v1312, %v1621
    %v1847 = vmul.f32 %v1313, %v1625
    %v1848 = vmul.f32 %v1314, %v1629
    %v1849 = vmul.f32 %v1315, %v1633
    %v1850 = vmul.f32 %v1316, %v1621
    %v1851 = vmul.f32 %v1317, %v1625
    %v1852 = vmul.f32 %v1318, %v1629
    %v1853 = vmul.f32 %v1319, %v1633
    %v1854 = vmul.f32 %v1320, %v1621
    %v1855 = vmul.f32 %v1321, %v1625
    %v1856 = vmul.f32 %v1322, %v1629
    %v1857 = vmul.f32 %v1323, %v1633
    %v1858 = vmul.f32 %v1324, %v1621
    %v1859 = vmul.f32 %v1325, %v1625
    %v1860 = vmul.f32 %v1326, %v1629
    %v1861 = vmul.f32 %v1327, %v1633
    %v1862 = vmul.f32 %v1328, %v1621
    %v1863 = vmul.f32 %v1329, %v1625
    %v1864 = vmul.f32 %v1330, %v1629
    %v1865 = vmul.f32 %v1331, %v1633
    %v1866 = vmul.f32 %v1332, %v1621
    %v1867 = vmul.f32 %v1333, %v1625
    %v1868 = vmul.f32 %v1334, %v1629
    %v1869 = vmul.f32 %v1335, %v1633
    %v1870 = vmul.f32 %v1336, %v1621
    %v1871 = vmul.f32 %v1337, %v1625
    %v1872 = vmul.f32 %v1338, %v1629
    %v1873 = vmul.f32 %v1339, %v1633
    %v1874 = vmul.f32 %v1340, %v1621
    %v1875 = vmul.f32 %v1341, %v1625
    %v1876 = vmul.f32 %v1342, %v1629
    %v1877 = vmul.f32 %v1343, %v1633
    %v1878 = vmul.f32 %v1344, %v1621
    %v1879 = vmul.f32 %v1345, %v1625
    %v1880 = vmul.f32 %v1346, %v1629
    %v1881 = vmul.f32 %v1347, %v1633
    %v1882 = vmul.f32 %v1348, %v1621
    %v1883 = vmul.f32 %v1349, %v1625
    %v1884 = vmul.f32 %v1350, %v1629
    %v1885 = vmul.f32 %v1351, %v1633
    %v1886 = vmul.f32 %v1352, %v1621
    %v1887 = vmul.f32 %v1353, %v1625
    %v1888 = vmul.f32 %v1354, %v1629
    %v1889 = vmul.f32 %v1355, %v1633
    %v1890 = vmul.f32 %v1356, %v1621
    %v1891 = vmul.f32 %v1357, %v1625
    %v1892 = vmul.f32 %v1358, %v1629
    %v1893 = vmul.f32 %v1359, %v1633
    %v1894 = vmul.f32 %v1360, %v1621
    %v1895 = vmul.f32 %v1361, %v1625
    %v1896 = vmul.f32 %v1362, %v1629
    %v1897 = vmul.f32 %v1363, %v1633
    %v1898 = vmul.f32 %v1364, %v1621
    %v1899 = vmul.f32 %v1365, %v1625
    %v1900 = vmul.f32 %v1366, %v1629
    %v1901 = vmul.f32 %v1367, %v1633
    %v1902 = vmul.f32 %v1368, %v1621
    %v1903 = vmul.f32 %v1369, %v1625
    %v1904 = vmul.f32 %v1370, %v1629
    %v1905 = vmul.f32 %v1371, %v1633
    %v1906 = vmul.f32 %v1372, %v1621
    %v1907 = vmul.f32 %v1373, %v1625
    %v1908 = vmul.f32 %v1374, %v1629
    %v1909 = vmul.f32 %v1375, %v1633
    %v1910 = vmul.f32 %v1376, %v1621
    %v1911 = vmul.f32 %v1377, %v1625
    %v1912 = vmul.f32 %v1378, %v1629
    %v1913 = vmul.f32 %v1379, %v1633
    %v1914 = vmul.f32 %v1380, %v1621
    %v1915 = vmul.f32 %v1381, %v1625
    %v1916 = vmul.f32 %v1382, %v1629
    %v1917 = vmul.f32 %v1383, %v1633
    %v1918 = vmul.f32 %v1384, %v1621
    %v1919 = vmul.f32 %v1385, %v1625
    %v1920 = vmul.f32 %v1386, %v1629
    %v1921 = vmul.f32 %v1387, %v1633
    %v1922 = vmul.f32 %v1388, %v1621
    %v1923 = vmul.f32 %v1389, %v1625
    %v1924 = vmul.f32 %v1390, %v1629
    %v1925 = vmul.f32 %v1391, %v1633
    %v1926 = vmul.f32 %v1392, %v1621
    %v1927 = vmul.f32 %v1393, %v1625
    %v1928 = vmul.f32 %v1394, %v1629
    %v1929 = vmul.f32 %v1395, %v1633
    %v1930 = vmul.f32 %v1396, %v1621
    %v1931 = vmul.f32 %v1397, %v1625
    %v1932 = vmul.f32 %v1398, %v1629
    %v1933 = vmul.f32 %v1399, %v1633
    %v1934 = vmul.f32 %v1400, %v1621
    %v1935 = vmul.f32 %v1401, %v1625
    %v1936 = vmul.f32 %v1402, %v1629
    %v1937 = vmul.f32 %v1403, %v1633
    %v1938 = vmul.f32 %v1404, %v1621
    %v1939 = vmul.f32 %v1405, %v1625
    %v1940 = vmul.f32 %v1406, %v1629
    %v1941 = vmul.f32 %v1407, %v1633
    %v1942 = vmul.f32 %v1408, %v1621
    %v1943 = vmul.f32 %v1409, %v1625
    %v1944 = vmul.f32 %v1410, %v1629
    %v1945 = vmul.f32 %v1411, %v1633
    %v1946 = vmul.f32 %v1412, %v1621
    %v1947 = vmul.f32 %v1413, %v1625
    %v1948 = vmul.f32 %v1414, %v1629
    %v1949 = vmul.f32 %v1415, %v1633
    %v1950 = vmul.f32 %v1416, %v1621
    %v1951 = vmul.f32 %v1417, %v1625
    %v1952 = vmul.f32 %v1418, %v1629
    %v1953 = vmul.f32 %v1419, %v1633
    %v1954 = vmul.f32 %v1420, %v1621
    %v1955 = vmul.f32 %v1421, %v1625
    %v1956 = vmul.f32 %v1422, %v1629
    %v1957 = vmul.f32 %v1423, %v1633
    %v1958 = vmul.f32 %v1424, %v1621
    %v1959 = vmul.f32 %v1425, %v1625
    %v1960 = vmul.f32 %v1426, %v1629
    %v1961 = vmul.f32 %v1427, %v1633
    %v1962 = vmul.f32 %v1428, %v1621
    %v1963 = vmul.f32 %v1429, %v1625
    %v1964 = vmul.f32 %v1430, %v1629
    %v1965 = vmul.f32 %v1431, %v1633
    %v1966 = vmul.f32 %v1432, %v1621
    %v1967 = vmul.f32 %v1433, %v1625
    %v1968 = vmul.f32 %v1434, %v1629
    %v1969 = vmul.f32 %v1435, %v1633
    %v1970 = vmul.f32 %v1436, %v1621
    %v1971 = vmul.f32 %v1437, %v1625
    %v1972 = vmul.f32 %v1438, %v1629
    %v1973 = vmul.f32 %v1439, %v1633
    %v1974 = vmul.f32 %v1440, %v1621
    %v1975 = vmul.f32 %v1441, %v1625
    %v1976 = vmul.f32 %v1442, %v1629
    %v1977 = vmul.f32 %v1443, %v1633
    %v1978 = vmul.f32 %v1444, %v1621
    %v1979 = vmul.f32 %v1445, %v1625
    %v1980 = vmul.f32 %v1446, %v1629
    %v1981 = vmul.f32 %v1447, %v1633
    %v1982 = vmul.f32 %v1448, %v1621
    %v1983 = vmul.f32 %v1449, %v1625
    %v1984 = vmul.f32 %v1450, %v1629
    %v1985 = vmul.f32 %v1451, %v1633
    %v1986 = vmul.f32 %v1452, %v1621
    %v1987 = vmul.f32 %v1453, %v1625
    %v1988 = vmul.f32 %v1454, %v1629
    %v1989 = vmul.f32 %v1455, %v1633
    %v1990 = vmul.f32 %v1456, %v1621
    %v1991 = vmul.f32 %v1457, %v1625
    %v1992 = vmul.f32 %v1458, %v1629
    %v1993 = vmul.f32 %v1459, %v1633
    %v1994 = vmul.f32 %v1460, %v1621
    %v1995 = vmul.f32 %v1461, %v1625
    %v1996 = vmul.f32 %v1462, %v1629
    %v1997 = vmul.f32 %v1463, %v1633
    %v1998 = vmul.f32 %v1464, %v1621
    %v1999 = vmul.f32 %v1465, %v1625
    %v2000 = vmul.f32 %v1466, %v1629
    %v2001 = vmul.f32 %v1467, %v1633
    %v2002 = vmul.f32 %v1468, %v1621
    %v2003 = vmul.f32 %v1469, %v1625
    %v2004 = vmul.f32 %v1470, %v1629
    %v2005 = vmul.f32 %v1471, %v1633
    %v2006 = vmul.f32 %v1472, %v1621
    %v2007 = vmul.f32 %v1473, %v1625
    %v2008 = vmul.f32 %v1474, %v1629
    %v2009 = vmul.f32 %v1475, %v1633
    %v2010 = vmul.f32 %v1476, %v1621
    %v2011 = vmul.f32 %v1477, %v1625
    %v2012 = vmul.f32 %v1478, %v1629
    %v2013 = vmul.f32 %v1479, %v1633
    %v2014 = vmul.f32 %v1480, %v1621
    %v2015 = vmul.f32 %v1481, %v1625
    %v2016 = vmul.f32 %v1482, %v1629
    %v2017 = vmul.f32 %v1483, %v1633
    %v2018 = vmul.f32 %v1484, %v1621
    %v2019 = vmul.f32 %v1485, %v1625
    %v2020 = vmul.f32 %v1486, %v1629
    %v2021 = vmul.f32 %v1487, %v1633
    %v2022 = vmul.f32 %v1488, %v1621
    %v2023 = vmul.f32 %v1489, %v1625
    %v2024 = vmul.f32 %v1490, %v1629
    %v2025 = vmul.f32 %v1491, %v1633
    %v2026 = vmul.f32 %v1492, %v1621
    %v2027 = vmul.f32 %v1493, %v1625
    %v2028 = vmul.f32 %v1494, %v1629
    %v2029 = vmul.f32 %v1495, %v1633
    %v2030 = vmul.f32 %v1496, %v1621
    %v2031 = vmul.f32 %v1497, %v1625
    %v2032 = vmul.f32 %v1498, %v1629
    %v2033 = vmul.f32 %v1499, %v1633
    %v2034 = vmul.f32 %v1500, %v1621
    %v2035 = vmul.f32 %v1501, %v1625
    %v2036 = vmul.f32 %v1502, %v1629
    %v2037 = vmul.f32 %v1503, %v1633
    %v2038 = vmul.f32 %v1504, %v1621
    %v2039 = vmul.f32 %v1505, %v1625
    %v2040 = vmul.f32 %v1506, %v1629
    %v2041 = vmul.f32 %v1507, %v1633
    %v2042 = vmul.f32 %v1508, %v1621
    %v2043 = vmul.f32 %v1509, %v1625
    %v2044 = vmul.f32 %v1510, %v1629
    %v2045 = vmul.f32 %v1511, %v1633
    %v2046 = vmul.f32 %v1512, %v1621
    %v2047 = vmul.f32 %v1513, %v1625
    %v2048 = vmul.f32 %v1514, %v1629
    %v2049 = vmul.f32 %v1515, %v1633
    %v2050 = vmul.f32 %v1516, %v1621
    %v2051 = vmul.f32 %v1517, %v1625
    %v2052 = vmul.f32 %v1518, %v1629
    %v2053 = vmul.f32 %v1519, %v1633
    %v2054 = vmul.f32 %v1520, %v1621
    %v2055 = vmul.f32 %v1521, %v1625
    %v2056 = vmul.f32 %v1522, %v1629
    %v2057 = vmul.f32 %v1523, %v1633
    %v2058 = vmul.f32 %v1524, %v1621
    %v2059 = vmul.f32 %v1525, %v1625
    %v2060 = vmul.f32 %v1526, %v1629
    %v2061 = vmul.f32 %v1527, %v1633
    %v2062 = vmul.f32 %v1528, %v1621
    %v2063 = vmul.f32 %v1529, %v1625
    %v2064 = vmul.f32 %v1530, %v1629
    %v2065 = vmul.f32 %v1531, %v1633
    %v2066 = vmul.f32 %v1532, %v1621
    %v2067 = vmul.f32 %v1533, %v1625
    %v2068 = vmul.f32 %v1534, %v1629
    %v2069 = vmul.f32 %v1535, %v1633
    %v2070 = vmul.f32 %v1536, %v1621
    %v2071 = vmul.f32 %v1537, %v1625
    %v2072 = vmul.f32 %v1538, %v1629
    %v2073 = vmul.f32 %v1539, %v1633
    %v2074 = vmul.f32 %v1540, %v1621
    %v2075 = vmul.f32 %v1541, %v1625
    %v2076 = vmul.f32 %v1542, %v1629
    %v2077 = vmul.f32 %v1543, %v1633
    %v2078 = vmul.f32 %v1544, %v1621
    %v2079 = vmul.f32 %v1545, %v1625
    %v2080 = vmul.f32 %v1546, %v1629
    %v2081 = vmul.f32 %v1547, %v1633
    %v2082 = vmul.f32 %v1548, %v1621
    %v2083 = vmul.f32 %v1549, %v1625
    %v2084 = vmul.f32 %v1550, %v1629
    %v2085 = vmul.f32 %v1551, %v1633
    %v2086 = vmul.f32 %v1552, %v1621
    %v2087 = vmul.f32 %v1553, %v1625
    %v2088 = vmul.f32 %v1554, %v1629
    %v2089 = vmul.f32 %v1555, %v1633
    %v2090 = vmul.f32 %v1556, %v1621
    %v2091 = vmul.f32 %v1557, %v1625
    %v2092 = vmul.f32 %v1558, %v1629
    %v2093 = vmul.f32 %v1559, %v1633
    %v2094 = vmul.f32 %v1560, %v1621
    %v2095 = vmul.f32 %v1561, %v1625
    %v2096 = vmul.f32 %v1562, %v1629
    %v2097 = vmul.f32 %v1563, %v1633
    %v2098 = vmul.f32 %v1564, %v1621
    %v2099 = vmul.f32 %v1565, %v1625
    %v2100 = vmul.f32 %v1566, %v1629
    %v2101 = vmul.f32 %v1567, %v1633
    %v2102 = vmul.f32 %v1568, %v1621
    %v2103 = vmul.f32 %v1569, %v1625
    %v2104 = vmul.f32 %v1570, %v1629
    %v2105 = vmul.f32 %v1571, %v1633
    %v2106 = vmul.f32 %v1572, %v1621
    %v2107 = vmul.f32 %v1573, %v1625
    %v2108 = vmul.f32 %v1574, %v1629
    %v2109 = vmul.f32 %v1575, %v1633
    %v2110 = vmul.f32 %v1576, %v1621
    %v2111 = vmul.f32 %v1577, %v1625
    %v2112 = vmul.f32 %v1578, %v1629
    %v2113 = vmul.f32 %v1579, %v1633
    %v2114 = vmul.f32 %v1580, %v1621
    %v2115 = vmul.f32 %v1581, %v1625
    %v2116 = vmul.f32 %v1582, %v1629
    %v2117 = vmul.f32 %v1583, %v1633
    %v2118 = vmul.f32 %v1584, %v1621
    %v2119 = vmul.f32 %v1585, %v1625
    %v2120 = vmul.f32 %v1586, %v1629
    %v2121 = vmul.f32 %v1587, %v1633
    %v2122 = vmul.f32 %v1588, %v1621
    %v2123 = vmul.f32 %v1589, %v1625
    %v2124 = vmul.f32 %v1590, %v1629
    %v2125 = vmul.f32 %v1591, %v1633
    %v2126 = vmul.f32 %v1592, %v1621
    %v2127 = vmul.f32 %v1593, %v1625
    %v2128 = vmul.f32 %v1594, %v1629
    %v2129 = vmul.f32 %v1595, %v1633
    %v2130 = vmul.f32 %v1596, %v1621
    %v2131 = vmul.f32 %v1597, %v1625
    %v2132 = vmul.f32 %v1598, %v1629
    %v2133 = vmul.f32 %v1599, %v1633
    %v2134 = vmul.f32 %v1600, %v1621
    %v2135 = vmul.f32 %v1601, %v1625
    %v2136 = vmul.f32 %v1602, %v1629
    %v2137 = vmul.f32 %v1603, %v1633
    %v2138 = vmul.f32 %v1604, %v1621
    %v2139 = vmul.f32 %v1605, %v1625
    %v2140 = vmul.f32 %v1606, %v1629
    %v2141 = vmul.f32 %v1607, %v1633
    %v2142 = vmul.f32 %v1608, %v1621
    %v2143 = vmul.f32 %v1609, %v1625
    %v2144 = vmul.f32 %v1610, %v1629
    %v2145 = vmul.f32 %v1611, %v1633
    %v2146 = vmul.f32 %v1612, %v1621
    %v2147 = vmul.f32 %v1613, %v1625
    %v2148 = vmul.f32 %v1614, %v1629
    %v2149 = vmul.f32 %v1615, %v1633
    %v2150 = vpack.c.bf16 %v1642, %v1638
    %v2151 = vpack.c.bf16 %v1643, %v1639
    %v2152 = vpack.c.bf16 %v1644, %v1640
    %v2153 = vpack.c.bf16 %v1645, %v1641
    %v2154 = vpack.c.bf16 %v1650, %v1646
    %v2155 = vpack.c.bf16 %v1651, %v1647
    %v2156 = vpack.c.bf16 %v1652, %v1648
    %v2157 = vpack.c.bf16 %v1653, %v1649
    %v2158 = vpack.c.bf16 %v1658, %v1654
    %v2159 = vpack.c.bf16 %v1659, %v1655
    %v2160 = vpack.c.bf16 %v1660, %v1656
    %v2161 = vpack.c.bf16 %v1661, %v1657
    %v2162 = vpack.c.bf16 %v1666, %v1662
    %v2163 = vpack.c.bf16 %v1667, %v1663
    %v2164 = vpack.c.bf16 %v1668, %v1664
    %v2165 = vpack.c.bf16 %v1669, %v1665
    %v2166 = vpack.c.bf16 %v1674, %v1670
    %v2167 = vpack.c.bf16 %v1675, %v1671
    %v2168 = vpack.c.bf16 %v1676, %v1672
    %v2169 = vpack.c.bf16 %v1677, %v1673
    %v2170 = vpack.c.bf16 %v1682, %v1678
    %v2171 = vpack.c.bf16 %v1683, %v1679
    %v2172 = vpack.c.bf16 %v1684, %v1680
    %v2173 = vpack.c.bf16 %v1685, %v1681
    %v2174 = vpack.c.bf16 %v1690, %v1686
    %v2175 = vpack.c.bf16 %v1691, %v1687
    %v2176 = vpack.c.bf16 %v1692, %v1688
    %v2177 = vpack.c.bf16 %v1693, %v1689
    %v2178 = vpack.c.bf16 %v1698, %v1694
    %v2179 = vpack.c.bf16 %v1699, %v1695
    %v2180 = vpack.c.bf16 %v1700, %v1696
    %v2181 = vpack.c.bf16 %v1701, %v1697
    %v2182 = vpack.c.bf16 %v1706, %v1702
    %v2183 = vpack.c.bf16 %v1707, %v1703
    %v2184 = vpack.c.bf16 %v1708, %v1704
    %v2185 = vpack.c.bf16 %v1709, %v1705
    %v2186 = vpack.c.bf16 %v1714, %v1710
    %v2187 = vpack.c.bf16 %v1715, %v1711
    %v2188 = vpack.c.bf16 %v1716, %v1712
    %v2189 = vpack.c.bf16 %v1717, %v1713
    %v2190 = vpack.c.bf16 %v1722, %v1718
    %v2191 = vpack.c.bf16 %v1723, %v1719
    %v2192 = vpack.c.bf16 %v1724, %v1720
    %v2193 = vpack.c.bf16 %v1725, %v1721
    %v2194 = vpack.c.bf16 %v1730, %v1726
    %v2195 = vpack.c.bf16 %v1731, %v1727
    %v2196 = vpack.c.bf16 %v1732, %v1728
    %v2197 = vpack.c.bf16 %v1733, %v1729
    %v2198 = vpack.c.bf16 %v1738, %v1734
    %v2199 = vpack.c.bf16 %v1739, %v1735
    %v2200 = vpack.c.bf16 %v1740, %v1736
    %v2201 = vpack.c.bf16 %v1741, %v1737
    %v2202 = vpack.c.bf16 %v1746, %v1742
    %v2203 = vpack.c.bf16 %v1747, %v1743
    %v2204 = vpack.c.bf16 %v1748, %v1744
    %v2205 = vpack.c.bf16 %v1749, %v1745
    %v2206 = vpack.c.bf16 %v1754, %v1750
    %v2207 = vpack.c.bf16 %v1755, %v1751
    %v2208 = vpack.c.bf16 %v1756, %v1752
    %v2209 = vpack.c.bf16 %v1757, %v1753
    %v2210 = vpack.c.bf16 %v1762, %v1758
    %v2211 = vpack.c.bf16 %v1763, %v1759
    %v2212 = vpack.c.bf16 %v1764, %v1760
    %v2213 = vpack.c.bf16 %v1765, %v1761
    %v2214 = vpack.c.bf16 %v1770, %v1766
    %v2215 = vpack.c.bf16 %v1771, %v1767
    %v2216 = vpack.c.bf16 %v1772, %v1768
    %v2217 = vpack.c.bf16 %v1773, %v1769
    %v2218 = vpack.c.bf16 %v1778, %v1774
    %v2219 = vpack.c.bf16 %v1779, %v1775
    %v2220 = vpack.c.bf16 %v1780, %v1776
    %v2221 = vpack.c.bf16 %v1781, %v1777
    %v2222 = vpack.c.bf16 %v1786, %v1782
    %v2223 = vpack.c.bf16 %v1787, %v1783
    %v2224 = vpack.c.bf16 %v1788, %v1784
    %v2225 = vpack.c.bf16 %v1789, %v1785
    %v2226 = vpack.c.bf16 %v1794, %v1790
    %v2227 = vpack.c.bf16 %v1795, %v1791
    %v2228 = vpack.c.bf16 %v1796, %v1792
    %v2229 = vpack.c.bf16 %v1797, %v1793
    %v2230 = vpack.c.bf16 %v1802, %v1798
    %v2231 = vpack.c.bf16 %v1803, %v1799
    %v2232 = vpack.c.bf16 %v1804, %v1800
    %v2233 = vpack.c.bf16 %v1805, %v1801
    %v2234 = vpack.c.bf16 %v1810, %v1806
    %v2235 = vpack.c.bf16 %v1811, %v1807
    %v2236 = vpack.c.bf16 %v1812, %v1808
    %v2237 = vpack.c.bf16 %v1813, %v1809
    %v2238 = vpack.c.bf16 %v1818, %v1814
    %v2239 = vpack.c.bf16 %v1819, %v1815
    %v2240 = vpack.c.bf16 %v1820, %v1816
    %v2241 = vpack.c.bf16 %v1821, %v1817
    %v2242 = vpack.c.bf16 %v1826, %v1822
    %v2243 = vpack.c.bf16 %v1827, %v1823
    %v2244 = vpack.c.bf16 %v1828, %v1824
    %v2245 = vpack.c.bf16 %v1829, %v1825
    %v2246 = vpack.c.bf16 %v1834, %v1830
    %v2247 = vpack.c.bf16 %v1835, %v1831
    %v2248 = vpack.c.bf16 %v1836, %v1832
    %v2249 = vpack.c.bf16 %v1837, %v1833
    %v2250 = vpack.c.bf16 %v1842, %v1838
    %v2251 = vpack.c.bf16 %v1843, %v1839
    %v2252 = vpack.c.bf16 %v1844, %v1840
    %v2253 = vpack.c.bf16 %v1845, %v1841
    %v2254 = vpack.c.bf16 %v1850, %v1846
    %v2255 = vpack.c.bf16 %v1851, %v1847
    %v2256 = vpack.c.bf16 %v1852, %v1848
    %v2257 = vpack.c.bf16 %v1853, %v1849
    %v2258 = vpack.c.bf16 %v1858, %v1854
    %v2259 = vpack.c.bf16 %v1859, %v1855
    %v2260 = vpack.c.bf16 %v1860, %v1856
    %v2261 = vpack.c.bf16 %v1861, %v1857
    %v2262 = vpack.c.bf16 %v1866, %v1862
    %v2263 = vpack.c.bf16 %v1867, %v1863
    %v2264 = vpack.c.bf16 %v1868, %v1864
    %v2265 = vpack.c.bf16 %v1869, %v1865
    %v2266 = vpack.c.bf16 %v1874, %v1870
    %v2267 = vpack.c.bf16 %v1875, %v1871
    %v2268 = vpack.c.bf16 %v1876, %v1872
    %v2269 = vpack.c.bf16 %v1877, %v1873
    %v2270 = vpack.c.bf16 %v1882, %v1878
    %v2271 = vpack.c.bf16 %v1883, %v1879
    %v2272 = vpack.c.bf16 %v1884, %v1880
    %v2273 = vpack.c.bf16 %v1885, %v1881
    %v2274 = vpack.c.bf16 %v1890, %v1886
    %v2275 = vpack.c.bf16 %v1891, %v1887
    %v2276 = vpack.c.bf16 %v1892, %v1888
    %v2277 = vpack.c.bf16 %v1893, %v1889
    %v2278 = vpack.c.bf16 %v1898, %v1894
    %v2279 = vpack.c.bf16 %v1899, %v1895
    %v2280 = vpack.c.bf16 %v1900, %v1896
    %v2281 = vpack.c.bf16 %v1901, %v1897
    %v2282 = vpack.c.bf16 %v1906, %v1902
    %v2283 = vpack.c.bf16 %v1907, %v1903
    %v2284 = vpack.c.bf16 %v1908, %v1904
    %v2285 = vpack.c.bf16 %v1909, %v1905
    %v2286 = vpack.c.bf16 %v1914, %v1910
    %v2287 = vpack.c.bf16 %v1915, %v1911
    %v2288 = vpack.c.bf16 %v1916, %v1912
    %v2289 = vpack.c.bf16 %v1917, %v1913
    %v2290 = vpack.c.bf16 %v1922, %v1918
    %v2291 = vpack.c.bf16 %v1923, %v1919
    %v2292 = vpack.c.bf16 %v1924, %v1920
    %v2293 = vpack.c.bf16 %v1925, %v1921
    %v2294 = vpack.c.bf16 %v1930, %v1926
    %v2295 = vpack.c.bf16 %v1931, %v1927
    %v2296 = vpack.c.bf16 %v1932, %v1928
    %v2297 = vpack.c.bf16 %v1933, %v1929
    %v2298 = vpack.c.bf16 %v1938, %v1934
    %v2299 = vpack.c.bf16 %v1939, %v1935
    %v2300 = vpack.c.bf16 %v1940, %v1936
    %v2301 = vpack.c.bf16 %v1941, %v1937
    %v2302 = vpack.c.bf16 %v1946, %v1942
    %v2303 = vpack.c.bf16 %v1947, %v1943
    %v2304 = vpack.c.bf16 %v1948, %v1944
    %v2305 = vpack.c.bf16 %v1949, %v1945
    %v2306 = vpack.c.bf16 %v1954, %v1950
    %v2307 = vpack.c.bf16 %v1955, %v1951
    %v2308 = vpack.c.bf16 %v1956, %v1952
    %v2309 = vpack.c.bf16 %v1957, %v1953
    %v2310 = vpack.c.bf16 %v1962, %v1958
    %v2311 = vpack.c.bf16 %v1963, %v1959
    %v2312 = vpack.c.bf16 %v1964, %v1960
    %v2313 = vpack.c.bf16 %v1965, %v1961
    %v2314 = vpack.c.bf16 %v1970, %v1966
    %v2315 = vpack.c.bf16 %v1971, %v1967
    %v2316 = vpack.c.bf16 %v1972, %v1968
    %v2317 = vpack.c.bf16 %v1973, %v1969
    %v2318 = vpack.c.bf16 %v1978, %v1974
    %v2319 = vpack.c.bf16 %v1979, %v1975
    %v2320 = vpack.c.bf16 %v1980, %v1976
    %v2321 = vpack.c.bf16 %v1981, %v1977
    %v2322 = vpack.c.bf16 %v1986, %v1982
    %v2323 = vpack.c.bf16 %v1987, %v1983
    %v2324 = vpack.c.bf16 %v1988, %v1984
    %v2325 = vpack.c.bf16 %v1989, %v1985
    %v2326 = vpack.c.bf16 %v1994, %v1990
    %v2327 = vpack.c.bf16 %v1995, %v1991
    %v2328 = vpack.c.bf16 %v1996, %v1992
    %v2329 = vpack.c.bf16 %v1997, %v1993
    %v2330 = vpack.c.bf16 %v2002, %v1998
    %v2331 = vpack.c.bf16 %v2003, %v1999
    %v2332 = vpack.c.bf16 %v2004, %v2000
    %v2333 = vpack.c.bf16 %v2005, %v2001
    %v2334 = vpack.c.bf16 %v2010, %v2006
    %v2335 = vpack.c.bf16 %v2011, %v2007
    %v2336 = vpack.c.bf16 %v2012, %v2008
    %v2337 = vpack.c.bf16 %v2013, %v2009
    %v2338 = vpack.c.bf16 %v2018, %v2014
    %v2339 = vpack.c.bf16 %v2019, %v2015
    %v2340 = vpack.c.bf16 %v2020, %v2016
    %v2341 = vpack.c.bf16 %v2021, %v2017
    %v2342 = vpack.c.bf16 %v2026, %v2022
    %v2343 = vpack.c.bf16 %v2027, %v2023
    %v2344 = vpack.c.bf16 %v2028, %v2024
    %v2345 = vpack.c.bf16 %v2029, %v2025
    %v2346 = vpack.c.bf16 %v2034, %v2030
    %v2347 = vpack.c.bf16 %v2035, %v2031
    %v2348 = vpack.c.bf16 %v2036, %v2032
    %v2349 = vpack.c.bf16 %v2037, %v2033
    %v2350 = vpack.c.bf16 %v2042, %v2038
    %v2351 = vpack.c.bf16 %v2043, %v2039
    %v2352 = vpack.c.bf16 %v2044, %v2040
    %v2353 = vpack.c.bf16 %v2045, %v2041
    %v2354 = vpack.c.bf16 %v2050, %v2046
    %v2355 = vpack.c.bf16 %v2051, %v2047
    %v2356 = vpack.c.bf16 %v2052, %v2048
    %v2357 = vpack.c.bf16 %v2053, %v2049
    %v2358 = vpack.c.bf16 %v2058, %v2054
    %v2359 = vpack.c.bf16 %v2059, %v2055
    %v2360 = vpack.c.bf16 %v2060, %v2056
    %v2361 = vpack.c.bf16 %v2061, %v2057
    %v2362 = vpack.c.bf16 %v2066, %v2062
    %v2363 = vpack.c.bf16 %v2067, %v2063
    %v2364 = vpack.c.bf16 %v2068, %v2064
    %v2365 = vpack.c.bf16 %v2069, %v2065
    %v2366 = vpack.c.bf16 %v2074, %v2070
    %v2367 = vpack.c.bf16 %v2075, %v2071
    %v2368 = vpack.c.bf16 %v2076, %v2072
    %v2369 = vpack.c.bf16 %v2077, %v2073
    %v2370 = vpack.c.bf16 %v2082, %v2078
    %v2371 = vpack.c.bf16 %v2083, %v2079
    %v2372 = vpack.c.bf16 %v2084, %v2080
    %v2373 = vpack.c.bf16 %v2085, %v2081
    %v2374 = vpack.c.bf16 %v2090, %v2086
    %v2375 = vpack.c.bf16 %v2091, %v2087
    %v2376 = vpack.c.bf16 %v2092, %v2088
    %v2377 = vpack.c.bf16 %v2093, %v2089
    %v2378 = vpack.c.bf16 %v2098, %v2094
    %v2379 = vpack.c.bf16 %v2099, %v2095
    %v2380 = vpack.c.bf16 %v2100, %v2096
    %v2381 = vpack.c.bf16 %v2101, %v2097
    %v2382 = vpack.c.bf16 %v2106, %v2102
    %v2383 = vpack.c.bf16 %v2107, %v2103
    %v2384 = vpack.c.bf16 %v2108, %v2104
    %v2385 = vpack.c.bf16 %v2109, %v2105
    %v2386 = vpack.c.bf16 %v2114, %v2110
    %v2387 = vpack.c.bf16 %v2115, %v2111
    %v2388 = vpack.c.bf16 %v2116, %v2112
    %v2389 = vpack.c.bf16 %v2117, %v2113
    %v2390 = vpack.c.bf16 %v2122, %v2118
    %v2391 = vpack.c.bf16 %v2123, %v2119
    %v2392 = vpack.c.bf16 %v2124, %v2120
    %v2393 = vpack.c.bf16 %v2125, %v2121
    %v2394 = vpack.c.bf16 %v2130, %v2126
    %v2395 = vpack.c.bf16 %v2131, %v2127
    %v2396 = vpack.c.bf16 %v2132, %v2128
    %v2397 = vpack.c.bf16 %v2133, %v2129
    %v2398 = vpack.c.bf16 %v2138, %v2134
    %v2399 = vpack.c.bf16 %v2139, %v2135
    %v2400 = vpack.c.bf16 %v2140, %v2136
    %v2401 = vpack.c.bf16 %v2141, %v2137
    %v2402 = vpack.c.bf16 %v2146, %v2142
    %v2403 = vpack.c.bf16 %v2147, %v2143
    %v2404 = vpack.c.bf16 %v2148, %v2144
    %v2405 = vpack.c.bf16 %v2149, %v2145
    %v2406 = vld [vmem:[#allocation12] sm:$0xff]
    %v2407 = vld [vmem:[#allocation12 + $0x8] sm:$0xff]
    %v2408 = vld [vmem:[#allocation12 + $0x10] sm:$0xff]
    %v2409 = vld [vmem:[#allocation12 + $0x18] sm:$0xff]
    %v2410 = vld [vmem:[#allocation12 + $0x20] sm:$0xff]
    %v2411 = vld [vmem:[#allocation12 + $0x28] sm:$0xff]
    %v2412 = vld [vmem:[#allocation12 + $0x30] sm:$0xff]
    %v2413 = vld [vmem:[#allocation12 + $0x38] sm:$0xff]
    %v2414 = vld [vmem:[#allocation12 + $0x40] sm:$0xff]
    %v2415 = vld [vmem:[#allocation12 + $0x48] sm:$0xff]
    %v2416 = vld [vmem:[#allocation12 + $0x50] sm:$0xff]
    %v2417 = vld [vmem:[#allocation12 + $0x58] sm:$0xff]
    %v2418 = vld [vmem:[#allocation12 + $0x60] sm:$0xff]
    %v2419 = vld [vmem:[#allocation12 + $0x68] sm:$0xff]
    %v2420 = vld [vmem:[#allocation12 + $0x70] sm:$0xff]
    %v2421 = vld [vmem:[#allocation12 + $0x78] sm:$0xff]
    %v2422 = vld [vmem:[#allocation12 + $0x80] sm:$0xff]
    %v2423 = vld [vmem:[#allocation12 + $0x88] sm:$0xff]
    %v2424 = vld [vmem:[#allocation12 + $0x90] sm:$0xff]
    %v2425 = vld [vmem:[#allocation12 + $0x98] sm:$0xff]
    %v2426 = vld [vmem:[#allocation12 + $0xa0] sm:$0xff]
    %v2427 = vld [vmem:[#allocation12 + $0xa8] sm:$0xff]
    %v2428 = vld [vmem:[#allocation12 + $0xb0] sm:$0xff]
    %v2429 = vld [vmem:[#allocation12 + $0xb8] sm:$0xff]
    %v2430 = vld [vmem:[#allocation12 + $0xc0] sm:$0xff]
    %v2431 = vld [vmem:[#allocation12 + $0xc8] sm:$0xff]
    %v2432 = vld [vmem:[#allocation12 + $0xd0] sm:$0xff]
    %v2433 = vld [vmem:[#allocation12 + $0xd8] sm:$0xff]
    %v2434 = vld [vmem:[#allocation12 + $0xe0] sm:$0xff]
    %v2435 = vld [vmem:[#allocation12 + $0xe8] sm:$0xff]
    %v2436 = vld [vmem:[#allocation12 + $0xf0] sm:$0xff]
    %v2437 = vld [vmem:[#allocation12 + $0xf8] sm:$0xff]
    %v2438 = vld [vmem:[#allocation12 + $0x100] sm:$0xff]
    %v2439 = vld [vmem:[#allocation12 + $0x108] sm:$0xff]
    %v2440 = vld [vmem:[#allocation12 + $0x110] sm:$0xff]
    %v2441 = vld [vmem:[#allocation12 + $0x118] sm:$0xff]
    %v2442 = vld [vmem:[#allocation12 + $0x120] sm:$0xff]
    %v2443 = vld [vmem:[#allocation12 + $0x128] sm:$0xff]
    %v2444 = vld [vmem:[#allocation12 + $0x130] sm:$0xff]
    %v2445 = vld [vmem:[#allocation12 + $0x138] sm:$0xff]
    %v2446 = vld [vmem:[#allocation12 + $0x140] sm:$0xff]
    %v2447 = vld [vmem:[#allocation12 + $0x148] sm:$0xff]
    %v2448 = vld [vmem:[#allocation12 + $0x150] sm:$0xff]
    %v2449 = vld [vmem:[#allocation12 + $0x158] sm:$0xff]
    %v2450 = vld [vmem:[#allocation12 + $0x160] sm:$0xff]
    %v2451 = vld [vmem:[#allocation12 + $0x168] sm:$0xff]
    %v2452 = vld [vmem:[#allocation12 + $0x170] sm:$0xff]
    %v2453 = vld [vmem:[#allocation12 + $0x178] sm:$0xff]
    %v2454 = vld [vmem:[#allocation12 + $0x180] sm:$0xff]
    %v2455 = vld [vmem:[#allocation12 + $0x188] sm:$0xff]
    %v2456 = vld [vmem:[#allocation12 + $0x190] sm:$0xff]
    %v2457 = vld [vmem:[#allocation12 + $0x198] sm:$0xff]
    %v2458 = vld [vmem:[#allocation12 + $0x1a0] sm:$0xff]
    %v2459 = vld [vmem:[#allocation12 + $0x1a8] sm:$0xff]
    %v2460 = vld [vmem:[#allocation12 + $0x1b0] sm:$0xff]
    %v2461 = vld [vmem:[#allocation12 + $0x1b8] sm:$0xff]
    %v2462 = vld [vmem:[#allocation12 + $0x1c0] sm:$0xff]
    %v2463 = vld [vmem:[#allocation12 + $0x1c8] sm:$0xff]
    %v2464 = vld [vmem:[#allocation12 + $0x1d0] sm:$0xff]
    %v2465 = vld [vmem:[#allocation12 + $0x1d8] sm:$0xff]
    %v2466 = vld [vmem:[#allocation12 + $0x1e0] sm:$0xff]
    %v2467 = vld [vmem:[#allocation12 + $0x1e8] sm:$0xff]
    %v2468 = vld [vmem:[#allocation12 + $0x1f0] sm:$0xff]
    %v2469 = vld [vmem:[#allocation12 + $0x1f8] sm:$0xff]
    %v2470 = vld [vmem:[#allocation12 + $0x200] sm:$0xff]
    %v2471 = vld [vmem:[#allocation12 + $0x208] sm:$0xff]
    %v2472 = vld [vmem:[#allocation12 + $0x210] sm:$0xff]
    %v2473 = vld [vmem:[#allocation12 + $0x218] sm:$0xff]
    %v2474 = vld [vmem:[#allocation12 + $0x220] sm:$0xff]
    %v2475 = vld [vmem:[#allocation12 + $0x228] sm:$0xff]
    %v2476 = vld [vmem:[#allocation12 + $0x230] sm:$0xff]
    %v2477 = vld [vmem:[#allocation12 + $0x238] sm:$0xff]
    %v2478 = vld [vmem:[#allocation12 + $0x240] sm:$0xff]
    %v2479 = vld [vmem:[#allocation12 + $0x248] sm:$0xff]
    %v2480 = vld [vmem:[#allocation12 + $0x250] sm:$0xff]
    %v2481 = vld [vmem:[#allocation12 + $0x258] sm:$0xff]
    %v2482 = vld [vmem:[#allocation12 + $0x260] sm:$0xff]
    %v2483 = vld [vmem:[#allocation12 + $0x268] sm:$0xff]
    %v2484 = vld [vmem:[#allocation12 + $0x270] sm:$0xff]
    %v2485 = vld [vmem:[#allocation12 + $0x278] sm:$0xff]
    %v2486 = vld [vmem:[#allocation12 + $0x280] sm:$0xff]
    %v2487 = vld [vmem:[#allocation12 + $0x288] sm:$0xff]
    %v2488 = vld [vmem:[#allocation12 + $0x290] sm:$0xff]
    %v2489 = vld [vmem:[#allocation12 + $0x298] sm:$0xff]
    %v2490 = vld [vmem:[#allocation12 + $0x2a0] sm:$0xff]
    %v2491 = vld [vmem:[#allocation12 + $0x2a8] sm:$0xff]
    %v2492 = vld [vmem:[#allocation12 + $0x2b0] sm:$0xff]
    %v2493 = vld [vmem:[#allocation12 + $0x2b8] sm:$0xff]
    %v2494 = vld [vmem:[#allocation12 + $0x2c0] sm:$0xff]
    %v2495 = vld [vmem:[#allocation12 + $0x2c8] sm:$0xff]
    %v2496 = vld [vmem:[#allocation12 + $0x2d0] sm:$0xff]
    %v2497 = vld [vmem:[#allocation12 + $0x2d8] sm:$0xff]
    %v2498 = vld [vmem:[#allocation12 + $0x2e0] sm:$0xff]
    %v2499 = vld [vmem:[#allocation12 + $0x2e8] sm:$0xff]
    %v2500 = vld [vmem:[#allocation12 + $0x2f0] sm:$0xff]
    %v2501 = vld [vmem:[#allocation12 + $0x2f8] sm:$0xff]
    %v2502 = vunpack.c.0.s8 %v2406
    %v2503 = vunpack.c.0.s8 %v2407
    %v2504 = vunpack.c.0.s8 %v2408
    %v2505 = vunpack.c.0.s8 %v2409
    %v2506 = vunpack.c.0.s8 %v2410
    %v2507 = vunpack.c.0.s8 %v2411
    %v2508 = vunpack.c.1.s8 %v2406
    %v2509 = vunpack.c.1.s8 %v2407
    %v2510 = vunpack.c.1.s8 %v2408
    %v2511 = vunpack.c.1.s8 %v2409
    %v2512 = vunpack.c.1.s8 %v2410
    %v2513 = vunpack.c.1.s8 %v2411
    %v2514 = vunpack.c.2.s8 %v2406
    %v2515 = vunpack.c.2.s8 %v2407
    %v2516 = vunpack.c.2.s8 %v2408
    %v2517 = vunpack.c.2.s8 %v2409
    %v2518 = vunpack.c.2.s8 %v2410
    %v2519 = vunpack.c.2.s8 %v2411
    %v2520 = vunpack.c.3.s8 %v2406
    %v2521 = vunpack.c.3.s8 %v2407
    %v2522 = vunpack.c.3.s8 %v2408
    %v2523 = vunpack.c.3.s8 %v2409
    %v2524 = vunpack.c.3.s8 %v2410
    %v2525 = vunpack.c.3.s8 %v2411
    %v2526 = vunpack.c.0.s8 %v2412
    %v2527 = vunpack.c.0.s8 %v2413
    %v2528 = vunpack.c.0.s8 %v2414
    %v2529 = vunpack.c.0.s8 %v2415
    %v2530 = vunpack.c.0.s8 %v2416
    %v2531 = vunpack.c.0.s8 %v2417
    %v2532 = vunpack.c.1.s8 %v2412
    %v2533 = vunpack.c.1.s8 %v2413
    %v2534 = vunpack.c.1.s8 %v2414
    %v2535 = vunpack.c.1.s8 %v2415
    %v2536 = vunpack.c.1.s8 %v2416
    %v2537 = vunpack.c.1.s8 %v2417
    %v2538 = vunpack.c.2.s8 %v2412
    %v2539 = vunpack.c.2.s8 %v2413
    %v2540 = vunpack.c.2.s8 %v2414
    %v2541 = vunpack.c.2.s8 %v2415
    %v2542 = vunpack.c.2.s8 %v2416
    %v2543 = vunpack.c.2.s8 %v2417
    %v2544 = vunpack.c.3.s8 %v2412
    %v2545 = vunpack.c.3.s8 %v2413
    %v2546 = vunpack.c.3.s8 %v2414
    %v2547 = vunpack.c.3.s8 %v2415
    %v2548 = vunpack.c.3.s8 %v2416
    %v2549 = vunpack.c.3.s8 %v2417
    %v2550 = vunpack.c.0.s8 %v2418
    %v2551 = vunpack.c.0.s8 %v2419
    %v2552 = vunpack.c.0.s8 %v2420
    %v2553 = vunpack.c.0.s8 %v2421
    %v2554 = vunpack.c.0.s8 %v2422
    %v2555 = vunpack.c.0.s8 %v2423
    %v2556 = vunpack.c.1.s8 %v2418
    %v2557 = vunpack.c.1.s8 %v2419
    %v2558 = vunpack.c.1.s8 %v2420
    %v2559 = vunpack.c.1.s8 %v2421
    %v2560 = vunpack.c.1.s8 %v2422
    %v2561 = vunpack.c.1.s8 %v2423
    %v2562 = vunpack.c.2.s8 %v2418
    %v2563 = vunpack.c.2.s8 %v2419
    %v2564 = vunpack.c.2.s8 %v2420
    %v2565 = vunpack.c.2.s8 %v2421
    %v2566 = vunpack.c.2.s8 %v2422
    %v2567 = vunpack.c.2.s8 %v2423
    %v2568 = vunpack.c.3.s8 %v2418
    %v2569 = vunpack.c.3.s8 %v2419
    %v2570 = vunpack.c.3.s8 %v2420
    %v2571 = vunpack.c.3.s8 %v2421
    %v2572 = vunpack.c.3.s8 %v2422
    %v2573 = vunpack.c.3.s8 %v2423
    %v2574 = vunpack.c.0.s8 %v2424
    %v2575 = vunpack.c.0.s8 %v2425
    %v2576 = vunpack.c.0.s8 %v2426
    %v2577 = vunpack.c.0.s8 %v2427
    %v2578 = vunpack.c.0.s8 %v2428
    %v2579 = vunpack.c.0.s8 %v2429
    %v2580 = vunpack.c.1.s8 %v2424
    %v2581 = vunpack.c.1.s8 %v2425
    %v2582 = vunpack.c.1.s8 %v2426
    %v2583 = vunpack.c.1.s8 %v2427
    %v2584 = vunpack.c.1.s8 %v2428
    %v2585 = vunpack.c.1.s8 %v2429
    %v2586 = vunpack.c.2.s8 %v2424
    %v2587 = vunpack.c.2.s8 %v2425
    %v2588 = vunpack.c.2.s8 %v2426
    %v2589 = vunpack.c.2.s8 %v2427
    %v2590 = vunpack.c.2.s8 %v2428
    %v2591 = vunpack.c.2.s8 %v2429
    %v2592 = vunpack.c.3.s8 %v2424
    %v2593 = vunpack.c.3.s8 %v2425
    %v2594 = vunpack.c.3.s8 %v2426
    %v2595 = vunpack.c.3.s8 %v2427
    %v2596 = vunpack.c.3.s8 %v2428
    %v2597 = vunpack.c.3.s8 %v2429
    %v2598 = vunpack.c.0.s8 %v2430
    %v2599 = vunpack.c.0.s8 %v2431
    %v2600 = vunpack.c.0.s8 %v2432
    %v2601 = vunpack.c.0.s8 %v2433
    %v2602 = vunpack.c.0.s8 %v2434
    %v2603 = vunpack.c.0.s8 %v2435
    %v2604 = vunpack.c.1.s8 %v2430
    %v2605 = vunpack.c.1.s8 %v2431
    %v2606 = vunpack.c.1.s8 %v2432
    %v2607 = vunpack.c.1.s8 %v2433
    %v2608 = vunpack.c.1.s8 %v2434
    %v2609 = vunpack.c.1.s8 %v2435
    %v2610 = vunpack.c.2.s8 %v2430
    %v2611 = vunpack.c.2.s8 %v2431
    %v2612 = vunpack.c.2.s8 %v2432
    %v2613 = vunpack.c.2.s8 %v2433
    %v2614 = vunpack.c.2.s8 %v2434
    %v2615 = vunpack.c.2.s8 %v2435
    %v2616 = vunpack.c.3.s8 %v2430
    %v2617 = vunpack.c.3.s8 %v2431
    %v2618 = vunpack.c.3.s8 %v2432
    %v2619 = vunpack.c.3.s8 %v2433
    %v2620 = vunpack.c.3.s8 %v2434
    %v2621 = vunpack.c.3.s8 %v2435
    %v2622 = vunpack.c.0.s8 %v2436
    %v2623 = vunpack.c.0.s8 %v2437
    %v2624 = vunpack.c.0.s8 %v2438
    %v2625 = vunpack.c.0.s8 %v2439
    %v2626 = vunpack.c.0.s8 %v2440
    %v2627 = vunpack.c.0.s8 %v2441
    %v2628 = vunpack.c.1.s8 %v2436
    %v2629 = vunpack.c.1.s8 %v2437
    %v2630 = vunpack.c.1.s8 %v2438
    %v2631 = vunpack.c.1.s8 %v2439
    %v2632 = vunpack.c.1.s8 %v2440
    %v2633 = vunpack.c.1.s8 %v2441
    %v2634 = vunpack.c.2.s8 %v2436
    %v2635 = vunpack.c.2.s8 %v2437
    %v2636 = vunpack.c.2.s8 %v2438
    %v2637 = vunpack.c.2.s8 %v2439
    %v2638 = vunpack.c.2.s8 %v2440
    %v2639 = vunpack.c.2.s8 %v2441
    %v2640 = vunpack.c.3.s8 %v2436
    %v2641 = vunpack.c.3.s8 %v2437
    %v2642 = vunpack.c.3.s8 %v2438
    %v2643 = vunpack.c.3.s8 %v2439
    %v2644 = vunpack.c.3.s8 %v2440
    %v2645 = vunpack.c.3.s8 %v2441
    %v2646 = vunpack.c.0.s8 %v2442
    %v2647 = vunpack.c.0.s8 %v2443
    %v2648 = vunpack.c.0.s8 %v2444
    %v2649 = vunpack.c.0.s8 %v2445
    %v2650 = vunpack.c.0.s8 %v2446
    %v2651 = vunpack.c.0.s8 %v2447
    %v2652 = vunpack.c.1.s8 %v2442
    %v2653 = vunpack.c.1.s8 %v2443
    %v2654 = vunpack.c.1.s8 %v2444
    %v2655 = vunpack.c.1.s8 %v2445
    %v2656 = vunpack.c.1.s8 %v2446
    %v2657 = vunpack.c.1.s8 %v2447
    %v2658 = vunpack.c.2.s8 %v2442
    %v2659 = vunpack.c.2.s8 %v2443
    %v2660 = vunpack.c.2.s8 %v2444
    %v2661 = vunpack.c.2.s8 %v2445
    %v2662 = vunpack.c.2.s8 %v2446
    %v2663 = vunpack.c.2.s8 %v2447
    %v2664 = vunpack.c.3.s8 %v2442
    %v2665 = vunpack.c.3.s8 %v2443
    %v2666 = vunpack.c.3.s8 %v2444
    %v2667 = vunpack.c.3.s8 %v2445
    %v2668 = vunpack.c.3.s8 %v2446
    %v2669 = vunpack.c.3.s8 %v2447
    %v2670 = vunpack.c.0.s8 %v2448
    %v2671 = vunpack.c.0.s8 %v2449
    %v2672 = vunpack.c.0.s8 %v2450
    %v2673 = vunpack.c.0.s8 %v2451
    %v2674 = vunpack.c.0.s8 %v2452
    %v2675 = vunpack.c.0.s8 %v2453
    %v2676 = vunpack.c.1.s8 %v2448
    %v2677 = vunpack.c.1.s8 %v2449
    %v2678 = vunpack.c.1.s8 %v2450
    %v2679 = vunpack.c.1.s8 %v2451
    %v2680 = vunpack.c.1.s8 %v2452
    %v2681 = vunpack.c.1.s8 %v2453
    %v2682 = vunpack.c.2.s8 %v2448
    %v2683 = vunpack.c.2.s8 %v2449
    %v2684 = vunpack.c.2.s8 %v2450
    %v2685 = vunpack.c.2.s8 %v2451
    %v2686 = vunpack.c.2.s8 %v2452
    %v2687 = vunpack.c.2.s8 %v2453
    %v2688 = vunpack.c.3.s8 %v2448
    %v2689 = vunpack.c.3.s8 %v2449
    %v2690 = vunpack.c.3.s8 %v2450
    %v2691 = vunpack.c.3.s8 %v2451
    %v2692 = vunpack.c.3.s8 %v2452
    %v2693 = vunpack.c.3.s8 %v2453
    %v2694 = vunpack.c.0.s8 %v2454
    %v2695 = vunpack.c.0.s8 %v2455
    %v2696 = vunpack.c.0.s8 %v2456
    %v2697 = vunpack.c.0.s8 %v2457
    %v2698 = vunpack.c.0.s8 %v2458
    %v2699 = vunpack.c.0.s8 %v2459
    %v2700 = vunpack.c.1.s8 %v2454
    %v2701 = vunpack.c.1.s8 %v2455
    %v2702 = vunpack.c.1.s8 %v2456
    %v2703 = vunpack.c.1.s8 %v2457
    %v2704 = vunpack.c.1.s8 %v2458
    %v2705 = vunpack.c.1.s8 %v2459
    %v2706 = vunpack.c.2.s8 %v2454
    %v2707 = vunpack.c.2.s8 %v2455
    %v2708 = vunpack.c.2.s8 %v2456
    %v2709 = vunpack.c.2.s8 %v2457
    %v2710 = vunpack.c.2.s8 %v2458
    %v2711 = vunpack.c.2.s8 %v2459
    %v2712 = vunpack.c.3.s8 %v2454
    %v2713 = vunpack.c.3.s8 %v2455
    %v2714 = vunpack.c.3.s8 %v2456
    %v2715 = vunpack.c.3.s8 %v2457
    %v2716 = vunpack.c.3.s8 %v2458
    %v2717 = vunpack.c.3.s8 %v2459
    %v2718 = vunpack.c.0.s8 %v2460
    %v2719 = vunpack.c.0.s8 %v2461
    %v2720 = vunpack.c.0.s8 %v2462
    %v2721 = vunpack.c.0.s8 %v2463
    %v2722 = vunpack.c.0.s8 %v2464
    %v2723 = vunpack.c.0.s8 %v2465
    %v2724 = vunpack.c.1.s8 %v2460
    %v2725 = vunpack.c.1.s8 %v2461
    %v2726 = vunpack.c.1.s8 %v2462
    %v2727 = vunpack.c.1.s8 %v2463
    %v2728 = vunpack.c.1.s8 %v2464
    %v2729 = vunpack.c.1.s8 %v2465
    %v2730 = vunpack.c.2.s8 %v2460
    %v2731 = vunpack.c.2.s8 %v2461
    %v2732 = vunpack.c.2.s8 %v2462
    %v2733 = vunpack.c.2.s8 %v2463
    %v2734 = vunpack.c.2.s8 %v2464
    %v2735 = vunpack.c.2.s8 %v2465
    %v2736 = vunpack.c.3.s8 %v2460
    %v2737 = vunpack.c.3.s8 %v2461
    %v2738 = vunpack.c.3.s8 %v2462
    %v2739 = vunpack.c.3.s8 %v2463
    %v2740 = vunpack.c.3.s8 %v2464
    %v2741 = vunpack.c.3.s8 %v2465
    %v2742 = vunpack.c.0.s8 %v2466
    %v2743 = vunpack.c.0.s8 %v2467
    %v2744 = vunpack.c.0.s8 %v2468
    %v2745 = vunpack.c.0.s8 %v2469
    %v2746 = vunpack.c.0.s8 %v2470
    %v2747 = vunpack.c.0.s8 %v2471
    %v2748 = vunpack.c.1.s8 %v2466
    %v2749 = vunpack.c.1.s8 %v2467
    %v2750 = vunpack.c.1.s8 %v2468
    %v2751 = vunpack.c.1.s8 %v2469
    %v2752 = vunpack.c.1.s8 %v2470
    %v2753 = vunpack.c.1.s8 %v2471
    %v2754 = vunpack.c.2.s8 %v2466
    %v2755 = vunpack.c.2.s8 %v2467
    %v2756 = vunpack.c.2.s8 %v2468
    %v2757 = vunpack.c.2.s8 %v2469
    %v2758 = vunpack.c.2.s8 %v2470
    %v2759 = vunpack.c.2.s8 %v2471
    %v2760 = vunpack.c.3.s8 %v2466
    %v2761 = vunpack.c.3.s8 %v2467
    %v2762 = vunpack.c.3.s8 %v2468
    %v2763 = vunpack.c.3.s8 %v2469
    %v2764 = vunpack.c.3.s8 %v2470
    %v2765 = vunpack.c.3.s8 %v2471
    %v2766 = vunpack.c.0.s8 %v2472
    %v2767 = vunpack.c.0.s8 %v2473
    %v2768 = vunpack.c.0.s8 %v2474
    %v2769 = vunpack.c.0.s8 %v2475
    %v2770 = vunpack.c.0.s8 %v2476
    %v2771 = vunpack.c.0.s8 %v2477
    %v2772 = vunpack.c.1.s8 %v2472
    %v2773 = vunpack.c.1.s8 %v2473
    %v2774 = vunpack.c.1.s8 %v2474
    %v2775 = vunpack.c.1.s8 %v2475
    %v2776 = vunpack.c.1.s8 %v2476
    %v2777 = vunpack.c.1.s8 %v2477
    %v2778 = vunpack.c.2.s8 %v2472
    %v2779 = vunpack.c.2.s8 %v2473
    %v2780 = vunpack.c.2.s8 %v2474
    %v2781 = vunpack.c.2.s8 %v2475
    %v2782 = vunpack.c.2.s8 %v2476
    %v2783 = vunpack.c.2.s8 %v2477
    %v2784 = vunpack.c.3.s8 %v2472
    %v2785 = vunpack.c.3.s8 %v2473
    %v2786 = vunpack.c.3.s8 %v2474
    %v2787 = vunpack.c.3.s8 %v2475
    %v2788 = vunpack.c.3.s8 %v2476
    %v2789 = vunpack.c.3.s8 %v2477
    %v2790 = vunpack.c.0.s8 %v2478
    %v2791 = vunpack.c.0.s8 %v2479
    %v2792 = vunpack.c.0.s8 %v2480
    %v2793 = vunpack.c.0.s8 %v2481
    %v2794 = vunpack.c.0.s8 %v2482
    %v2795 = vunpack.c.0.s8 %v2483
    %v2796 = vunpack.c.1.s8 %v2478
    %v2797 = vunpack.c.1.s8 %v2479
    %v2798 = vunpack.c.1.s8 %v2480
    %v2799 = vunpack.c.1.s8 %v2481
    %v2800 = vunpack.c.1.s8 %v2482
    %v2801 = vunpack.c.1.s8 %v2483
    %v2802 = vunpack.c.2.s8 %v2478
    %v2803 = vunpack.c.2.s8 %v2479
    %v2804 = vunpack.c.2.s8 %v2480
    %v2805 = vunpack.c.2.s8 %v2481
    %v2806 = vunpack.c.2.s8 %v2482
    %v2807 = vunpack.c.2.s8 %v2483
    %v2808 = vunpack.c.3.s8 %v2478
    %v2809 = vunpack.c.3.s8 %v2479
    %v2810 = vunpack.c.3.s8 %v2480
    %v2811 = vunpack.c.3.s8 %v2481
    %v2812 = vunpack.c.3.s8 %v2482
    %v2813 = vunpack.c.3.s8 %v2483
    %v2814 = vunpack.c.0.s8 %v2484
    %v2815 = vunpack.c.0.s8 %v2485
    %v2816 = vunpack.c.0.s8 %v2486
    %v2817 = vunpack.c.0.s8 %v2487
    %v2818 = vunpack.c.0.s8 %v2488
    %v2819 = vunpack.c.0.s8 %v2489
    %v2820 = vunpack.c.1.s8 %v2484
    %v2821 = vunpack.c.1.s8 %v2485
    %v2822 = vunpack.c.1.s8 %v2486
    %v2823 = vunpack.c.1.s8 %v2487
    %v2824 = vunpack.c.1.s8 %v2488
    %v2825 = vunpack.c.1.s8 %v2489
    %v2826 = vunpack.c.2.s8 %v2484
    %v2827 = vunpack.c.2.s8 %v2485
    %v2828 = vunpack.c.2.s8 %v2486
    %v2829 = vunpack.c.2.s8 %v2487
    %v2830 = vunpack.c.2.s8 %v2488
    %v2831 = vunpack.c.2.s8 %v2489
    %v2832 = vunpack.c.3.s8 %v2484
    %v2833 = vunpack.c.3.s8 %v2485
    %v2834 = vunpack.c.3.s8 %v2486
    %v2835 = vunpack.c.3.s8 %v2487
    %v2836 = vunpack.c.3.s8 %v2488
    %v2837 = vunpack.c.3.s8 %v2489
    %v2838 = vunpack.c.0.s8 %v2490
    %v2839 = vunpack.c.0.s8 %v2491
    %v2840 = vunpack.c.0.s8 %v2492
    %v2841 = vunpack.c.0.s8 %v2493
    %v2842 = vunpack.c.0.s8 %v2494
    %v2843 = vunpack.c.0.s8 %v2495
    %v2844 = vunpack.c.1.s8 %v2490
    %v2845 = vunpack.c.1.s8 %v2491
    %v2846 = vunpack.c.1.s8 %v2492
    %v2847 = vunpack.c.1.s8 %v2493
    %v2848 = vunpack.c.1.s8 %v2494
    %v2849 = vunpack.c.1.s8 %v2495
    %v2850 = vunpack.c.2.s8 %v2490
    %v2851 = vunpack.c.2.s8 %v2491
    %v2852 = vunpack.c.2.s8 %v2492
    %v2853 = vunpack.c.2.s8 %v2493
    %v2854 = vunpack.c.2.s8 %v2494
    %v2855 = vunpack.c.2.s8 %v2495
    %v2856 = vunpack.c.3.s8 %v2490
    %v2857 = vunpack.c.3.s8 %v2491
    %v2858 = vunpack.c.3.s8 %v2492
    %v2859 = vunpack.c.3.s8 %v2493
    %v2860 = vunpack.c.3.s8 %v2494
    %v2861 = vunpack.c.3.s8 %v2495
    %v2862 = vunpack.c.0.s8 %v2496
    %v2863 = vunpack.c.0.s8 %v2497
    %v2864 = vunpack.c.0.s8 %v2498
    %v2865 = vunpack.c.0.s8 %v2499
    %v2866 = vunpack.c.0.s8 %v2500
    %v2867 = vunpack.c.0.s8 %v2501
    %v2868 = vunpack.c.1.s8 %v2496
    %v2869 = vunpack.c.1.s8 %v2497
    %v2870 = vunpack.c.1.s8 %v2498
    %v2871 = vunpack.c.1.s8 %v2499
    %v2872 = vunpack.c.1.s8 %v2500
    %v2873 = vunpack.c.1.s8 %v2501
    %v2874 = vunpack.c.2.s8 %v2496
    %v2875 = vunpack.c.2.s8 %v2497
    %v2876 = vunpack.c.2.s8 %v2498
    %v2877 = vunpack.c.2.s8 %v2499
    %v2878 = vunpack.c.2.s8 %v2500
    %v2879 = vunpack.c.2.s8 %v2501
    %v2880 = vunpack.c.3.s8 %v2496
    %v2881 = vunpack.c.3.s8 %v2497
    %v2882 = vunpack.c.3.s8 %v2498
    %v2883 = vunpack.c.3.s8 %v2499
    %v2884 = vunpack.c.3.s8 %v2500
    %v2885 = vunpack.c.3.s8 %v2501
    %v2886 = vcvt.s32.f32 %v2502
    %v2887 = vcvt.s32.f32 %v2503
    %v2888 = vcvt.s32.f32 %v2504
    %v2889 = vcvt.s32.f32 %v2505
    %v2890 = vcvt.s32.f32 %v2506
    %v2891 = vcvt.s32.f32 %v2507
    %v2892 = vcvt.s32.f32 %v2508
    %v2893 = vcvt.s32.f32 %v2509
    %v2894 = vcvt.s32.f32 %v2510
    %v2895 = vcvt.s32.f32 %v2511
    %v2896 = vcvt.s32.f32 %v2512
    %v2897 = vcvt.s32.f32 %v2513
    %v2898 = vcvt.s32.f32 %v2514
    %v2899 = vcvt.s32.f32 %v2515
    %v2900 = vcvt.s32.f32 %v2516
    %v2901 = vcvt.s32.f32 %v2517
    %v2902 = vcvt.s32.f32 %v2518
    %v2903 = vcvt.s32.f32 %v2519
    %v2904 = vcvt.s32.f32 %v2520
    %v2905 = vcvt.s32.f32 %v2521
    %v2906 = vcvt.s32.f32 %v2522
    %v2907 = vcvt.s32.f32 %v2523
    %v2908 = vcvt.s32.f32 %v2524
    %v2909 = vcvt.s32.f32 %v2525
    %v2910 = vcvt.s32.f32 %v2526
    %v2911 = vcvt.s32.f32 %v2527
    %v2912 = vcvt.s32.f32 %v2528
    %v2913 = vcvt.s32.f32 %v2529
    %v2914 = vcvt.s32.f32 %v2530
    %v2915 = vcvt.s32.f32 %v2531
    %v2916 = vcvt.s32.f32 %v2532
    %v2917 = vcvt.s32.f32 %v2533
    %v2918 = vcvt.s32.f32 %v2534
    %v2919 = vcvt.s32.f32 %v2535
    %v2920 = vcvt.s32.f32 %v2536
    %v2921 = vcvt.s32.f32 %v2537
    %v2922 = vcvt.s32.f32 %v2538
    %v2923 = vcvt.s32.f32 %v2539
    %v2924 = vcvt.s32.f32 %v2540
    %v2925 = vcvt.s32.f32 %v2541
    %v2926 = vcvt.s32.f32 %v2542
    %v2927 = vcvt.s32.f32 %v2543
    %v2928 = vcvt.s32.f32 %v2544
    %v2929 = vcvt.s32.f32 %v2545
    %v2930 = vcvt.s32.f32 %v2546
    %v2931 = vcvt.s32.f32 %v2547
    %v2932 = vcvt.s32.f32 %v2548
    %v2933 = vcvt.s32.f32 %v2549
    %v2934 = vcvt.s32.f32 %v2550
    %v2935 = vcvt.s32.f32 %v2551
    %v2936 = vcvt.s32.f32 %v2552
    %v2937 = vcvt.s32.f32 %v2553
    %v2938 = vcvt.s32.f32 %v2554
    %v2939 = vcvt.s32.f32 %v2555
    %v2940 = vcvt.s32.f32 %v2556
    %v2941 = vcvt.s32.f32 %v2557
    %v2942 = vcvt.s32.f32 %v2558
    %v2943 = vcvt.s32.f32 %v2559
    %v2944 = vcvt.s32.f32 %v2560
    %v2945 = vcvt.s32.f32 %v2561
    %v2946 = vcvt.s32.f32 %v2562
    %v2947 = vcvt.s32.f32 %v2563
    %v2948 = vcvt.s32.f32 %v2564
    %v2949 = vcvt.s32.f32 %v2565
    %v2950 = vcvt.s32.f32 %v2566
    %v2951 = vcvt.s32.f32 %v2567
    %v2952 = vcvt.s32.f32 %v2568
    %v2953 = vcvt.s32.f32 %v2569
    %v2954 = vcvt.s32.f32 %v2570
    %v2955 = vcvt.s32.f32 %v2571
    %v2956 = vcvt.s32.f32 %v2572
    %v2957 = vcvt.s32.f32 %v2573
    %v2958 = vcvt.s32.f32 %v2574
    %v2959 = vcvt.s32.f32 %v2575
    %v2960 = vcvt.s32.f32 %v2576
    %v2961 = vcvt.s32.f32 %v2577
    %v2962 = vcvt.s32.f32 %v2578
    %v2963 = vcvt.s32.f32 %v2579
    %v2964 = vcvt.s32.f32 %v2580
    %v2965 = vcvt.s32.f32 %v2581
    %v2966 = vcvt.s32.f32 %v2582
    %v2967 = vcvt.s32.f32 %v2583
    %v2968 = vcvt.s32.f32 %v2584
    %v2969 = vcvt.s32.f32 %v2585
    %v2970 = vcvt.s32.f32 %v2586
    %v2971 = vcvt.s32.f32 %v2587
    %v2972 = vcvt.s32.f32 %v2588
    %v2973 = vcvt.s32.f32 %v2589
    %v2974 = vcvt.s32.f32 %v2590
    %v2975 = vcvt.s32.f32 %v2591
    %v2976 = vcvt.s32.f32 %v2592
    %v2977 = vcvt.s32.f32 %v2593
    %v2978 = vcvt.s32.f32 %v2594
    %v2979 = vcvt.s32.f32 %v2595
    %v2980 = vcvt.s32.f32 %v2596
    %v2981 = vcvt.s32.f32 %v2597
    %v2982 = vcvt.s32.f32 %v2598
    %v2983 = vcvt.s32.f32 %v2599
    %v2984 = vcvt.s32.f32 %v2600
    %v2985 = vcvt.s32.f32 %v2601
    %v2986 = vcvt.s32.f32 %v2602
    %v2987 = vcvt.s32.f32 %v2603
    %v2988 = vcvt.s32.f32 %v2604
    %v2989 = vcvt.s32.f32 %v2605
    %v2990 = vcvt.s32.f32 %v2606
    %v2991 = vcvt.s32.f32 %v2607
    %v2992 = vcvt.s32.f32 %v2608
    %v2993 = vcvt.s32.f32 %v2609
    %v2994 = vcvt.s32.f32 %v2610
    %v2995 = vcvt.s32.f32 %v2611
    %v2996 = vcvt.s32.f32 %v2612
    %v2997 = vcvt.s32.f32 %v2613
    %v2998 = vcvt.s32.f32 %v2614
    %v2999 = vcvt.s32.f32 %v2615
    %v3000 = vcvt.s32.f32 %v2616
    %v3001 = vcvt.s32.f32 %v2617
    %v3002 = vcvt.s32.f32 %v2618
    %v3003 = vcvt.s32.f32 %v2619
    %v3004 = vcvt.s32.f32 %v2620
    %v3005 = vcvt.s32.f32 %v2621
    %v3006 = vcvt.s32.f32 %v2622
    %v3007 = vcvt.s32.f32 %v2623
    %v3008 = vcvt.s32.f32 %v2624
    %v3009 = vcvt.s32.f32 %v2625
    %v3010 = vcvt.s32.f32 %v2626
    %v3011 = vcvt.s32.f32 %v2627
    %v3012 = vcvt.s32.f32 %v2628
    %v3013 = vcvt.s32.f32 %v2629
    %v3014 = vcvt.s32.f32 %v2630
    %v3015 = vcvt.s32.f32 %v2631
    %v3016 = vcvt.s32.f32 %v2632
    %v3017 = vcvt.s32.f32 %v2633
    %v3018 = vcvt.s32.f32 %v2634
    %v3019 = vcvt.s32.f32 %v2635
    %v3020 = vcvt.s32.f32 %v2636
    %v3021 = vcvt.s32.f32 %v2637
    %v3022 = vcvt.s32.f32 %v2638
    %v3023 = vcvt.s32.f32 %v2639
    %v3024 = vcvt.s32.f32 %v2640
    %v3025 = vcvt.s32.f32 %v2641
    %v3026 = vcvt.s32.f32 %v2642
    %v3027 = vcvt.s32.f32 %v2643
    %v3028 = vcvt.s32.f32 %v2644
    %v3029 = vcvt.s32.f32 %v2645
    %v3030 = vcvt.s32.f32 %v2646
    %v3031 = vcvt.s32.f32 %v2647
    %v3032 = vcvt.s32.f32 %v2648
    %v3033 = vcvt.s32.f32 %v2649
    %v3034 = vcvt.s32.f32 %v2650
    %v3035 = vcvt.s32.f32 %v2651
    %v3036 = vcvt.s32.f32 %v2652
    %v3037 = vcvt.s32.f32 %v2653
    %v3038 = vcvt.s32.f32 %v2654
    %v3039 = vcvt.s32.f32 %v2655
    %v3040 = vcvt.s32.f32 %v2656
    %v3041 = vcvt.s32.f32 %v2657
    %v3042 = vcvt.s32.f32 %v2658
    %v3043 = vcvt.s32.f32 %v2659
    %v3044 = vcvt.s32.f32 %v2660
    %v3045 = vcvt.s32.f32 %v2661
    %v3046 = vcvt.s32.f32 %v2662
    %v3047 = vcvt.s32.f32 %v2663
    %v3048 = vcvt.s32.f32 %v2664
    %v3049 = vcvt.s32.f32 %v2665
    %v3050 = vcvt.s32.f32 %v2666
    %v3051 = vcvt.s32.f32 %v2667
    %v3052 = vcvt.s32.f32 %v2668
    %v3053 = vcvt.s32.f32 %v2669
    %v3054 = vcvt.s32.f32 %v2670
    %v3055 = vcvt.s32.f32 %v2671
    %v3056 = vcvt.s32.f32 %v2672
    %v3057 = vcvt.s32.f32 %v2673
    %v3058 = vcvt.s32.f32 %v2674
    %v3059 = vcvt.s32.f32 %v2675
    %v3060 = vcvt.s32.f32 %v2676
    %v3061 = vcvt.s32.f32 %v2677
    %v3062 = vcvt.s32.f32 %v2678
    %v3063 = vcvt.s32.f32 %v2679
    %v3064 = vcvt.s32.f32 %v2680
    %v3065 = vcvt.s32.f32 %v2681
    %v3066 = vcvt.s32.f32 %v2682
    %v3067 = vcvt.s32.f32 %v2683
    %v3068 = vcvt.s32.f32 %v2684
    %v3069 = vcvt.s32.f32 %v2685
    %v3070 = vcvt.s32.f32 %v2686
    %v3071 = vcvt.s32.f32 %v2687
    %v3072 = vcvt.s32.f32 %v2688
    %v3073 = vcvt.s32.f32 %v2689
    %v3074 = vcvt.s32.f32 %v2690
    %v3075 = vcvt.s32.f32 %v2691
    %v3076 = vcvt.s32.f32 %v2692
    %v3077 = vcvt.s32.f32 %v2693
    %v3078 = vcvt.s32.f32 %v2694
    %v3079 = vcvt.s32.f32 %v2695
    %v3080 = vcvt.s32.f32 %v2696
    %v3081 = vcvt.s32.f32 %v2697
    %v3082 = vcvt.s32.f32 %v2698
    %v3083 = vcvt.s32.f32 %v2699
    %v3084 = vcvt.s32.f32 %v2700
    %v3085 = vcvt.s32.f32 %v2701
    %v3086 = vcvt.s32.f32 %v2702
    %v3087 = vcvt.s32.f32 %v2703
    %v3088 = vcvt.s32.f32 %v2704
    %v3089 = vcvt.s32.f32 %v2705
    %v3090 = vcvt.s32.f32 %v2706
    %v3091 = vcvt.s32.f32 %v2707
    %v3092 = vcvt.s32.f32 %v2708
    %v3093 = vcvt.s32.f32 %v2709
    %v3094 = vcvt.s32.f32 %v2710
    %v3095 = vcvt.s32.f32 %v2711
    %v3096 = vcvt.s32.f32 %v2712
    %v3097 = vcvt.s32.f32 %v2713
    %v3098 = vcvt.s32.f32 %v2714
    %v3099 = vcvt.s32.f32 %v2715
    %v3100 = vcvt.s32.f32 %v2716
    %v3101 = vcvt.s32.f32 %v2717
    %v3102 = vcvt.s32.f32 %v2718
    %v3103 = vcvt.s32.f32 %v2719
    %v3104 = vcvt.s32.f32 %v2720
    %v3105 = vcvt.s32.f32 %v2721
    %v3106 = vcvt.s32.f32 %v2722
    %v3107 = vcvt.s32.f32 %v2723
    %v3108 = vcvt.s32.f32 %v2724
    %v3109 = vcvt.s32.f32 %v2725
    %v3110 = vcvt.s32.f32 %v2726
    %v3111 = vcvt.s32.f32 %v2727
    %v3112 = vcvt.s32.f32 %v2728
    %v3113 = vcvt.s32.f32 %v2729
    %v3114 = vcvt.s32.f32 %v2730
    %v3115 = vcvt.s32.f32 %v2731
    %v3116 = vcvt.s32.f32 %v2732
    %v3117 = vcvt.s32.f32 %v2733
    %v3118 = vcvt.s32.f32 %v2734
    %v3119 = vcvt.s32.f32 %v2735
    %v3120 = vcvt.s32.f32 %v2736
    %v3121 = vcvt.s32.f32 %v2737
    %v3122 = vcvt.s32.f32 %v2738
    %v3123 = vcvt.s32.f32 %v2739
    %v3124 = vcvt.s32.f32 %v2740
    %v3125 = vcvt.s32.f32 %v2741
    %v3126 = vcvt.s32.f32 %v2742
    %v3127 = vcvt.s32.f32 %v2743
    %v3128 = vcvt.s32.f32 %v2744
    %v3129 = vcvt.s32.f32 %v2745
    %v3130 = vcvt.s32.f32 %v2746
    %v3131 = vcvt.s32.f32 %v2747
    %v3132 = vcvt.s32.f32 %v2748
    %v3133 = vcvt.s32.f32 %v2749
    %v3134 = vcvt.s32.f32 %v2750
    %v3135 = vcvt.s32.f32 %v2751
    %v3136 = vcvt.s32.f32 %v2752
    %v3137 = vcvt.s32.f32 %v2753
    %v3138 = vcvt.s32.f32 %v2754
    %v3139 = vcvt.s32.f32 %v2755
    %v3140 = vcvt.s32.f32 %v2756
    %v3141 = vcvt.s32.f32 %v2757
    %v3142 = vcvt.s32.f32 %v2758
    %v3143 = vcvt.s32.f32 %v2759
    %v3144 = vcvt.s32.f32 %v2760
    %v3145 = vcvt.s32.f32 %v2761
    %v3146 = vcvt.s32.f32 %v2762
    %v3147 = vcvt.s32.f32 %v2763
    %v3148 = vcvt.s32.f32 %v2764
    %v3149 = vcvt.s32.f32 %v2765
    %v3150 = vcvt.s32.f32 %v2766
    %v3151 = vcvt.s32.f32 %v2767
    %v3152 = vcvt.s32.f32 %v2768
    %v3153 = vcvt.s32.f32 %v2769
    %v3154 = vcvt.s32.f32 %v2770
    %v3155 = vcvt.s32.f32 %v2771
    %v3156 = vcvt.s32.f32 %v2772
    %v3157 = vcvt.s32.f32 %v2773
    %v3158 = vcvt.s32.f32 %v2774
    %v3159 = vcvt.s32.f32 %v2775
    %v3160 = vcvt.s32.f32 %v2776
    %v3161 = vcvt.s32.f32 %v2777
    %v3162 = vcvt.s32.f32 %v2778
    %v3163 = vcvt.s32.f32 %v2779
    %v3164 = vcvt.s32.f32 %v2780
    %v3165 = vcvt.s32.f32 %v2781
    %v3166 = vcvt.s32.f32 %v2782
    %v3167 = vcvt.s32.f32 %v2783
    %v3168 = vcvt.s32.f32 %v2784
    %v3169 = vcvt.s32.f32 %v2785
    %v3170 = vcvt.s32.f32 %v2786
    %v3171 = vcvt.s32.f32 %v2787
    %v3172 = vcvt.s32.f32 %v2788
    %v3173 = vcvt.s32.f32 %v2789
    %v3174 = vcvt.s32.f32 %v2790
    %v3175 = vcvt.s32.f32 %v2791
    %v3176 = vcvt.s32.f32 %v2792
    %v3177 = vcvt.s32.f32 %v2793
    %v3178 = vcvt.s32.f32 %v2794
    %v3179 = vcvt.s32.f32 %v2795
    %v3180 = vcvt.s32.f32 %v2796
    %v3181 = vcvt.s32.f32 %v2797
    %v3182 = vcvt.s32.f32 %v2798
    %v3183 = vcvt.s32.f32 %v2799
    %v3184 = vcvt.s32.f32 %v2800
    %v3185 = vcvt.s32.f32 %v2801
    %v3186 = vcvt.s32.f32 %v2802
    %v3187 = vcvt.s32.f32 %v2803
    %v3188 = vcvt.s32.f32 %v2804
    %v3189 = vcvt.s32.f32 %v2805
    %v3190 = vcvt.s32.f32 %v2806
    %v3191 = vcvt.s32.f32 %v2807
    %v3192 = vcvt.s32.f32 %v2808
    %v3193 = vcvt.s32.f32 %v2809
    %v3194 = vcvt.s32.f32 %v2810
    %v3195 = vcvt.s32.f32 %v2811
    %v3196 = vcvt.s32.f32 %v2812
    %v3197 = vcvt.s32.f32 %v2813
    %v3198 = vcvt.s32.f32 %v2814
    %v3199 = vcvt.s32.f32 %v2815
    %v3200 = vcvt.s32.f32 %v2816
    %v3201 = vcvt.s32.f32 %v2817
    %v3202 = vcvt.s32.f32 %v2818
    %v3203 = vcvt.s32.f32 %v2819
    %v3204 = vcvt.s32.f32 %v2820
    %v3205 = vcvt.s32.f32 %v2821
    %v3206 = vcvt.s32.f32 %v2822
    %v3207 = vcvt.s32.f32 %v2823
    %v3208 = vcvt.s32.f32 %v2824
    %v3209 = vcvt.s32.f32 %v2825
    %v3210 = vcvt.s32.f32 %v2826
    %v3211 = vcvt.s32.f32 %v2827
    %v3212 = vcvt.s32.f32 %v2828
    %v3213 = vcvt.s32.f32 %v2829
    %v3214 = vcvt.s32.f32 %v2830
    %v3215 = vcvt.s32.f32 %v2831
    %v3216 = vcvt.s32.f32 %v2832
    %v3217 = vcvt.s32.f32 %v2833
    %v3218 = vcvt.s32.f32 %v2834
    %v3219 = vcvt.s32.f32 %v2835
    %v3220 = vcvt.s32.f32 %v2836
    %v3221 = vcvt.s32.f32 %v2837
    %v3222 = vcvt.s32.f32 %v2838
    %v3223 = vcvt.s32.f32 %v2839
    %v3224 = vcvt.s32.f32 %v2840
    %v3225 = vcvt.s32.f32 %v2841
    %v3226 = vcvt.s32.f32 %v2842
    %v3227 = vcvt.s32.f32 %v2843
    %v3228 = vcvt.s32.f32 %v2844
    %v3229 = vcvt.s32.f32 %v2845
    %v3230 = vcvt.s32.f32 %v2846
    %v3231 = vcvt.s32.f32 %v2847
    %v3232 = vcvt.s32.f32 %v2848
    %v3233 = vcvt.s32.f32 %v2849
    %v3234 = vcvt.s32.f32 %v2850
    %v3235 = vcvt.s32.f32 %v2851
    %v3236 = vcvt.s32.f32 %v2852
    %v3237 = vcvt.s32.f32 %v2853
    %v3238 = vcvt.s32.f32 %v2854
    %v3239 = vcvt.s32.f32 %v2855
    %v3240 = vcvt.s32.f32 %v2856
    %v3241 = vcvt.s32.f32 %v2857
    %v3242 = vcvt.s32.f32 %v2858
    %v3243 = vcvt.s32.f32 %v2859
    %v3244 = vcvt.s32.f32 %v2860
    %v3245 = vcvt.s32.f32 %v2861
    %v3246 = vcvt.s32.f32 %v2862
    %v3247 = vcvt.s32.f32 %v2863
    %v3248 = vcvt.s32.f32 %v2864
    %v3249 = vcvt.s32.f32 %v2865
    %v3250 = vcvt.s32.f32 %v2866
    %v3251 = vcvt.s32.f32 %v2867
    %v3252 = vcvt.s32.f32 %v2868
    %v3253 = vcvt.s32.f32 %v2869
    %v3254 = vcvt.s32.f32 %v2870
    %v3255 = vcvt.s32.f32 %v2871
    %v3256 = vcvt.s32.f32 %v2872
    %v3257 = vcvt.s32.f32 %v2873
    %v3258 = vcvt.s32.f32 %v2874
    %v3259 = vcvt.s32.f32 %v2875
    %v3260 = vcvt.s32.f32 %v2876
    %v3261 = vcvt.s32.f32 %v2877
    %v3262 = vcvt.s32.f32 %v2878
    %v3263 = vcvt.s32.f32 %v2879
    %v3264 = vcvt.s32.f32 %v2880
    %v3265 = vcvt.s32.f32 %v2881
    %v3266 = vcvt.s32.f32 %v2882
    %v3267 = vcvt.s32.f32 %v2883
    %v3268 = vcvt.s32.f32 %v2884
    %v3269 = vcvt.s32.f32 %v2885
    %v3270 = vld [vmem:[%s7] sm:$0x3f]
    %v3272 = vlaneseq
    %v3273 = vshrl.u32 %v3272, 7
    %v3274 = vsub.s32 0, %v3273
    %v3275 = vrot.slane %v3270, %v3274
    %v3276 = vlaneseq
    %v3277 = vshrl.u32 %v3276, 7
    %v3278 = vsub.s32 1, %v3277
    %v3279 = vrot.slane %v3270, %v3278
    %v3280 = vlaneseq
    %v3281 = vshrl.u32 %v3280, 7
    %v3282 = vsub.s32 2, %v3281
    %v3283 = vrot.slane %v3270, %v3282
    %v3284 = vlaneseq
    %v3285 = vshrl.u32 %v3284, 7
    %v3286 = vsub.s32 3, %v3285
    %v3287 = vrot.slane %v3270, %v3286
    %v3288 = vlaneseq
    %v3289 = vshrl.u32 %v3288, 7
    %v3290 = vsub.s32 4, %v3289
    %v3291 = vrot.slane %v3270, %v3290
    %v3292 = vlaneseq
    %v3293 = vshrl.u32 %v3292, 7
    %v3294 = vsub.s32 5, %v3293
    %v3295 = vrot.slane %v3270, %v3294
    %v3302 = vmul.f32 %v2886, %v3275
    %v3303 = vmul.f32 %v2887, %v3279
    %v3304 = vmul.f32 %v2888, %v3283
    %v3305 = vmul.f32 %v2889, %v3287
    %v3306 = vmul.f32 %v2890, %v3291
    %v3307 = vmul.f32 %v2891, %v3295
    %v3308 = vmul.f32 %v2892, %v3275
    %v3309 = vmul.f32 %v2893, %v3279
    %v3310 = vmul.f32 %v2894, %v3283
    %v3311 = vmul.f32 %v2895, %v3287
    %v3312 = vmul.f32 %v2896, %v3291
    %v3313 = vmul.f32 %v2897, %v3295
    %v3314 = vmul.f32 %v2898, %v3275
    %v3315 = vmul.f32 %v2899, %v3279
    %v3316 = vmul.f32 %v2900, %v3283
    %v3317 = vmul.f32 %v2901, %v3287
    %v3318 = vmul.f32 %v2902, %v3291
    %v3319 = vmul.f32 %v2903, %v3295
    %v3320 = vmul.f32 %v2904, %v3275
    %v3321 = vmul.f32 %v2905, %v3279
    %v3322 = vmul.f32 %v2906, %v3283
    %v3323 = vmul.f32 %v2907, %v3287
    %v3324 = vmul.f32 %v2908, %v3291
    %v3325 = vmul.f32 %v2909, %v3295
    %v3326 = vmul.f32 %v2910, %v3275
    %v3327 = vmul.f32 %v2911, %v3279
    %v3328 = vmul.f32 %v2912, %v3283
    %v3329 = vmul.f32 %v2913, %v3287
    %v3330 = vmul.f32 %v2914, %v3291
    %v3331 = vmul.f32 %v2915, %v3295
    %v3332 = vmul.f32 %v2916, %v3275
    %v3333 = vmul.f32 %v2917, %v3279
    %v3334 = vmul.f32 %v2918, %v3283
    %v3335 = vmul.f32 %v2919, %v3287
    %v3336 = vmul.f32 %v2920, %v3291
    %v3337 = vmul.f32 %v2921, %v3295
    %v3338 = vmul.f32 %v2922, %v3275
    %v3339 = vmul.f32 %v2923, %v3279
    %v3340 = vmul.f32 %v2924, %v3283
    %v3341 = vmul.f32 %v2925, %v3287
    %v3342 = vmul.f32 %v2926, %v3291
    %v3343 = vmul.f32 %v2927, %v3295
    %v3344 = vmul.f32 %v2928, %v3275
    %v3345 = vmul.f32 %v2929, %v3279
    %v3346 = vmul.f32 %v2930, %v3283
    %v3347 = vmul.f32 %v2931, %v3287
    %v3348 = vmul.f32 %v2932, %v3291
    %v3349 = vmul.f32 %v2933, %v3295
    %v3350 = vmul.f32 %v2934, %v3275
    %v3351 = vmul.f32 %v2935, %v3279
    %v3352 = vmul.f32 %v2936, %v3283
    %v3353 = vmul.f32 %v2937, %v3287
    %v3354 = vmul.f32 %v2938, %v3291
    %v3355 = vmul.f32 %v2939, %v3295
    %v3356 = vmul.f32 %v2940, %v3275
    %v3357 = vmul.f32 %v2941, %v3279
    %v3358 = vmul.f32 %v2942, %v3283
    %v3359 = vmul.f32 %v2943, %v3287
    %v3360 = vmul.f32 %v2944, %v3291
    %v3361 = vmul.f32 %v2945, %v3295
    %v3362 = vmul.f32 %v2946, %v3275
    %v3363 = vmul.f32 %v2947, %v3279
    %v3364 = vmul.f32 %v2948, %v3283
    %v3365 = vmul.f32 %v2949, %v3287
    %v3366 = vmul.f32 %v2950, %v3291
    %v3367 = vmul.f32 %v2951, %v3295
    %v3368 = vmul.f32 %v2952, %v3275
    %v3369 = vmul.f32 %v2953, %v3279
    %v3370 = vmul.f32 %v2954, %v3283
    %v3371 = vmul.f32 %v2955, %v3287
    %v3372 = vmul.f32 %v2956, %v3291
    %v3373 = vmul.f32 %v2957, %v3295
    %v3374 = vmul.f32 %v2958, %v3275
    %v3375 = vmul.f32 %v2959, %v3279
    %v3376 = vmul.f32 %v2960, %v3283
    %v3377 = vmul.f32 %v2961, %v3287
    %v3378 = vmul.f32 %v2962, %v3291
    %v3379 = vmul.f32 %v2963, %v3295
    %v3380 = vmul.f32 %v2964, %v3275
    %v3381 = vmul.f32 %v2965, %v3279
    %v3382 = vmul.f32 %v2966, %v3283
    %v3383 = vmul.f32 %v2967, %v3287
    %v3384 = vmul.f32 %v2968, %v3291
    %v3385 = vmul.f32 %v2969, %v3295
    %v3386 = vmul.f32 %v2970, %v3275
    %v3387 = vmul.f32 %v2971, %v3279
    %v3388 = vmul.f32 %v2972, %v3283
    %v3389 = vmul.f32 %v2973, %v3287
    %v3390 = vmul.f32 %v2974, %v3291
    %v3391 = vmul.f32 %v2975, %v3295
    %v3392 = vmul.f32 %v2976, %v3275
    %v3393 = vmul.f32 %v2977, %v3279
    %v3394 = vmul.f32 %v2978, %v3283
    %v3395 = vmul.f32 %v2979, %v3287
    %v3396 = vmul.f32 %v2980, %v3291
    %v3397 = vmul.f32 %v2981, %v3295
    %v3398 = vmul.f32 %v2982, %v3275
    %v3399 = vmul.f32 %v2983, %v3279
    %v3400 = vmul.f32 %v2984, %v3283
    %v3401 = vmul.f32 %v2985, %v3287
    %v3402 = vmul.f32 %v2986, %v3291
    %v3403 = vmul.f32 %v2987, %v3295
    %v3404 = vmul.f32 %v2988, %v3275
    %v3405 = vmul.f32 %v2989, %v3279
    %v3406 = vmul.f32 %v2990, %v3283
    %v3407 = vmul.f32 %v2991, %v3287
    %v3408 = vmul.f32 %v2992, %v3291
    %v3409 = vmul.f32 %v2993, %v3295
    %v3410 = vmul.f32 %v2994, %v3275
    %v3411 = vmul.f32 %v2995, %v3279
    %v3412 = vmul.f32 %v2996, %v3283
    %v3413 = vmul.f32 %v2997, %v3287
    %v3414 = vmul.f32 %v2998, %v3291
    %v3415 = vmul.f32 %v2999, %v3295
    %v3416 = vmul.f32 %v3000, %v3275
    %v3417 = vmul.f32 %v3001, %v3279
    %v3418 = vmul.f32 %v3002, %v3283
    %v3419 = vmul.f32 %v3003, %v3287
    %v3420 = vmul.f32 %v3004, %v3291
    %v3421 = vmul.f32 %v3005, %v3295
    %v3422 = vmul.f32 %v3006, %v3275
    %v3423 = vmul.f32 %v3007, %v3279
    %v3424 = vmul.f32 %v3008, %v3283
    %v3425 = vmul.f32 %v3009, %v3287
    %v3426 = vmul.f32 %v3010, %v3291
    %v3427 = vmul.f32 %v3011, %v3295
    %v3428 = vmul.f32 %v3012, %v3275
    %v3429 = vmul.f32 %v3013, %v3279
    %v3430 = vmul.f32 %v3014, %v3283
    %v3431 = vmul.f32 %v3015, %v3287
    %v3432 = vmul.f32 %v3016, %v3291
    %v3433 = vmul.f32 %v3017, %v3295
    %v3434 = vmul.f32 %v3018, %v3275
    %v3435 = vmul.f32 %v3019, %v3279
    %v3436 = vmul.f32 %v3020, %v3283
    %v3437 = vmul.f32 %v3021, %v3287
    %v3438 = vmul.f32 %v3022, %v3291
    %v3439 = vmul.f32 %v3023, %v3295
    %v3440 = vmul.f32 %v3024, %v3275
    %v3441 = vmul.f32 %v3025, %v3279
    %v3442 = vmul.f32 %v3026, %v3283
    %v3443 = vmul.f32 %v3027, %v3287
    %v3444 = vmul.f32 %v3028, %v3291
    %v3445 = vmul.f32 %v3029, %v3295
    %v3446 = vmul.f32 %v3030, %v3275
    %v3447 = vmul.f32 %v3031, %v3279
    %v3448 = vmul.f32 %v3032, %v3283
    %v3449 = vmul.f32 %v3033, %v3287
    %v3450 = vmul.f32 %v3034, %v3291
    %v3451 = vmul.f32 %v3035, %v3295
    %v3452 = vmul.f32 %v3036, %v3275
    %v3453 = vmul.f32 %v3037, %v3279
    %v3454 = vmul.f32 %v3038, %v3283
    %v3455 = vmul.f32 %v3039, %v3287
    %v3456 = vmul.f32 %v3040, %v3291
    %v3457 = vmul.f32 %v3041, %v3295
    %v3458 = vmul.f32 %v3042, %v3275
    %v3459 = vmul.f32 %v3043, %v3279
    %v3460 = vmul.f32 %v3044, %v3283
    %v3461 = vmul.f32 %v3045, %v3287
    %v3462 = vmul.f32 %v3046, %v3291
    %v3463 = vmul.f32 %v3047, %v3295
    %v3464 = vmul.f32 %v3048, %v3275
    %v3465 = vmul.f32 %v3049, %v3279
    %v3466 = vmul.f32 %v3050, %v3283
    %v3467 = vmul.f32 %v3051, %v3287
    %v3468 = vmul.f32 %v3052, %v3291
    %v3469 = vmul.f32 %v3053, %v3295
    %v3470 = vmul.f32 %v3054, %v3275
    %v3471 = vmul.f32 %v3055, %v3279
    %v3472 = vmul.f32 %v3056, %v3283
    %v3473 = vmul.f32 %v3057, %v3287
    %v3474 = vmul.f32 %v3058, %v3291
    %v3475 = vmul.f32 %v3059, %v3295
    %v3476 = vmul.f32 %v3060, %v3275
    %v3477 = vmul.f32 %v3061, %v3279
    %v3478 = vmul.f32 %v3062, %v3283
    %v3479 = vmul.f32 %v3063, %v3287
    %v3480 = vmul.f32 %v3064, %v3291
    %v3481 = vmul.f32 %v3065, %v3295
    %v3482 = vmul.f32 %v3066, %v3275
    %v3483 = vmul.f32 %v3067, %v3279
    %v3484 = vmul.f32 %v3068, %v3283
    %v3485 = vmul.f32 %v3069, %v3287
    %v3486 = vmul.f32 %v3070, %v3291
    %v3487 = vmul.f32 %v3071, %v3295
    %v3488 = vmul.f32 %v3072, %v3275
    %v3489 = vmul.f32 %v3073, %v3279
    %v3490 = vmul.f32 %v3074, %v3283
    %v3491 = vmul.f32 %v3075, %v3287
    %v3492 = vmul.f32 %v3076, %v3291
    %v3493 = vmul.f32 %v3077, %v3295
    %v3494 = vmul.f32 %v3078, %v3275
    %v3495 = vmul.f32 %v3079, %v3279
    %v3496 = vmul.f32 %v3080, %v3283
    %v3497 = vmul.f32 %v3081, %v3287
    %v3498 = vmul.f32 %v3082, %v3291
    %v3499 = vmul.f32 %v3083, %v3295
    %v3500 = vmul.f32 %v3084, %v3275
    %v3501 = vmul.f32 %v3085, %v3279
    %v3502 = vmul.f32 %v3086, %v3283
    %v3503 = vmul.f32 %v3087, %v3287
    %v3504 = vmul.f32 %v3088, %v3291
    %v3505 = vmul.f32 %v3089, %v3295
    %v3506 = vmul.f32 %v3090, %v3275
    %v3507 = vmul.f32 %v3091, %v3279
    %v3508 = vmul.f32 %v3092, %v3283
    %v3509 = vmul.f32 %v3093, %v3287
    %v3510 = vmul.f32 %v3094, %v3291
    %v3511 = vmul.f32 %v3095, %v3295
    %v3512 = vmul.f32 %v3096, %v3275
    %v3513 = vmul.f32 %v3097, %v3279
    %v3514 = vmul.f32 %v3098, %v3283
    %v3515 = vmul.f32 %v3099, %v3287
    %v3516 = vmul.f32 %v3100, %v3291
    %v3517 = vmul.f32 %v3101, %v3295
    %v3518 = vmul.f32 %v3102, %v3275
    %v3519 = vmul.f32 %v3103, %v3279
    %v3520 = vmul.f32 %v3104, %v3283
    %v3521 = vmul.f32 %v3105, %v3287
    %v3522 = vmul.f32 %v3106, %v3291
    %v3523 = vmul.f32 %v3107, %v3295
    %v3524 = vmul.f32 %v3108, %v3275
    %v3525 = vmul.f32 %v3109, %v3279
    %v3526 = vmul.f32 %v3110, %v3283
    %v3527 = vmul.f32 %v3111, %v3287
    %v3528 = vmul.f32 %v3112, %v3291
    %v3529 = vmul.f32 %v3113, %v3295
    %v3530 = vmul.f32 %v3114, %v3275
    %v3531 = vmul.f32 %v3115, %v3279
    %v3532 = vmul.f32 %v3116, %v3283
    %v3533 = vmul.f32 %v3117, %v3287
    %v3534 = vmul.f32 %v3118, %v3291
    %v3535 = vmul.f32 %v3119, %v3295
    %v3536 = vmul.f32 %v3120, %v3275
    %v3537 = vmul.f32 %v3121, %v3279
    %v3538 = vmul.f32 %v3122, %v3283
    %v3539 = vmul.f32 %v3123, %v3287
    %v3540 = vmul.f32 %v3124, %v3291
    %v3541 = vmul.f32 %v3125, %v3295
    %v3542 = vmul.f32 %v3126, %v3275
    %v3543 = vmul.f32 %v3127, %v3279
    %v3544 = vmul.f32 %v3128, %v3283
    %v3545 = vmul.f32 %v3129, %v3287
    %v3546 = vmul.f32 %v3130, %v3291
    %v3547 = vmul.f32 %v3131, %v3295
    %v3548 = vmul.f32 %v3132, %v3275
    %v3549 = vmul.f32 %v3133, %v3279
    %v3550 = vmul.f32 %v3134, %v3283
    %v3551 = vmul.f32 %v3135, %v3287
    %v3552 = vmul.f32 %v3136, %v3291
    %v3553 = vmul.f32 %v3137, %v3295
    %v3554 = vmul.f32 %v3138, %v3275
    %v3555 = vmul.f32 %v3139, %v3279
    %v3556 = vmul.f32 %v3140, %v3283
    %v3557 = vmul.f32 %v3141, %v3287
    %v3558 = vmul.f32 %v3142, %v3291
    %v3559 = vmul.f32 %v3143, %v3295
    %v3560 = vmul.f32 %v3144, %v3275
    %v3561 = vmul.f32 %v3145, %v3279
    %v3562 = vmul.f32 %v3146, %v3283
    %v3563 = vmul.f32 %v3147, %v3287
    %v3564 = vmul.f32 %v3148, %v3291
    %v3565 = vmul.f32 %v3149, %v3295
    %v3566 = vmul.f32 %v3150, %v3275
    %v3567 = vmul.f32 %v3151, %v3279
    %v3568 = vmul.f32 %v3152, %v3283
    %v3569 = vmul.f32 %v3153, %v3287
    %v3570 = vmul.f32 %v3154, %v3291
    %v3571 = vmul.f32 %v3155, %v3295
    %v3572 = vmul.f32 %v3156, %v3275
    %v3573 = vmul.f32 %v3157, %v3279
    %v3574 = vmul.f32 %v3158, %v3283
    %v3575 = vmul.f32 %v3159, %v3287
    %v3576 = vmul.f32 %v3160, %v3291
    %v3577 = vmul.f32 %v3161, %v3295
    %v3578 = vmul.f32 %v3162, %v3275
    %v3579 = vmul.f32 %v3163, %v3279
    %v3580 = vmul.f32 %v3164, %v3283
    %v3581 = vmul.f32 %v3165, %v3287
    %v3582 = vmul.f32 %v3166, %v3291
    %v3583 = vmul.f32 %v3167, %v3295
    %v3584 = vmul.f32 %v3168, %v3275
    %v3585 = vmul.f32 %v3169, %v3279
    %v3586 = vmul.f32 %v3170, %v3283
    %v3587 = vmul.f32 %v3171, %v3287
    %v3588 = vmul.f32 %v3172, %v3291
    %v3589 = vmul.f32 %v3173, %v3295
    %v3590 = vmul.f32 %v3174, %v3275
    %v3591 = vmul.f32 %v3175, %v3279
    %v3592 = vmul.f32 %v3176, %v3283
    %v3593 = vmul.f32 %v3177, %v3287
    %v3594 = vmul.f32 %v3178, %v3291
    %v3595 = vmul.f32 %v3179, %v3295
    %v3596 = vmul.f32 %v3180, %v3275
    %v3597 = vmul.f32 %v3181, %v3279
    %v3598 = vmul.f32 %v3182, %v3283
    %v3599 = vmul.f32 %v3183, %v3287
    %v3600 = vmul.f32 %v3184, %v3291
    %v3601 = vmul.f32 %v3185, %v3295
    %v3602 = vmul.f32 %v3186, %v3275
    %v3603 = vmul.f32 %v3187, %v3279
    %v3604 = vmul.f32 %v3188, %v3283
    %v3605 = vmul.f32 %v3189, %v3287
    %v3606 = vmul.f32 %v3190, %v3291
    %v3607 = vmul.f32 %v3191, %v3295
    %v3608 = vmul.f32 %v3192, %v3275
    %v3609 = vmul.f32 %v3193, %v3279
    %v3610 = vmul.f32 %v3194, %v3283
    %v3611 = vmul.f32 %v3195, %v3287
    %v3612 = vmul.f32 %v3196, %v3291
    %v3613 = vmul.f32 %v3197, %v3295
    %v3614 = vmul.f32 %v3198, %v3275
    %v3615 = vmul.f32 %v3199, %v3279
    %v3616 = vmul.f32 %v3200, %v3283
    %v3617 = vmul.f32 %v3201, %v3287
    %v3618 = vmul.f32 %v3202, %v3291
    %v3619 = vmul.f32 %v3203, %v3295
    %v3620 = vmul.f32 %v3204, %v3275
    %v3621 = vmul.f32 %v3205, %v3279
    %v3622 = vmul.f32 %v3206, %v3283
    %v3623 = vmul.f32 %v3207, %v3287
    %v3624 = vmul.f32 %v3208, %v3291
    %v3625 = vmul.f32 %v3209, %v3295
    %v3626 = vmul.f32 %v3210, %v3275
    %v3627 = vmul.f32 %v3211, %v3279
    %v3628 = vmul.f32 %v3212, %v3283
    %v3629 = vmul.f32 %v3213, %v3287
    %v3630 = vmul.f32 %v3214, %v3291
    %v3631 = vmul.f32 %v3215, %v3295
    %v3632 = vmul.f32 %v3216, %v3275
    %v3633 = vmul.f32 %v3217, %v3279
    %v3634 = vmul.f32 %v3218, %v3283
    %v3635 = vmul.f32 %v3219, %v3287
    %v3636 = vmul.f32 %v3220, %v3291
    %v3637 = vmul.f32 %v3221, %v3295
    %v3638 = vmul.f32 %v3222, %v3275
    %v3639 = vmul.f32 %v3223, %v3279
    %v3640 = vmul.f32 %v3224, %v3283
    %v3641 = vmul.f32 %v3225, %v3287
    %v3642 = vmul.f32 %v3226, %v3291
    %v3643 = vmul.f32 %v3227, %v3295
    %v3644 = vmul.f32 %v3228, %v3275
    %v3645 = vmul.f32 %v3229, %v3279
    %v3646 = vmul.f32 %v3230, %v3283
    %v3647 = vmul.f32 %v3231, %v3287
    %v3648 = vmul.f32 %v3232, %v3291
    %v3649 = vmul.f32 %v3233, %v3295
    %v3650 = vmul.f32 %v3234, %v3275
    %v3651 = vmul.f32 %v3235, %v3279
    %v3652 = vmul.f32 %v3236, %v3283
    %v3653 = vmul.f32 %v3237, %v3287
    %v3654 = vmul.f32 %v3238, %v3291
    %v3655 = vmul.f32 %v3239, %v3295
    %v3656 = vmul.f32 %v3240, %v3275
    %v3657 = vmul.f32 %v3241, %v3279
    %v3658 = vmul.f32 %v3242, %v3283
    %v3659 = vmul.f32 %v3243, %v3287
    %v3660 = vmul.f32 %v3244, %v3291
    %v3661 = vmul.f32 %v3245, %v3295
    %v3662 = vmul.f32 %v3246, %v3275
    %v3663 = vmul.f32 %v3247, %v3279
    %v3664 = vmul.f32 %v3248, %v3283
    %v3665 = vmul.f32 %v3249, %v3287
    %v3666 = vmul.f32 %v3250, %v3291
    %v3667 = vmul.f32 %v3251, %v3295
    %v3668 = vmul.f32 %v3252, %v3275
    %v3669 = vmul.f32 %v3253, %v3279
    %v3670 = vmul.f32 %v3254, %v3283
    %v3671 = vmul.f32 %v3255, %v3287
    %v3672 = vmul.f32 %v3256, %v3291
    %v3673 = vmul.f32 %v3257, %v3295
    %v3674 = vmul.f32 %v3258, %v3275
    %v3675 = vmul.f32 %v3259, %v3279
    %v3676 = vmul.f32 %v3260, %v3283
    %v3677 = vmul.f32 %v3261, %v3287
    %v3678 = vmul.f32 %v3262, %v3291
    %v3679 = vmul.f32 %v3263, %v3295
    %v3680 = vmul.f32 %v3264, %v3275
    %v3681 = vmul.f32 %v3265, %v3279
    %v3682 = vmul.f32 %v3266, %v3283
    %v3683 = vmul.f32 %v3267, %v3287
    %v3684 = vmul.f32 %v3268, %v3291
    %v3685 = vmul.f32 %v3269, %v3295
    %v3686 = vpack.c.bf16 %v3308, %v3302
    %v3687 = vpack.c.bf16 %v3309, %v3303
    %v3688 = vpack.c.bf16 %v3310, %v3304
    %v3689 = vpack.c.bf16 %v3311, %v3305
    %v3690 = vpack.c.bf16 %v3312, %v3306
    %v3691 = vpack.c.bf16 %v3313, %v3307
    %v3692 = vpack.c.bf16 %v3320, %v3314
    %v3693 = vpack.c.bf16 %v3321, %v3315
    %v3694 = vpack.c.bf16 %v3322, %v3316
    %v3695 = vpack.c.bf16 %v3323, %v3317
    %v3696 = vpack.c.bf16 %v3324, %v3318
    %v3697 = vpack.c.bf16 %v3325, %v3319
    %v3698 = vpack.c.bf16 %v3332, %v3326
    %v3699 = vpack.c.bf16 %v3333, %v3327
    %v3700 = vpack.c.bf16 %v3334, %v3328
    %v3701 = vpack.c.bf16 %v3335, %v3329
    %v3702 = vpack.c.bf16 %v3336, %v3330
    %v3703 = vpack.c.bf16 %v3337, %v3331
    %v3704 = vpack.c.bf16 %v3344, %v3338
    %v3705 = vpack.c.bf16 %v3345, %v3339
    %v3706 = vpack.c.bf16 %v3346, %v3340
    %v3707 = vpack.c.bf16 %v3347, %v3341
    %v3708 = vpack.c.bf16 %v3348, %v3342
    %v3709 = vpack.c.bf16 %v3349, %v3343
    %v3710 = vpack.c.bf16 %v3356, %v3350
    %v3711 = vpack.c.bf16 %v3357, %v3351
    %v3712 = vpack.c.bf16 %v3358, %v3352
    %v3713 = vpack.c.bf16 %v3359, %v3353
    %v3714 = vpack.c.bf16 %v3360, %v3354
    %v3715 = vpack.c.bf16 %v3361, %v3355
    %v3716 = vpack.c.bf16 %v3368, %v3362
    %v3717 = vpack.c.bf16 %v3369, %v3363
    %v3718 = vpack.c.bf16 %v3370, %v3364
    %v3719 = vpack.c.bf16 %v3371, %v3365
    %v3720 = vpack.c.bf16 %v3372, %v3366
    %v3721 = vpack.c.bf16 %v3373, %v3367
    %v3722 = vpack.c.bf16 %v3380, %v3374
    %v3723 = vpack.c.bf16 %v3381, %v3375
    %v3724 = vpack.c.bf16 %v3382, %v3376
    %v3725 = vpack.c.bf16 %v3383, %v3377
    %v3726 = vpack.c.bf16 %v3384, %v3378
    %v3727 = vpack.c.bf16 %v3385, %v3379
    %v3728 = vpack.c.bf16 %v3392, %v3386
    %v3729 = vpack.c.bf16 %v3393, %v3387
    %v3730 = vpack.c.bf16 %v3394, %v3388
    %v3731 = vpack.c.bf16 %v3395, %v3389
    %v3732 = vpack.c.bf16 %v3396, %v3390
    %v3733 = vpack.c.bf16 %v3397, %v3391
    %v3734 = vpack.c.bf16 %v3404, %v3398
    %v3735 = vpack.c.bf16 %v3405, %v3399
    %v3736 = vpack.c.bf16 %v3406, %v3400
    %v3737 = vpack.c.bf16 %v3407, %v3401
    %v3738 = vpack.c.bf16 %v3408, %v3402
    %v3739 = vpack.c.bf16 %v3409, %v3403
    %v3740 = vpack.c.bf16 %v3416, %v3410
    %v3741 = vpack.c.bf16 %v3417, %v3411
    %v3742 = vpack.c.bf16 %v3418, %v3412
    %v3743 = vpack.c.bf16 %v3419, %v3413
    %v3744 = vpack.c.bf16 %v3420, %v3414
    %v3745 = vpack.c.bf16 %v3421, %v3415
    %v3746 = vpack.c.bf16 %v3428, %v3422
    %v3747 = vpack.c.bf16 %v3429, %v3423
    %v3748 = vpack.c.bf16 %v3430, %v3424
    %v3749 = vpack.c.bf16 %v3431, %v3425
    %v3750 = vpack.c.bf16 %v3432, %v3426
    %v3751 = vpack.c.bf16 %v3433, %v3427
    %v3752 = vpack.c.bf16 %v3440, %v3434
    %v3753 = vpack.c.bf16 %v3441, %v3435
    %v3754 = vpack.c.bf16 %v3442, %v3436
    %v3755 = vpack.c.bf16 %v3443, %v3437
    %v3756 = vpack.c.bf16 %v3444, %v3438
    %v3757 = vpack.c.bf16 %v3445, %v3439
    %v3758 = vpack.c.bf16 %v3452, %v3446
    %v3759 = vpack.c.bf16 %v3453, %v3447
    %v3760 = vpack.c.bf16 %v3454, %v3448
    %v3761 = vpack.c.bf16 %v3455, %v3449
    %v3762 = vpack.c.bf16 %v3456, %v3450
    %v3763 = vpack.c.bf16 %v3457, %v3451
    %v3764 = vpack.c.bf16 %v3464, %v3458
    %v3765 = vpack.c.bf16 %v3465, %v3459
    %v3766 = vpack.c.bf16 %v3466, %v3460
    %v3767 = vpack.c.bf16 %v3467, %v3461
    %v3768 = vpack.c.bf16 %v3468, %v3462
    %v3769 = vpack.c.bf16 %v3469, %v3463
    %v3770 = vpack.c.bf16 %v3476, %v3470
    %v3771 = vpack.c.bf16 %v3477, %v3471
    %v3772 = vpack.c.bf16 %v3478, %v3472
    %v3773 = vpack.c.bf16 %v3479, %v3473
    %v3774 = vpack.c.bf16 %v3480, %v3474
    %v3775 = vpack.c.bf16 %v3481, %v3475
    %v3776 = vpack.c.bf16 %v3488, %v3482
    %v3777 = vpack.c.bf16 %v3489, %v3483
    %v3778 = vpack.c.bf16 %v3490, %v3484
    %v3779 = vpack.c.bf16 %v3491, %v3485
    %v3780 = vpack.c.bf16 %v3492, %v3486
    %v3781 = vpack.c.bf16 %v3493, %v3487
    %v3782 = vpack.c.bf16 %v3500, %v3494
    %v3783 = vpack.c.bf16 %v3501, %v3495
    %v3784 = vpack.c.bf16 %v3502, %v3496
    %v3785 = vpack.c.bf16 %v3503, %v3497
    %v3786 = vpack.c.bf16 %v3504, %v3498
    %v3787 = vpack.c.bf16 %v3505, %v3499
    %v3788 = vpack.c.bf16 %v3512, %v3506
    %v3789 = vpack.c.bf16 %v3513, %v3507
    %v3790 = vpack.c.bf16 %v3514, %v3508
    %v3791 = vpack.c.bf16 %v3515, %v3509
    %v3792 = vpack.c.bf16 %v3516, %v3510
    %v3793 = vpack.c.bf16 %v3517, %v3511
    %v3794 = vpack.c.bf16 %v3524, %v3518
    %v3795 = vpack.c.bf16 %v3525, %v3519
    %v3796 = vpack.c.bf16 %v3526, %v3520
    %v3797 = vpack.c.bf16 %v3527, %v3521
    %v3798 = vpack.c.bf16 %v3528, %v3522
    %v3799 = vpack.c.bf16 %v3529, %v3523
    %v3800 = vpack.c.bf16 %v3536, %v3530
    %v3801 = vpack.c.bf16 %v3537, %v3531
    %v3802 = vpack.c.bf16 %v3538, %v3532
    %v3803 = vpack.c.bf16 %v3539, %v3533
    %v3804 = vpack.c.bf16 %v3540, %v3534
    %v3805 = vpack.c.bf16 %v3541, %v3535
    %v3806 = vpack.c.bf16 %v3548, %v3542
    %v3807 = vpack.c.bf16 %v3549, %v3543
    %v3808 = vpack.c.bf16 %v3550, %v3544
    %v3809 = vpack.c.bf16 %v3551, %v3545
    %v3810 = vpack.c.bf16 %v3552, %v3546
    %v3811 = vpack.c.bf16 %v3553, %v3547
    %v3812 = vpack.c.bf16 %v3560, %v3554
    %v3813 = vpack.c.bf16 %v3561, %v3555
    %v3814 = vpack.c.bf16 %v3562, %v3556
    %v3815 = vpack.c.bf16 %v3563, %v3557
    %v3816 = vpack.c.bf16 %v3564, %v3558
    %v3817 = vpack.c.bf16 %v3565, %v3559
    %v3818 = vpack.c.bf16 %v3572, %v3566
    %v3819 = vpack.c.bf16 %v3573, %v3567
    %v3820 = vpack.c.bf16 %v3574, %v3568
    %v3821 = vpack.c.bf16 %v3575, %v3569
    %v3822 = vpack.c.bf16 %v3576, %v3570
    %v3823 = vpack.c.bf16 %v3577, %v3571
    %v3824 = vpack.c.bf16 %v3584, %v3578
    %v3825 = vpack.c.bf16 %v3585, %v3579
    %v3826 = vpack.c.bf16 %v3586, %v3580
    %v3827 = vpack.c.bf16 %v3587, %v3581
    %v3828 = vpack.c.bf16 %v3588, %v3582
    %v3829 = vpack.c.bf16 %v3589, %v3583
    %v3830 = vpack.c.bf16 %v3596, %v3590
    %v3831 = vpack.c.bf16 %v3597, %v3591
    %v3832 = vpack.c.bf16 %v3598, %v3592
    %v3833 = vpack.c.bf16 %v3599, %v3593
    %v3834 = vpack.c.bf16 %v3600, %v3594
    %v3835 = vpack.c.bf16 %v3601, %v3595
    %v3836 = vpack.c.bf16 %v3608, %v3602
    %v3837 = vpack.c.bf16 %v3609, %v3603
    %v3838 = vpack.c.bf16 %v3610, %v3604
    %v3839 = vpack.c.bf16 %v3611, %v3605
    %v3840 = vpack.c.bf16 %v3612, %v3606
    %v3841 = vpack.c.bf16 %v3613, %v3607
    %v3842 = vpack.c.bf16 %v3620, %v3614
    %v3843 = vpack.c.bf16 %v3621, %v3615
    %v3844 = vpack.c.bf16 %v3622, %v3616
    %v3845 = vpack.c.bf16 %v3623, %v3617
    %v3846 = vpack.c.bf16 %v3624, %v3618
    %v3847 = vpack.c.bf16 %v3625, %v3619
    %v3848 = vpack.c.bf16 %v3632, %v3626
    %v3849 = vpack.c.bf16 %v3633, %v3627
    %v3850 = vpack.c.bf16 %v3634, %v3628
    %v3851 = vpack.c.bf16 %v3635, %v3629
    %v3852 = vpack.c.bf16 %v3636, %v3630
    %v3853 = vpack.c.bf16 %v3637, %v3631
    %v3854 = vpack.c.bf16 %v3644, %v3638
    %v3855 = vpack.c.bf16 %v3645, %v3639
    %v3856 = vpack.c.bf16 %v3646, %v3640
    %v3857 = vpack.c.bf16 %v3647, %v3641
    %v3858 = vpack.c.bf16 %v3648, %v3642
    %v3859 = vpack.c.bf16 %v3649, %v3643
    %v3860 = vpack.c.bf16 %v3656, %v3650
    %v3861 = vpack.c.bf16 %v3657, %v3651
    %v3862 = vpack.c.bf16 %v3658, %v3652
    %v3863 = vpack.c.bf16 %v3659, %v3653
    %v3864 = vpack.c.bf16 %v3660, %v3654
    %v3865 = vpack.c.bf16 %v3661, %v3655
    %v3866 = vpack.c.bf16 %v3668, %v3662
    %v3867 = vpack.c.bf16 %v3669, %v3663
    %v3868 = vpack.c.bf16 %v3670, %v3664
    %v3869 = vpack.c.bf16 %v3671, %v3665
    %v3870 = vpack.c.bf16 %v3672, %v3666
    %v3871 = vpack.c.bf16 %v3673, %v3667
    %v3872 = vpack.c.bf16 %v3680, %v3674
    %v3873 = vpack.c.bf16 %v3681, %v3675
    %v3874 = vpack.c.bf16 %v3682, %v3676
    %v3875 = vpack.c.bf16 %v3683, %v3677
    %v3876 = vpack.c.bf16 %v3684, %v3678
    %v3877 = vpack.c.bf16 %v3685, %v3679
    %v3878 = vld [vmem:[#allocation10] sm:$0xf]
    %v3880 = vlaneseq
    %v3881 = vshrl.u32 %v3880, 7
    %v3882 = vsub.s32 0, %v3881
    %v3883 = vrot.slane %v3878, %v3882
    %v3884 = vlaneseq
    %v3885 = vshrl.u32 %v3884, 7
    %v3886 = vsub.s32 1, %v3885
    %v3887 = vrot.slane %v3878, %v3886
    %v3888 = vlaneseq
    %v3889 = vshrl.u32 %v3888, 7
    %v3890 = vsub.s32 2, %v3889
    %v3891 = vrot.slane %v3878, %v3890
    %v3892 = vlaneseq
    %v3893 = vshrl.u32 %v3892, 7
    %v3894 = vsub.s32 3, %v3893
    %v3895 = vrot.slane %v3878, %v3894
    %3900 = vmatprep.subr.bf16.mxu0 %v2179
    %3901 = vmatpush1.bf16.msra.mxu0 %v2178
    %3902 = vmatprep.subr.bf16.mxu0 %v2175
    %3903 = vmatpush1.bf16.msra.mxu0 %v2174
    %3904 = vmatprep.subr.bf16.mxu0 %v2171
    %3905 = vmatpush1.bf16.msra.mxu0 %v2170
    %3906 = vmatprep.subr.bf16.mxu0 %v2167
    %3907 = vmatpush1.bf16.msra.mxu0 %v2166
    %3908 = vmatprep.subr.bf16.mxu0 %v2163
    %3909 = vmatpush1.bf16.msra.mxu0 %v2162
    %3910 = vmatprep.subr.bf16.mxu0 %v2159
    %3911 = vmatpush1.bf16.msra.mxu0 %v2158
    %3912 = vmatprep.subr.bf16.mxu0 %v2155
    %3913 = vmatpush1.bf16.msra.mxu0 %v2154
    %3914 = vmatprep.subr.bf16.mxu0 %v2151
    %3915 = vmatpush1.bf16.msra.mxu0 %v2150
    %3916 = vmatprep.subr.bf16.mxu0 %v2211
    %3917 = vmatpush2.bf16.msra.mxu0 %v2210
    %3918 = vmatprep.subr.bf16.mxu0 %v2207
    %3919 = vmatpush2.bf16.msra.mxu0 %v2206
    %3920 = vmatprep.subr.bf16.mxu0 %v2203
    %3921 = vmatpush2.bf16.msra.mxu0 %v2202
    %3922 = vmatprep.subr.bf16.mxu0 %v2199
    %3923 = vmatpush2.bf16.msra.mxu0 %v2198
    %3924 = vmatprep.subr.bf16.mxu0 %v2195
    %3925 = vmatpush2.bf16.msra.mxu0 %v2194
    %3926 = vmatprep.subr.bf16.mxu0 %v2191
    %3927 = vmatpush2.bf16.msra.mxu0 %v2190
    %3928 = vmatprep.subr.bf16.mxu0 %v2187
    %3929 = vmatpush2.bf16.msra.mxu0 %v2186
    %3930 = vmatprep.subr.bf16.mxu0 %v2183
    %3931 = vmatpush2.bf16.msra.mxu0 %v2182
    %3932 = vmatprep.mubr.bf16.mxu0 %v457
    %3933 = vmatmul.mubr.bf16.gmra.mxu0 %v456
    %v3934 = vpop.f32.mrf.mxu0
    %v3935 = vadd.f32 %v3883, %v3934
    %v3936 = vpop.f32.mrf.mxu0
    %v3937 = vadd.f32 %v3887, %v3936
    %v3938 = vpop.f32.mrf.mxu0
    %v3939 = vpop.f32.mrf.mxu0
    %3940 = vdwg.mxu0
    %3941 = vmatprep.subr.bf16.mxu0 %v2243
    %3942 = vmatpush1.bf16.msra.mxu0 %v2242
    %3943 = vmatprep.subr.bf16.mxu0 %v2239
    %3944 = vmatpush1.bf16.msra.mxu0 %v2238
    %3945 = vmatprep.subr.bf16.mxu0 %v2235
    %3946 = vmatpush1.bf16.msra.mxu0 %v2234
    %3947 = vmatprep.subr.bf16.mxu0 %v2231
    %3948 = vmatpush1.bf16.msra.mxu0 %v2230
    %3949 = vmatprep.subr.bf16.mxu0 %v2227
    %3950 = vmatpush1.bf16.msra.mxu0 %v2226
    %3951 = vmatprep.subr.bf16.mxu0 %v2223
    %3952 = vmatpush1.bf16.msra.mxu0 %v2222
    %3953 = vmatprep.subr.bf16.mxu0 %v2219
    %3954 = vmatpush1.bf16.msra.mxu0 %v2218
    %3955 = vmatprep.subr.bf16.mxu0 %v2215
    %3956 = vmatpush1.bf16.msra.mxu0 %v2214
    %3957 = vmatprep.subr.bf16.mxu0 %v2275
    %3958 = vmatpush2.bf16.msra.mxu0 %v2274
    %3959 = vmatprep.subr.bf16.mxu0 %v2271
    %3960 = vmatpush2.bf16.msra.mxu0 %v2270
    %3961 = vmatprep.subr.bf16.mxu0 %v2267
    %3962 = vmatpush2.bf16.msra.mxu0 %v2266
    %3963 = vmatprep.subr.bf16.mxu0 %v2263
    %3964 = vmatpush2.bf16.msra.mxu0 %v2262
    %3965 = vmatprep.subr.bf16.mxu0 %v2259
    %3966 = vmatpush2.bf16.msra.mxu0 %v2258
    %3967 = vmatprep.subr.bf16.mxu0 %v2255
    %3968 = vmatpush2.bf16.msra.mxu0 %v2254
    %3969 = vmatprep.subr.bf16.mxu0 %v2251
    %3970 = vmatpush2.bf16.msra.mxu0 %v2250
    %3971 = vmatprep.subr.bf16.mxu0 %v2247
    %3972 = vmatpush2.bf16.msra.mxu0 %v2246
    %3973 = vmatprep.mubr.bf16.mxu0 %v459
    %3974 = vmatmul.mubr.bf16.gmra.mxu0 %v458
    %v3975 = vpop.f32.mrf.mxu0
    %v3976 = vadd.f32 %v3935, %v3975
    %v3977 = vpop.f32.mrf.mxu0
    %v3978 = vadd.f32 %v3937, %v3977
    %v3979 = vpop.f32.mrf.mxu0
    %v3980 = vpop.f32.mrf.mxu0
    %3981 = vdwg.mxu0
    %3982 = vmatprep.subr.bf16.mxu0 %v2307
    %3983 = vmatpush1.bf16.msra.mxu0 %v2306
    %3984 = vmatprep.subr.bf16.mxu0 %v2303
    %3985 = vmatpush1.bf16.msra.mxu0 %v2302
    %3986 = vmatprep.subr.bf16.mxu0 %v2299
    %3987 = vmatpush1.bf16.msra.mxu0 %v2298
    %3988 = vmatprep.subr.bf16.mxu0 %v2295
    %3989 = vmatpush1.bf16.msra.mxu0 %v2294
    %3990 = vmatprep.subr.bf16.mxu0 %v2291
    %3991 = vmatpush1.bf16.msra.mxu0 %v2290
    %3992 = vmatprep.subr.bf16.mxu0 %v2287
    %3993 = vmatpush1.bf16.msra.mxu0 %v2286
    %3994 = vmatprep.subr.bf16.mxu0 %v2283
    %3995 = vmatpush1.bf16.msra.mxu0 %v2282
    %3996 = vmatprep.subr.bf16.mxu0 %v2279
    %3997 = vmatpush1.bf16.msra.mxu0 %v2278
    %3998 = vmatprep.subr.bf16.mxu0 %v2339
    %3999 = vmatpush2.bf16.msra.mxu0 %v2338
    %4000 = vmatprep.subr.bf16.mxu0 %v2335
    %4001 = vmatpush2.bf16.msra.mxu0 %v2334
    %4002 = vmatprep.subr.bf16.mxu0 %v2331
    %4003 = vmatpush2.bf16.msra.mxu0 %v2330
    %4004 = vmatprep.subr.bf16.mxu0 %v2327
    %4005 = vmatpush2.bf16.msra.mxu0 %v2326
    %4006 = vmatprep.subr.bf16.mxu0 %v2323
    %4007 = vmatpush2.bf16.msra.mxu0 %v2322
    %4008 = vmatprep.subr.bf16.mxu0 %v2319
    %4009 = vmatpush2.bf16.msra.mxu0 %v2318
    %4010 = vmatprep.subr.bf16.mxu0 %v2315
    %4011 = vmatpush2.bf16.msra.mxu0 %v2314
    %4012 = vmatprep.subr.bf16.mxu0 %v2311
    %4013 = vmatpush2.bf16.msra.mxu0 %v2310
    %4014 = vmatprep.mubr.bf16.mxu0 %v461
    %4015 = vmatmul.mubr.bf16.gmra.mxu0 %v460
    %v4016 = vpop.f32.mrf.mxu0
    %v4017 = vadd.f32 %v3976, %v4016
    %v4018 = vpop.f32.mrf.mxu0
    %v4019 = vadd.f32 %v3978, %v4018
    %v4020 = vpop.f32.mrf.mxu0
    %v4021 = vpop.f32.mrf.mxu0
    %4022 = vdwg.mxu0
    %4023 = vmatprep.subr.bf16.mxu0 %v2371
    %4024 = vmatpush1.bf16.msra.mxu0 %v2370
    %4025 = vmatprep.subr.bf16.mxu0 %v2367
    %4026 = vmatpush1.bf16.msra.mxu0 %v2366
    %4027 = vmatprep.subr.bf16.mxu0 %v2363
    %4028 = vmatpush1.bf16.msra.mxu0 %v2362
    %4029 = vmatprep.subr.bf16.mxu0 %v2359
    %4030 = vmatpush1.bf16.msra.mxu0 %v2358
    %4031 = vmatprep.subr.bf16.mxu0 %v2355
    %4032 = vmatpush1.bf16.msra.mxu0 %v2354
    %4033 = vmatprep.subr.bf16.mxu0 %v2351
    %4034 = vmatpush1.bf16.msra.mxu0 %v2350
    %4035 = vmatprep.subr.bf16.mxu0 %v2347
    %4036 = vmatpush1.bf16.msra.mxu0 %v2346
    %4037 = vmatprep.subr.bf16.mxu0 %v2343
    %4038 = vmatpush1.bf16.msra.mxu0 %v2342
    %4039 = vmatprep.subr.bf16.mxu0 %v2403
    %4040 = vmatpush2.bf16.msra.mxu0 %v2402
    %4041 = vmatprep.subr.bf16.mxu0 %v2399
    %4042 = vmatpush2.bf16.msra.mxu0 %v2398
    %4043 = vmatprep.subr.bf16.mxu0 %v2395
    %4044 = vmatpush2.bf16.msra.mxu0 %v2394
    %4045 = vmatprep.subr.bf16.mxu0 %v2391
    %4046 = vmatpush2.bf16.msra.mxu0 %v2390
    %4047 = vmatprep.subr.bf16.mxu0 %v2387
    %4048 = vmatpush2.bf16.msra.mxu0 %v2386
    %4049 = vmatprep.subr.bf16.mxu0 %v2383
    %4050 = vmatpush2.bf16.msra.mxu0 %v2382
    %4051 = vmatprep.subr.bf16.mxu0 %v2379
    %4052 = vmatpush2.bf16.msra.mxu0 %v2378
    %4053 = vmatprep.subr.bf16.mxu0 %v2375
    %4054 = vmatpush2.bf16.msra.mxu0 %v2374
    %4055 = vmatprep.mubr.bf16.mxu0 %v463
    %4056 = vmatmul.mubr.bf16.gmra.mxu0 %v462
    %v4057 = vpop.f32.mrf.mxu0
    %v4058 = vadd.f32 %v4017, %v4057
    %v4059 = vpop.f32.mrf.mxu0
    %v4060 = vadd.f32 %v4019, %v4059
    %v4061 = vpop.f32.mrf.mxu0
    %v4062 = vpop.f32.mrf.mxu0
    %4063 = vdwg.mxu0
    %4064 = vmatprep.subr.bf16.mxu0 %v2181
    %4065 = vmatpush1.bf16.msra.mxu0 %v2180
    %4066 = vmatprep.subr.bf16.mxu0 %v2177
    %4067 = vmatpush1.bf16.msra.mxu0 %v2176
    %4068 = vmatprep.subr.bf16.mxu0 %v2173
    %4069 = vmatpush1.bf16.msra.mxu0 %v2172
    %4070 = vmatprep.subr.bf16.mxu0 %v2169
    %4071 = vmatpush1.bf16.msra.mxu0 %v2168
    %4072 = vmatprep.subr.bf16.mxu0 %v2165
    %4073 = vmatpush1.bf16.msra.mxu0 %v2164
    %4074 = vmatprep.subr.bf16.mxu0 %v2161
    %4075 = vmatpush1.bf16.msra.mxu0 %v2160
    %4076 = vmatprep.subr.bf16.mxu0 %v2157
    %4077 = vmatpush1.bf16.msra.mxu0 %v2156
    %4078 = vmatprep.subr.bf16.mxu0 %v2153
    %4079 = vmatpush1.bf16.msra.mxu0 %v2152
    %4080 = vmatprep.subr.bf16.mxu0 %v2213
    %4081 = vmatpush2.bf16.msra.mxu0 %v2212
    %4082 = vmatprep.subr.bf16.mxu0 %v2209
    %4083 = vmatpush2.bf16.msra.mxu0 %v2208
    %4084 = vmatprep.subr.bf16.mxu0 %v2205
    %4085 = vmatpush2.bf16.msra.mxu0 %v2204
    %4086 = vmatprep.subr.bf16.mxu0 %v2201
    %4087 = vmatpush2.bf16.msra.mxu0 %v2200
    %4088 = vmatprep.subr.bf16.mxu0 %v2197
    %4089 = vmatpush2.bf16.msra.mxu0 %v2196
    %4090 = vmatprep.subr.bf16.mxu0 %v2193
    %4091 = vmatpush2.bf16.msra.mxu0 %v2192
    %4092 = vmatprep.subr.bf16.mxu0 %v2189
    %4093 = vmatpush2.bf16.msra.mxu0 %v2188
    %4094 = vmatprep.subr.bf16.mxu0 %v2185
    %4095 = vmatpush2.bf16.msra.mxu0 %v2184
    %4096 = vmatprep.mubr.bf16.mxu0 %v457
    %4097 = vmatmul.mubr.bf16.gmra.mxu0 %v456
    %v4098 = vpop.f32.mrf.mxu0
    %v4099 = vadd.f32 %v3891, %v4098
    %v4100 = vpop.f32.mrf.mxu0
    %v4101 = vadd.f32 %v3895, %v4100
    %v4102 = vpop.f32.mrf.mxu0
    %v4103 = vpop.f32.mrf.mxu0
    %4104 = vdwg.mxu0
    %4105 = vmatprep.subr.bf16.mxu0 %v2245
    %4106 = vmatpush1.bf16.msra.mxu0 %v2244
    %4107 = vmatprep.subr.bf16.mxu0 %v2241
    %4108 = vmatpush1.bf16.msra.mxu0 %v2240
    %4109 = vmatprep.subr.bf16.mxu0 %v2237
    %4110 = vmatpush1.bf16.msra.mxu0 %v2236
    %4111 = vmatprep.subr.bf16.mxu0 %v2233
    %4112 = vmatpush1.bf16.msra.mxu0 %v2232
    %4113 = vmatprep.subr.bf16.mxu0 %v2229
    %4114 = vmatpush1.bf16.msra.mxu0 %v2228
    %4115 = vmatprep.subr.bf16.mxu0 %v2225
    %4116 = vmatpush1.bf16.msra.mxu0 %v2224
    %4117 = vmatprep.subr.bf16.mxu0 %v2221
    %4118 = vmatpush1.bf16.msra.mxu0 %v2220
    %4119 = vmatprep.subr.bf16.mxu0 %v2217
    %4120 = vmatpush1.bf16.msra.mxu0 %v2216
    %4121 = vmatprep.subr.bf16.mxu0 %v2277
    %4122 = vmatpush2.bf16.msra.mxu0 %v2276
    %4123 = vmatprep.subr.bf16.mxu0 %v2273
    %4124 = vmatpush2.bf16.msra.mxu0 %v2272
    %4125 = vmatprep.subr.bf16.mxu0 %v2269
    %4126 = vmatpush2.bf16.msra.mxu0 %v2268
    %4127 = vmatprep.subr.bf16.mxu0 %v2265
    %4128 = vmatpush2.bf16.msra.mxu0 %v2264
    %4129 = vmatprep.subr.bf16.mxu0 %v2261
    %4130 = vmatpush2.bf16.msra.mxu0 %v2260
    %4131 = vmatprep.subr.bf16.mxu0 %v2257
    %4132 = vmatpush2.bf16.msra.mxu0 %v2256
    %4133 = vmatprep.subr.bf16.mxu0 %v2253
    %4134 = vmatpush2.bf16.msra.mxu0 %v2252
    %4135 = vmatprep.subr.bf16.mxu0 %v2249
    %4136 = vmatpush2.bf16.msra.mxu0 %v2248
    %4137 = vmatprep.mubr.bf16.mxu0 %v459
    %4138 = vmatmul.mubr.bf16.gmra.mxu0 %v458
    %v4139 = vpop.f32.mrf.mxu0
    %v4140 = vadd.f32 %v4099, %v4139
    %v4141 = vpop.f32.mrf.mxu0
    %v4142 = vadd.f32 %v4101, %v4141
    %v4143 = vpop.f32.mrf.mxu0
    %v4144 = vpop.f32.mrf.mxu0
    %4145 = vdwg.mxu0
    %4146 = vmatprep.subr.bf16.mxu0 %v2309
    %4147 = vmatpush1.bf16.msra.mxu0 %v2308
    %4148 = vmatprep.subr.bf16.mxu0 %v2305
    %4149 = vmatpush1.bf16.msra.mxu0 %v2304
    %4150 = vmatprep.subr.bf16.mxu0 %v2301
    %4151 = vmatpush1.bf16.msra.mxu0 %v2300
    %4152 = vmatprep.subr.bf16.mxu0 %v2297
    %4153 = vmatpush1.bf16.msra.mxu0 %v2296
    %4154 = vmatprep.subr.bf16.mxu0 %v2293
    %4155 = vmatpush1.bf16.msra.mxu0 %v2292
    %4156 = vmatprep.subr.bf16.mxu0 %v2289
    %4157 = vmatpush1.bf16.msra.mxu0 %v2288
    %4158 = vmatprep.subr.bf16.mxu0 %v2285
    %4159 = vmatpush1.bf16.msra.mxu0 %v2284
    %4160 = vmatprep.subr.bf16.mxu0 %v2281
    %4161 = vmatpush1.bf16.msra.mxu0 %v2280
    %4162 = vmatprep.subr.bf16.mxu0 %v2341
    %4163 = vmatpush2.bf16.msra.mxu0 %v2340
    %4164 = vmatprep.subr.bf16.mxu0 %v2337
    %4165 = vmatpush2.bf16.msra.mxu0 %v2336
    %4166 = vmatprep.subr.bf16.mxu0 %v2333
    %4167 = vmatpush2.bf16.msra.mxu0 %v2332
    %4168 = vmatprep.subr.bf16.mxu0 %v2329
    %4169 = vmatpush2.bf16.msra.mxu0 %v2328
    %4170 = vmatprep.subr.bf16.mxu0 %v2325
    %4171 = vmatpush2.bf16.msra.mxu0 %v2324
    %4172 = vmatprep.subr.bf16.mxu0 %v2321
    %4173 = vmatpush2.bf16.msra.mxu0 %v2320
    %4174 = vmatprep.subr.bf16.mxu0 %v2317
    %4175 = vmatpush2.bf16.msra.mxu0 %v2316
    %4176 = vmatprep.subr.bf16.mxu0 %v2313
    %4177 = vmatpush2.bf16.msra.mxu0 %v2312
    %4178 = vmatprep.mubr.bf16.mxu0 %v461
    %4179 = vmatmul.mubr.bf16.gmra.mxu0 %v460
    %v4180 = vpop.f32.mrf.mxu0
    %v4181 = vadd.f32 %v4140, %v4180
    %v4182 = vpop.f32.mrf.mxu0
    %v4183 = vadd.f32 %v4142, %v4182
    %v4184 = vpop.f32.mrf.mxu0
    %v4185 = vpop.f32.mrf.mxu0
    %4186 = vdwg.mxu0
    %4187 = vmatprep.subr.bf16.mxu0 %v2373
    %4188 = vmatpush1.bf16.msra.mxu0 %v2372
    %4189 = vmatprep.subr.bf16.mxu0 %v2369
    %4190 = vmatpush1.bf16.msra.mxu0 %v2368
    %4191 = vmatprep.subr.bf16.mxu0 %v2365
    %4192 = vmatpush1.bf16.msra.mxu0 %v2364
    %4193 = vmatprep.subr.bf16.mxu0 %v2361
    %4194 = vmatpush1.bf16.msra.mxu0 %v2360
    %4195 = vmatprep.subr.bf16.mxu0 %v2357
    %4196 = vmatpush1.bf16.msra.mxu0 %v2356
    %4197 = vmatprep.subr.bf16.mxu0 %v2353
    %4198 = vmatpush1.bf16.msra.mxu0 %v2352
    %4199 = vmatprep.subr.bf16.mxu0 %v2349
    %4200 = vmatpush1.bf16.msra.mxu0 %v2348
    %4201 = vmatprep.subr.bf16.mxu0 %v2345
    %4202 = vmatpush1.bf16.msra.mxu0 %v2344
    %4203 = vmatprep.subr.bf16.mxu0 %v2405
    %4204 = vmatpush2.bf16.msra.mxu0 %v2404
    %4205 = vmatprep.subr.bf16.mxu0 %v2401
    %4206 = vmatpush2.bf16.msra.mxu0 %v2400
    %4207 = vmatprep.subr.bf16.mxu0 %v2397
    %4208 = vmatpush2.bf16.msra.mxu0 %v2396
    %4209 = vmatprep.subr.bf16.mxu0 %v2393
    %4210 = vmatpush2.bf16.msra.mxu0 %v2392
    %4211 = vmatprep.subr.bf16.mxu0 %v2389
    %4212 = vmatpush2.bf16.msra.mxu0 %v2388
    %4213 = vmatprep.subr.bf16.mxu0 %v2385
    %4214 = vmatpush2.bf16.msra.mxu0 %v2384
    %4215 = vmatprep.subr.bf16.mxu0 %v2381
    %4216 = vmatpush2.bf16.msra.mxu0 %v2380
    %4217 = vmatprep.subr.bf16.mxu0 %v2377
    %4218 = vmatpush2.bf16.msra.mxu0 %v2376
    %4219 = vmatprep.mubr.bf16.mxu0 %v463
    %4220 = vmatmul.mubr.bf16.gmra.mxu0 %v462
    %v4221 = vpop.f32.mrf.mxu0
    %v4222 = vadd.f32 %v4181, %v4221
    %v4223 = vpop.f32.mrf.mxu0
    %v4224 = vadd.f32 %v4183, %v4223
    %v4225 = vpop.f32.mrf.mxu0
    %v4226 = vpop.f32.mrf.mxu0
    %4227 = vdwg.mxu0
    %v4228 = vmax.f32 %v4058, 0.0
    %v4229 = vmax.f32 %v4060, 0.0
    %v4230 = vmax.f32 %v4222, 0.0
    %v4231 = vmax.f32 %v4224, 0.0
    %v4232 = vpack.c.bf16 %v4228, %v4228
    %v4233 = vpack.c.bf16 %v4229, %v4229
    %v4234 = vpack.c.bf16 %v4230, %v4230
    %v4235 = vpack.c.bf16 %v4231, %v4231
    %v4236 = vld [vmem:[%s8] sm:$0x3f]
    %v4238 = vlaneseq
    %v4239 = vshrl.u32 %v4238, 7
    %v4240 = vsub.s32 0, %v4239
    %v4241 = vrot.slane %v4236, %v4240
    %v4242 = vlaneseq
    %v4243 = vshrl.u32 %v4242, 7
    %v4244 = vsub.s32 1, %v4243
    %v4245 = vrot.slane %v4236, %v4244
    %v4246 = vlaneseq
    %v4247 = vshrl.u32 %v4246, 7
    %v4248 = vsub.s32 2, %v4247
    %v4249 = vrot.slane %v4236, %v4248
    %v4250 = vlaneseq
    %v4251 = vshrl.u32 %v4250, 7
    %v4252 = vsub.s32 3, %v4251
    %v4253 = vrot.slane %v4236, %v4252
    %v4254 = vlaneseq
    %v4255 = vshrl.u32 %v4254, 7
    %v4256 = vsub.s32 4, %v4255
    %v4257 = vrot.slane %v4236, %v4256
    %v4258 = vlaneseq
    %v4259 = vshrl.u32 %v4258, 7
    %v4260 = vsub.s32 5, %v4259
    %v4261 = vrot.slane %v4236, %v4260
    %4268 = vmatprep.subr.bf16.mxu0 %v3729
    %4269 = vmatpush1.bf16.msra.mxu0 %v3728
    %4270 = vmatprep.subr.bf16.mxu0 %v3723
    %4271 = vmatpush1.bf16.msra.mxu0 %v3722
    %4272 = vmatprep.subr.bf16.mxu0 %v3717
    %4273 = vmatpush1.bf16.msra.mxu0 %v3716
    %4274 = vmatprep.subr.bf16.mxu0 %v3711
    %4275 = vmatpush1.bf16.msra.mxu0 %v3710
    %4276 = vmatprep.subr.bf16.mxu0 %v3705
    %4277 = vmatpush1.bf16.msra.mxu0 %v3704
    %4278 = vmatprep.subr.bf16.mxu0 %v3699
    %4279 = vmatpush1.bf16.msra.mxu0 %v3698
    %4280 = vmatprep.subr.bf16.mxu0 %v3693
    %4281 = vmatpush1.bf16.msra.mxu0 %v3692
    %4282 = vmatprep.subr.bf16.mxu0 %v3687
    %4283 = vmatpush1.bf16.msra.mxu0 %v3686
    %4284 = vmatprep.subr.bf16.mxu0 %v3777
    %4285 = vmatpush2.bf16.msra.mxu0 %v3776
    %4286 = vmatprep.subr.bf16.mxu0 %v3771
    %4287 = vmatpush2.bf16.msra.mxu0 %v3770
    %4288 = vmatprep.subr.bf16.mxu0 %v3765
    %4289 = vmatpush2.bf16.msra.mxu0 %v3764
    %4290 = vmatprep.subr.bf16.mxu0 %v3759
    %4291 = vmatpush2.bf16.msra.mxu0 %v3758
    %4292 = vmatprep.subr.bf16.mxu0 %v3753
    %4293 = vmatpush2.bf16.msra.mxu0 %v3752
    %4294 = vmatprep.subr.bf16.mxu0 %v3747
    %4295 = vmatpush2.bf16.msra.mxu0 %v3746
    %4296 = vmatprep.subr.bf16.mxu0 %v3741
    %4297 = vmatpush2.bf16.msra.mxu0 %v3740
    %4298 = vmatprep.subr.bf16.mxu0 %v3735
    %4299 = vmatpush2.bf16.msra.mxu0 %v3734
    %4300 = vmatprep.mubr.bf16.mxu0 %v4233
    %4301 = vmatmul.mubr.bf16.gmra.mxu0 %v4232
    %v4302 = vpop.f32.mrf.mxu0
    %v4303 = vadd.f32 %v4241, %v4302
    %v4304 = vpop.f32.mrf.mxu0
    %v4305 = vadd.f32 %v4245, %v4304
    %v4306 = vpop.f32.mrf.mxu0
    %v4307 = vpop.f32.mrf.mxu0
    %4308 = vdwg.mxu0
    %4309 = vmatprep.subr.bf16.mxu0 %v3825
    %4310 = vmatpush1.bf16.msra.mxu0 %v3824
    %4311 = vmatprep.subr.bf16.mxu0 %v3819
    %4312 = vmatpush1.bf16.msra.mxu0 %v3818
    %4313 = vmatprep.subr.bf16.mxu0 %v3813
    %4314 = vmatpush1.bf16.msra.mxu0 %v3812
    %4315 = vmatprep.subr.bf16.mxu0 %v3807
    %4316 = vmatpush1.bf16.msra.mxu0 %v3806
    %4317 = vmatprep.subr.bf16.mxu0 %v3801
    %4318 = vmatpush1.bf16.msra.mxu0 %v3800
    %4319 = vmatprep.subr.bf16.mxu0 %v3795
    %4320 = vmatpush1.bf16.msra.mxu0 %v3794
    %4321 = vmatprep.subr.bf16.mxu0 %v3789
    %4322 = vmatpush1.bf16.msra.mxu0 %v3788
    %4323 = vmatprep.subr.bf16.mxu0 %v3783
    %4324 = vmatpush1.bf16.msra.mxu0 %v3782
    %4325 = vmatprep.subr.bf16.mxu0 %v3873
    %4326 = vmatpush2.bf16.msra.mxu0 %v3872
    %4327 = vmatprep.subr.bf16.mxu0 %v3867
    %4328 = vmatpush2.bf16.msra.mxu0 %v3866
    %4329 = vmatprep.subr.bf16.mxu0 %v3861
    %4330 = vmatpush2.bf16.msra.mxu0 %v3860
    %4331 = vmatprep.subr.bf16.mxu0 %v3855
    %4332 = vmatpush2.bf16.msra.mxu0 %v3854
    %4333 = vmatprep.subr.bf16.mxu0 %v3849
    %4334 = vmatpush2.bf16.msra.mxu0 %v3848
    %4335 = vmatprep.subr.bf16.mxu0 %v3843
    %4336 = vmatpush2.bf16.msra.mxu0 %v3842
    %4337 = vmatprep.subr.bf16.mxu0 %v3837
    %4338 = vmatpush2.bf16.msra.mxu0 %v3836
    %4339 = vmatprep.subr.bf16.mxu0 %v3831
    %4340 = vmatpush2.bf16.msra.mxu0 %v3830
    %4341 = vmatprep.mubr.bf16.mxu0 %v4235
    %4342 = vmatmul.mubr.bf16.gmra.mxu0 %v4234
    %v4343 = vpop.f32.mrf.mxu0
    %v4344 = vadd.f32 %v4303, %v4343
    %v4345 = vpop.f32.mrf.mxu0
    %v4346 = vadd.f32 %v4305, %v4345
    %v4347 = vpop.f32.mrf.mxu0
    %v4348 = vpop.f32.mrf.mxu0
    %4349 = vdwg.mxu0
    %4350 = vmatprep.subr.bf16.mxu0 %v3731
    %4351 = vmatpush1.bf16.msra.mxu0 %v3730
    %4352 = vmatprep.subr.bf16.mxu0 %v3725
    %4353 = vmatpush1.bf16.msra.mxu0 %v3724
    %4354 = vmatprep.subr.bf16.mxu0 %v3719
    %4355 = vmatpush1.bf16.msra.mxu0 %v3718
    %4356 = vmatprep.subr.bf16.mxu0 %v3713
    %4357 = vmatpush1.bf16.msra.mxu0 %v3712
    %4358 = vmatprep.subr.bf16.mxu0 %v3707
    %4359 = vmatpush1.bf16.msra.mxu0 %v3706
    %4360 = vmatprep.subr.bf16.mxu0 %v3701
    %4361 = vmatpush1.bf16.msra.mxu0 %v3700
    %4362 = vmatprep.subr.bf16.mxu0 %v3695
    %4363 = vmatpush1.bf16.msra.mxu0 %v3694
    %4364 = vmatprep.subr.bf16.mxu0 %v3689
    %4365 = vmatpush1.bf16.msra.mxu0 %v3688
    %4366 = vmatprep.subr.bf16.mxu0 %v3779
    %4367 = vmatpush2.bf16.msra.mxu0 %v3778
    %4368 = vmatprep.subr.bf16.mxu0 %v3773
    %4369 = vmatpush2.bf16.msra.mxu0 %v3772
    %4370 = vmatprep.subr.bf16.mxu0 %v3767
    %4371 = vmatpush2.bf16.msra.mxu0 %v3766
    %4372 = vmatprep.subr.bf16.mxu0 %v3761
    %4373 = vmatpush2.bf16.msra.mxu0 %v3760
    %4374 = vmatprep.subr.bf16.mxu0 %v3755
    %4375 = vmatpush2.bf16.msra.mxu0 %v3754
    %4376 = vmatprep.subr.bf16.mxu0 %v3749
    %4377 = vmatpush2.bf16.msra.mxu0 %v3748
    %4378 = vmatprep.subr.bf16.mxu0 %v3743
    %4379 = vmatpush2.bf16.msra.mxu0 %v3742
    %4380 = vmatprep.subr.bf16.mxu0 %v3737
    %4381 = vmatpush2.bf16.msra.mxu0 %v3736
    %4382 = vmatprep.mubr.bf16.mxu0 %v4233
    %4383 = vmatmul.mubr.bf16.gmra.mxu0 %v4232
    %v4384 = vpop.f32.mrf.mxu0
    %v4385 = vadd.f32 %v4249, %v4384
    %v4386 = vpop.f32.mrf.mxu0
    %v4387 = vadd.f32 %v4253, %v4386
    %v4388 = vpop.f32.mrf.mxu0
    %v4389 = vpop.f32.mrf.mxu0
    %4390 = vdwg.mxu0
    %4391 = vmatprep.subr.bf16.mxu0 %v3827
    %4392 = vmatpush1.bf16.msra.mxu0 %v3826
    %4393 = vmatprep.subr.bf16.mxu0 %v3821
    %4394 = vmatpush1.bf16.msra.mxu0 %v3820
    %4395 = vmatprep.subr.bf16.mxu0 %v3815
    %4396 = vmatpush1.bf16.msra.mxu0 %v3814
    %4397 = vmatprep.subr.bf16.mxu0 %v3809
    %4398 = vmatpush1.bf16.msra.mxu0 %v3808
    %4399 = vmatprep.subr.bf16.mxu0 %v3803
    %4400 = vmatpush1.bf16.msra.mxu0 %v3802
    %4401 = vmatprep.subr.bf16.mxu0 %v3797
    %4402 = vmatpush1.bf16.msra.mxu0 %v3796
    %4403 = vmatprep.subr.bf16.mxu0 %v3791
    %4404 = vmatpush1.bf16.msra.mxu0 %v3790
    %4405 = vmatprep.subr.bf16.mxu0 %v3785
    %4406 = vmatpush1.bf16.msra.mxu0 %v3784
    %4407 = vmatprep.subr.bf16.mxu0 %v3875
    %4408 = vmatpush2.bf16.msra.mxu0 %v3874
    %4409 = vmatprep.subr.bf16.mxu0 %v3869
    %4410 = vmatpush2.bf16.msra.mxu0 %v3868
    %4411 = vmatprep.subr.bf16.mxu0 %v3863
    %4412 = vmatpush2.bf16.msra.mxu0 %v3862
    %4413 = vmatprep.subr.bf16.mxu0 %v3857
    %4414 = vmatpush2.bf16.msra.mxu0 %v3856
    %4415 = vmatprep.subr.bf16.mxu0 %v3851
    %4416 = vmatpush2.bf16.msra.mxu0 %v3850
    %4417 = vmatprep.subr.bf16.mxu0 %v3845
    %4418 = vmatpush2.bf16.msra.mxu0 %v3844
    %4419 = vmatprep.subr.bf16.mxu0 %v3839
    %4420 = vmatpush2.bf16.msra.mxu0 %v3838
    %4421 = vmatprep.subr.bf16.mxu0 %v3833
    %4422 = vmatpush2.bf16.msra.mxu0 %v3832
    %4423 = vmatprep.mubr.bf16.mxu0 %v4235
    %4424 = vmatmul.mubr.bf16.gmra.mxu0 %v4234
    %v4425 = vpop.f32.mrf.mxu0
    %v4426 = vadd.f32 %v4385, %v4425
    %v4427 = vpop.f32.mrf.mxu0
    %v4428 = vadd.f32 %v4387, %v4427
    %v4429 = vpop.f32.mrf.mxu0
    %v4430 = vpop.f32.mrf.mxu0
    %4431 = vdwg.mxu0
    %4432 = vmatprep.subr.bf16.mxu0 %v3733
    %4433 = vmatpush1.bf16.msra.mxu0 %v3732
    %4434 = vmatprep.subr.bf16.mxu0 %v3727
    %4435 = vmatpush1.bf16.msra.mxu0 %v3726
    %4436 = vmatprep.subr.bf16.mxu0 %v3721
    %4437 = vmatpush1.bf16.msra.mxu0 %v3720
    %4438 = vmatprep.subr.bf16.mxu0 %v3715
    %4439 = vmatpush1.bf16.msra.mxu0 %v3714
    %4440 = vmatprep.subr.bf16.mxu0 %v3709
    %4441 = vmatpush1.bf16.msra.mxu0 %v3708
    %4442 = vmatprep.subr.bf16.mxu0 %v3703
    %4443 = vmatpush1.bf16.msra.mxu0 %v3702
    %4444 = vmatprep.subr.bf16.mxu0 %v3697
    %4445 = vmatpush1.bf16.msra.mxu0 %v3696
    %4446 = vmatprep.subr.bf16.mxu0 %v3691
    %4447 = vmatpush1.bf16.msra.mxu0 %v3690
    %4448 = vmatprep.subr.bf16.mxu0 %v3781
    %4449 = vmatpush2.bf16.msra.mxu0 %v3780
    %4450 = vmatprep.subr.bf16.mxu0 %v3775
    %4451 = vmatpush2.bf16.msra.mxu0 %v3774
    %4452 = vmatprep.subr.bf16.mxu0 %v3769
    %4453 = vmatpush2.bf16.msra.mxu0 %v3768
    %4454 = vmatprep.subr.bf16.mxu0 %v3763
    %4455 = vmatpush2.bf16.msra.mxu0 %v3762
    %4456 = vmatprep.subr.bf16.mxu0 %v3757
    %4457 = vmatpush2.bf16.msra.mxu0 %v3756
    %4458 = vmatprep.subr.bf16.mxu0 %v3751
    %4459 = vmatpush2.bf16.msra.mxu0 %v3750
    %4460 = vmatprep.subr.bf16.mxu0 %v3745
    %4461 = vmatpush2.bf16.msra.mxu0 %v3744
    %4462 = vmatprep.subr.bf16.mxu0 %v3739
    %4463 = vmatpush2.bf16.msra.mxu0 %v3738
    %4464 = vmatprep.mubr.bf16.mxu0 %v4233
    %4465 = vmatmul.mubr.bf16.gmra.mxu0 %v4232
    %v4466 = vpop.f32.mrf.mxu0
    %v4467 = vadd.f32 %v4257, %v4466
    %v4468 = vpop.f32.mrf.mxu0
    %v4469 = vadd.f32 %v4261, %v4468
    %v4470 = vpop.f32.mrf.mxu0
    %v4471 = vpop.f32.mrf.mxu0
    %4472 = vdwg.mxu0
    %4473 = vmatprep.subr.bf16.mxu0 %v3829
    %4474 = vmatpush1.bf16.msra.mxu0 %v3828
    %4475 = vmatprep.subr.bf16.mxu0 %v3823
    %4476 = vmatpush1.bf16.msra.mxu0 %v3822
    %4477 = vmatprep.subr.bf16.mxu0 %v3817
    %4478 = vmatpush1.bf16.msra.mxu0 %v3816
    %4479 = vmatprep.subr.bf16.mxu0 %v3811
    %4480 = vmatpush1.bf16.msra.mxu0 %v3810
    %4481 = vmatprep.subr.bf16.mxu0 %v3805
    %4482 = vmatpush1.bf16.msra.mxu0 %v3804
    %4483 = vmatprep.subr.bf16.mxu0 %v3799
    %4484 = vmatpush1.bf16.msra.mxu0 %v3798
    %4485 = vmatprep.subr.bf16.mxu0 %v3793
    %4486 = vmatpush1.bf16.msra.mxu0 %v3792
    %4487 = vmatprep.subr.bf16.mxu0 %v3787
    %4488 = vmatpush1.bf16.msra.mxu0 %v3786
    %4489 = vmatprep.subr.bf16.mxu0 %v3877
    %4490 = vmatpush2.bf16.msra.mxu0 %v3876
    %4491 = vmatprep.subr.bf16.mxu0 %v3871
    %4492 = vmatpush2.bf16.msra.mxu0 %v3870
    %4493 = vmatprep.subr.bf16.mxu0 %v3865
    %4494 = vmatpush2.bf16.msra.mxu0 %v3864
    %4495 = vmatprep.subr.bf16.mxu0 %v3859
    %4496 = vmatpush2.bf16.msra.mxu0 %v3858
    %4497 = vmatprep.subr.bf16.mxu0 %v3853
    %4498 = vmatpush2.bf16.msra.mxu0 %v3852
    %4499 = vmatprep.subr.bf16.mxu0 %v3847
    %4500 = vmatpush2.bf16.msra.mxu0 %v3846
    %4501 = vmatprep.subr.bf16.mxu0 %v3841
    %4502 = vmatpush2.bf16.msra.mxu0 %v3840
    %4503 = vmatprep.subr.bf16.mxu0 %v3835
    %4504 = vmatpush2.bf16.msra.mxu0 %v3834
    %4505 = vmatprep.mubr.bf16.mxu0 %v4235
    %4506 = vmatmul.mubr.bf16.gmra.mxu0 %v4234
    %v4507 = vpop.f32.mrf.mxu0
    %v4508 = vadd.f32 %v4467, %v4507
    %v4509 = vpop.f32.mrf.mxu0
    %v4510 = vadd.f32 %v4469, %v4509
    %v4511 = vpop.f32.mrf.mxu0
    %v4512 = vpop.f32.mrf.mxu0
    %4513 = vdwg.mxu0
    %v4514 = vmax.f32 %v4344, 0.0
    %v4515 = vmax.f32 %v4346, 0.0
    %v4516 = vmax.f32 %v4426, 0.0
    %v4517 = vmax.f32 %v4428, 0.0
    %v4518 = vmax.f32 %v4508, 0.0
    %v4519 = vmax.f32 %v4510, 0.0
    %v4520 = vpack.c.bf16 %v4514, %v4514
    %v4521 = vpack.c.bf16 %v4515, %v4515
    %v4522 = vpack.c.bf16 %v4516, %v4516
    %v4523 = vpack.c.bf16 %v4517, %v4517
    %v4524 = vpack.c.bf16 %v4518, %v4518
    %v4525 = vpack.c.bf16 %v4519, %v4519
    %v4526 = vld [vmem:[#allocation13] sm:$0xf]
    %v4527 = vld [vmem:[#allocation13 + $0x4] sm:$0xf]
    %v4528 = vld [vmem:[#allocation13 + $0x8] sm:$0xf]
    %v4529 = vld [vmem:[#allocation13 + $0xc] sm:$0xf]
    %v4530 = vld [vmem:[#allocation13 + $0x10] sm:$0xf]
    %v4531 = vld [vmem:[#allocation13 + $0x14] sm:$0xf]
    %v4532 = vld [vmem:[#allocation13 + $0x18] sm:$0xf]
    %v4533 = vld [vmem:[#allocation13 + $0x1c] sm:$0xf]
    %v4534 = vld [vmem:[#allocation13 + $0x20] sm:$0xf]
    %v4535 = vld [vmem:[#allocation13 + $0x24] sm:$0xf]
    %v4536 = vld [vmem:[#allocation13 + $0x28] sm:$0xf]
    %v4537 = vld [vmem:[#allocation13 + $0x2c] sm:$0xf]
    %v4538 = vld [vmem:[#allocation13 + $0x30] sm:$0xf]
    %v4539 = vld [vmem:[#allocation13 + $0x34] sm:$0xf]
    %v4540 = vld [vmem:[#allocation13 + $0x38] sm:$0xf]
    %v4541 = vld [vmem:[#allocation13 + $0x3c] sm:$0xf]
    %v4542 = vld [vmem:[#allocation13 + $0x40] sm:$0xf]
    %v4543 = vld [vmem:[#allocation13 + $0x44] sm:$0xf]
    %v4544 = vld [vmem:[#allocation13 + $0x48] sm:$0xf]
    %v4545 = vld [vmem:[#allocation13 + $0x4c] sm:$0xf]
    %v4546 = vld [vmem:[#allocation13 + $0x50] sm:$0xf]
    %v4547 = vld [vmem:[#allocation13 + $0x54] sm:$0xf]
    %v4548 = vld [vmem:[#allocation13 + $0x58] sm:$0xf]
    %v4549 = vld [vmem:[#allocation13 + $0x5c] sm:$0xf]
    %v4550 = vld [vmem:[#allocation13 + $0x60] sm:$0xf]
    %v4551 = vld [vmem:[#allocation13 + $0x64] sm:$0xf]
    %v4552 = vld [vmem:[#allocation13 + $0x68] sm:$0xf]
    %v4553 = vld [vmem:[#allocation13 + $0x6c] sm:$0xf]
    %v4554 = vld [vmem:[#allocation13 + $0x70] sm:$0xf]
    %v4555 = vld [vmem:[#allocation13 + $0x74] sm:$0xf]
    %v4556 = vld [vmem:[#allocation13 + $0x78] sm:$0xf]
    %v4557 = vld [vmem:[#allocation13 + $0x7c] sm:$0xf]
    %v4558 = vld [vmem:[#allocation13 + $0x80] sm:$0xf]
    %v4559 = vld [vmem:[#allocation13 + $0x84] sm:$0xf]
    %v4560 = vld [vmem:[#allocation13 + $0x88] sm:$0xf]
    %v4561 = vld [vmem:[#allocation13 + $0x8c] sm:$0xf]
    %v4562 = vld [vmem:[#allocation13 + $0x90] sm:$0xf]
    %v4563 = vld [vmem:[#allocation13 + $0x94] sm:$0xf]
    %v4564 = vld [vmem:[#allocation13 + $0x98] sm:$0xf]
    %v4565 = vld [vmem:[#allocation13 + $0x9c] sm:$0xf]
    %v4566 = vld [vmem:[#allocation13 + $0xa0] sm:$0xf]
    %v4567 = vld [vmem:[#allocation13 + $0xa4] sm:$0xf]
    %v4568 = vld [vmem:[#allocation13 + $0xa8] sm:$0xf]
    %v4569 = vld [vmem:[#allocation13 + $0xac] sm:$0xf]
    %v4570 = vld [vmem:[#allocation13 + $0xb0] sm:$0xf]
    %v4571 = vld [vmem:[#allocation13 + $0xb4] sm:$0xf]
    %v4572 = vld [vmem:[#allocation13 + $0xb8] sm:$0xf]
    %v4573 = vld [vmem:[#allocation13 + $0xbc] sm:$0xf]
    %v4574 = vld [vmem:[#allocation13 + $0xc0] sm:$0xf]
    %v4575 = vld [vmem:[#allocation13 + $0xc4] sm:$0xf]
    %v4576 = vld [vmem:[#allocation13 + $0xc8] sm:$0xf]
    %v4577 = vld [vmem:[#allocation13 + $0xcc] sm:$0xf]
    %v4578 = vld [vmem:[#allocation13 + $0xd0] sm:$0xf]
    %v4579 = vld [vmem:[#allocation13 + $0xd4] sm:$0xf]
    %v4580 = vld [vmem:[#allocation13 + $0xd8] sm:$0xf]
    %v4581 = vld [vmem:[#allocation13 + $0xdc] sm:$0xf]
    %v4582 = vld [vmem:[#allocation13 + $0xe0] sm:$0xf]
    %v4583 = vld [vmem:[#allocation13 + $0xe4] sm:$0xf]
    %v4584 = vld [vmem:[#allocation13 + $0xe8] sm:$0xf]
    %v4585 = vld [vmem:[#allocation13 + $0xec] sm:$0xf]
    %v4586 = vld [vmem:[#allocation13 + $0xf0] sm:$0xf]
    %v4587 = vld [vmem:[#allocation13 + $0xf4] sm:$0xf]
    %v4588 = vld [vmem:[#allocation13 + $0xf8] sm:$0xf]
    %v4589 = vld [vmem:[#allocation13 + $0xfc] sm:$0xf]
    %v4590 = vld [vmem:[#allocation13 + $0x100] sm:$0xf]
    %v4591 = vld [vmem:[#allocation13 + $0x104] sm:$0xf]
    %v4592 = vld [vmem:[#allocation13 + $0x108] sm:$0xf]
    %v4593 = vld [vmem:[#allocation13 + $0x10c] sm:$0xf]
    %v4594 = vld [vmem:[#allocation13 + $0x110] sm:$0xf]
    %v4595 = vld [vmem:[#allocation13 + $0x114] sm:$0xf]
    %v4596 = vld [vmem:[#allocation13 + $0x118] sm:$0xf]
    %v4597 = vld [vmem:[#allocation13 + $0x11c] sm:$0xf]
    %v4598 = vld [vmem:[#allocation13 + $0x120] sm:$0xf]
    %v4599 = vld [vmem:[#allocation13 + $0x124] sm:$0xf]
    %v4600 = vld [vmem:[#allocation13 + $0x128] sm:$0xf]
    %v4601 = vld [vmem:[#allocation13 + $0x12c] sm:$0xf]
    %v4602 = vld [vmem:[#allocation13 + $0x130] sm:$0xf]
    %v4603 = vld [vmem:[#allocation13 + $0x134] sm:$0xf]
    %v4604 = vld [vmem:[#allocation13 + $0x138] sm:$0xf]
    %v4605 = vld [vmem:[#allocation13 + $0x13c] sm:$0xf]
    %v4606 = vld [vmem:[#allocation13 + $0x140] sm:$0xf]
    %v4607 = vld [vmem:[#allocation13 + $0x144] sm:$0xf]
    %v4608 = vld [vmem:[#allocation13 + $0x148] sm:$0xf]
    %v4609 = vld [vmem:[#allocation13 + $0x14c] sm:$0xf]
    %v4610 = vld [vmem:[#allocation13 + $0x150] sm:$0xf]
    %v4611 = vld [vmem:[#allocation13 + $0x154] sm:$0xf]
    %v4612 = vld [vmem:[#allocation13 + $0x158] sm:$0xf]
    %v4613 = vld [vmem:[#allocation13 + $0x15c] sm:$0xf]
    %v4614 = vld [vmem:[#allocation13 + $0x160] sm:$0xf]
    %v4615 = vld [vmem:[#allocation13 + $0x164] sm:$0xf]
    %v4616 = vld [vmem:[#allocation13 + $0x168] sm:$0xf]
    %v4617 = vld [vmem:[#allocation13 + $0x16c] sm:$0xf]
    %v4618 = vld [vmem:[#allocation13 + $0x170] sm:$0xf]
    %v4619 = vld [vmem:[#allocation13 + $0x174] sm:$0xf]
    %v4620 = vld [vmem:[#allocation13 + $0x178] sm:$0xf]
    %v4621 = vld [vmem:[#allocation13 + $0x17c] sm:$0xf]
    %v4622 = vld [vmem:[%s10] sm:$0x1]
    %v4624 = vlaneseq
    %v4625 = vshrl.u32 %v4624, 7
    %v4626 = vsub.s32 0, %v4625
    %v4627 = vrot.slane %v4622, %v4626
    %v4725 = vunpack.c.l.b16 %v4526
    %v4726 = vunpack.c.l.b16 %v4527
    %v4727 = vunpack.c.l.b16 %v4528
    %v4728 = vunpack.c.l.b16 %v4529
    %v4729 = vunpack.c.l.b16 %v4530
    %v4730 = vunpack.c.l.b16 %v4531
    %v4731 = vunpack.c.l.b16 %v4532
    %v4732 = vunpack.c.l.b16 %v4533
    %v4733 = vunpack.c.l.b16 %v4534
    %v4734 = vunpack.c.l.b16 %v4535
    %v4735 = vunpack.c.l.b16 %v4536
    %v4736 = vunpack.c.l.b16 %v4537
    %v4737 = vunpack.c.l.b16 %v4538
    %v4738 = vunpack.c.l.b16 %v4539
    %v4739 = vunpack.c.l.b16 %v4540
    %v4740 = vunpack.c.l.b16 %v4541
    %v4741 = vunpack.c.l.b16 %v4542
    %v4742 = vunpack.c.l.b16 %v4543
    %v4743 = vunpack.c.l.b16 %v4544
    %v4744 = vunpack.c.l.b16 %v4545
    %v4745 = vunpack.c.l.b16 %v4546
    %v4746 = vunpack.c.l.b16 %v4547
    %v4747 = vunpack.c.l.b16 %v4548
    %v4748 = vunpack.c.l.b16 %v4549
    %v4749 = vunpack.c.l.b16 %v4550
    %v4750 = vunpack.c.l.b16 %v4551
    %v4751 = vunpack.c.l.b16 %v4552
    %v4752 = vunpack.c.l.b16 %v4553
    %v4753 = vunpack.c.l.b16 %v4554
    %v4754 = vunpack.c.l.b16 %v4555
    %v4755 = vunpack.c.l.b16 %v4556
    %v4756 = vunpack.c.l.b16 %v4557
    %v4757 = vunpack.c.l.b16 %v4558
    %v4758 = vunpack.c.l.b16 %v4559
    %v4759 = vunpack.c.l.b16 %v4560
    %v4760 = vunpack.c.l.b16 %v4561
    %v4761 = vunpack.c.l.b16 %v4562
    %v4762 = vunpack.c.l.b16 %v4563
    %v4763 = vunpack.c.l.b16 %v4564
    %v4764 = vunpack.c.l.b16 %v4565
    %v4765 = vunpack.c.l.b16 %v4566
    %v4766 = vunpack.c.l.b16 %v4567
    %v4767 = vunpack.c.l.b16 %v4568
    %v4768 = vunpack.c.l.b16 %v4569
    %v4769 = vunpack.c.l.b16 %v4570
    %v4770 = vunpack.c.l.b16 %v4571
    %v4771 = vunpack.c.l.b16 %v4572
    %v4772 = vunpack.c.l.b16 %v4573
    %v4773 = vunpack.c.l.b16 %v4574
    %v4774 = vunpack.c.l.b16 %v4575
    %v4775 = vunpack.c.l.b16 %v4576
    %v4776 = vunpack.c.l.b16 %v4577
    %v4777 = vunpack.c.l.b16 %v4578
    %v4778 = vunpack.c.l.b16 %v4579
    %v4779 = vunpack.c.l.b16 %v4580
    %v4780 = vunpack.c.l.b16 %v4581
    %v4781 = vunpack.c.l.b16 %v4582
    %v4782 = vunpack.c.l.b16 %v4583
    %v4783 = vunpack.c.l.b16 %v4584
    %v4784 = vunpack.c.l.b16 %v4585
    %v4785 = vunpack.c.l.b16 %v4586
    %v4786 = vunpack.c.l.b16 %v4587
    %v4787 = vunpack.c.l.b16 %v4588
    %v4788 = vunpack.c.l.b16 %v4589
    %v4789 = vunpack.c.l.b16 %v4590
    %v4790 = vunpack.c.l.b16 %v4591
    %v4791 = vunpack.c.l.b16 %v4592
    %v4792 = vunpack.c.l.b16 %v4593
    %v4793 = vunpack.c.l.b16 %v4594
    %v4794 = vunpack.c.l.b16 %v4595
    %v4795 = vunpack.c.l.b16 %v4596
    %v4796 = vunpack.c.l.b16 %v4597
    %v4797 = vunpack.c.l.b16 %v4598
    %v4798 = vunpack.c.l.b16 %v4599
    %v4799 = vunpack.c.l.b16 %v4600
    %v4800 = vunpack.c.l.b16 %v4601
    %v4801 = vunpack.c.l.b16 %v4602
    %v4802 = vunpack.c.l.b16 %v4603
    %v4803 = vunpack.c.l.b16 %v4604
    %v4804 = vunpack.c.l.b16 %v4605
    %v4805 = vunpack.c.l.b16 %v4606
    %v4806 = vunpack.c.l.b16 %v4607
    %v4807 = vunpack.c.l.b16 %v4608
    %v4808 = vunpack.c.l.b16 %v4609
    %v4809 = vunpack.c.l.b16 %v4610
    %v4810 = vunpack.c.l.b16 %v4611
    %v4811 = vunpack.c.l.b16 %v4612
    %v4812 = vunpack.c.l.b16 %v4613
    %v4813 = vunpack.c.l.b16 %v4614
    %v4814 = vunpack.c.l.b16 %v4615
    %v4815 = vunpack.c.l.b16 %v4616
    %v4816 = vunpack.c.l.b16 %v4617
    %v4817 = vunpack.c.l.b16 %v4618
    %v4818 = vunpack.c.l.b16 %v4619
    %v4819 = vunpack.c.l.b16 %v4620
    %v4820 = vunpack.c.l.b16 %v4621
    %v4821 = vpack.c.b16 %v4726, %v4725
    %v4822 = vpack.c.b16 %v4728, %v4727
    %v4823 = vpack.c.b16 %v4730, %v4729
    %v4824 = vpack.c.b16 %v4732, %v4731
    %v4825 = vpack.c.b16 %v4734, %v4733
    %v4826 = vpack.c.b16 %v4736, %v4735
    %v4827 = vpack.c.b16 %v4738, %v4737
    %v4828 = vpack.c.b16 %v4740, %v4739
    %v4829 = vpack.c.b16 %v4742, %v4741
    %v4830 = vpack.c.b16 %v4744, %v4743
    %v4831 = vpack.c.b16 %v4746, %v4745
    %v4832 = vpack.c.b16 %v4748, %v4747
    %v4833 = vpack.c.b16 %v4750, %v4749
    %v4834 = vpack.c.b16 %v4752, %v4751
    %v4835 = vpack.c.b16 %v4754, %v4753
    %v4836 = vpack.c.b16 %v4756, %v4755
    %v4837 = vpack.c.b16 %v4758, %v4757
    %v4838 = vpack.c.b16 %v4760, %v4759
    %v4839 = vpack.c.b16 %v4762, %v4761
    %v4840 = vpack.c.b16 %v4764, %v4763
    %v4841 = vpack.c.b16 %v4766, %v4765
    %v4842 = vpack.c.b16 %v4768, %v4767
    %v4843 = vpack.c.b16 %v4770, %v4769
    %v4844 = vpack.c.b16 %v4772, %v4771
    %v4845 = vpack.c.b16 %v4774, %v4773
    %v4846 = vpack.c.b16 %v4776, %v4775
    %v4847 = vpack.c.b16 %v4778, %v4777
    %v4848 = vpack.c.b16 %v4780, %v4779
    %v4849 = vpack.c.b16 %v4782, %v4781
    %v4850 = vpack.c.b16 %v4784, %v4783
    %v4851 = vpack.c.b16 %v4786, %v4785
    %v4852 = vpack.c.b16 %v4788, %v4787
    %v4853 = vpack.c.b16 %v4790, %v4789
    %v4854 = vpack.c.b16 %v4792, %v4791
    %v4855 = vpack.c.b16 %v4794, %v4793
    %v4856 = vpack.c.b16 %v4796, %v4795
    %v4857 = vpack.c.b16 %v4798, %v4797
    %v4858 = vpack.c.b16 %v4800, %v4799
    %v4859 = vpack.c.b16 %v4802, %v4801
    %v4860 = vpack.c.b16 %v4804, %v4803
    %v4861 = vpack.c.b16 %v4806, %v4805
    %v4862 = vpack.c.b16 %v4808, %v4807
    %v4863 = vpack.c.b16 %v4810, %v4809
    %v4864 = vpack.c.b16 %v4812, %v4811
    %v4865 = vpack.c.b16 %v4814, %v4813
    %v4866 = vpack.c.b16 %v4816, %v4815
    %v4867 = vpack.c.b16 %v4818, %v4817
    %v4868 = vpack.c.b16 %v4820, %v4819
    %4917 = vmatprep.subr.bf16.mxu0 0
    %4918 = vmatpush1.bf16.msra.mxu0 %v4828
    %4919 = vmatprep.subr.bf16.mxu0 0
    %4920 = vmatpush1.bf16.msra.mxu0 %v4827
    %4921 = vmatprep.subr.bf16.mxu0 0
    %4922 = vmatpush1.bf16.msra.mxu0 %v4826
    %4923 = vmatprep.subr.bf16.mxu0 0
    %4924 = vmatpush1.bf16.msra.mxu0 %v4825
    %4925 = vmatprep.subr.bf16.mxu0 0
    %4926 = vmatpush1.bf16.msra.mxu0 %v4824
    %4927 = vmatprep.subr.bf16.mxu0 0
    %4928 = vmatpush1.bf16.msra.mxu0 %v4823
    %4929 = vmatprep.subr.bf16.mxu0 0
    %4930 = vmatpush1.bf16.msra.mxu0 %v4822
    %4931 = vmatprep.subr.bf16.mxu0 0
    %4932 = vmatpush1.bf16.msra.mxu0 %v4821
    %4933 = vmatprep.subr.bf16.mxu0 0
    %4934 = vmatpush2.bf16.msra.mxu0 %v4836
    %4935 = vmatprep.subr.bf16.mxu0 0
    %4936 = vmatpush2.bf16.msra.mxu0 %v4835
    %4937 = vmatprep.subr.bf16.mxu0 0
    %4938 = vmatpush2.bf16.msra.mxu0 %v4834
    %4939 = vmatprep.subr.bf16.mxu0 0
    %4940 = vmatpush2.bf16.msra.mxu0 %v4833
    %4941 = vmatprep.subr.bf16.mxu0 0
    %4942 = vmatpush2.bf16.msra.mxu0 %v4832
    %4943 = vmatprep.subr.bf16.mxu0 0
    %4944 = vmatpush2.bf16.msra.mxu0 %v4831
    %4945 = vmatprep.subr.bf16.mxu0 0
    %4946 = vmatpush2.bf16.msra.mxu0 %v4830
    %4947 = vmatprep.subr.bf16.mxu0 0
    %4948 = vmatpush2.bf16.msra.mxu0 %v4829
    %4949 = vmatprep.mubr.bf16.mxu0 %v4521
    %4950 = vmatmul.mubr.bf16.gmra.mxu0 %v4520
    %v4951 = vpop.f32.mrf.mxu0
    %v4952 = vadd.f32 %v4627, %v4951
    %v4953 = vpop.f32.mrf.mxu0
    %v4954 = vpop.f32.mrf.mxu0
    %v4955 = vpop.f32.mrf.mxu0
    %4956 = vdwg.mxu0
    %4957 = vmatprep.subr.bf16.mxu0 0
    %4958 = vmatpush1.bf16.msra.mxu0 %v4844
    %4959 = vmatprep.subr.bf16.mxu0 0
    %4960 = vmatpush1.bf16.msra.mxu0 %v4843
    %4961 = vmatprep.subr.bf16.mxu0 0
    %4962 = vmatpush1.bf16.msra.mxu0 %v4842
    %4963 = vmatprep.subr.bf16.mxu0 0
    %4964 = vmatpush1.bf16.msra.mxu0 %v4841
    %4965 = vmatprep.subr.bf16.mxu0 0
    %4966 = vmatpush1.bf16.msra.mxu0 %v4840
    %4967 = vmatprep.subr.bf16.mxu0 0
    %4968 = vmatpush1.bf16.msra.mxu0 %v4839
    %4969 = vmatprep.subr.bf16.mxu0 0
    %4970 = vmatpush1.bf16.msra.mxu0 %v4838
    %4971 = vmatprep.subr.bf16.mxu0 0
    %4972 = vmatpush1.bf16.msra.mxu0 %v4837
    %4973 = vmatprep.subr.bf16.mxu0 0
    %4974 = vmatpush2.bf16.msra.mxu0 %v4852
    %4975 = vmatprep.subr.bf16.mxu0 0
    %4976 = vmatpush2.bf16.msra.mxu0 %v4851
    %4977 = vmatprep.subr.bf16.mxu0 0
    %4978 = vmatpush2.bf16.msra.mxu0 %v4850
    %4979 = vmatprep.subr.bf16.mxu0 0
    %4980 = vmatpush2.bf16.msra.mxu0 %v4849
    %4981 = vmatprep.subr.bf16.mxu0 0
    %4982 = vmatpush2.bf16.msra.mxu0 %v4848
    %4983 = vmatprep.subr.bf16.mxu0 0
    %4984 = vmatpush2.bf16.msra.mxu0 %v4847
    %4985 = vmatprep.subr.bf16.mxu0 0
    %4986 = vmatpush2.bf16.msra.mxu0 %v4846
    %4987 = vmatprep.subr.bf16.mxu0 0
    %4988 = vmatpush2.bf16.msra.mxu0 %v4845
    %4989 = vmatprep.mubr.bf16.mxu0 %v4523
    %4990 = vmatmul.mubr.bf16.gmra.mxu0 %v4522
    %v4991 = vpop.f32.mrf.mxu0
    %v4992 = vadd.f32 %v4952, %v4991
    %v4993 = vpop.f32.mrf.mxu0
    %v4994 = vpop.f32.mrf.mxu0
    %v4995 = vpop.f32.mrf.mxu0
    %4996 = vdwg.mxu0
    %4997 = vmatprep.subr.bf16.mxu0 0
    %4998 = vmatpush1.bf16.msra.mxu0 %v4860
    %4999 = vmatprep.subr.bf16.mxu0 0
    %5000 = vmatpush1.bf16.msra.mxu0 %v4859
    %5001 = vmatprep.subr.bf16.mxu0 0
    %5002 = vmatpush1.bf16.msra.mxu0 %v4858
    %5003 = vmatprep.subr.bf16.mxu0 0
    %5004 = vmatpush1.bf16.msra.mxu0 %v4857
    %5005 = vmatprep.subr.bf16.mxu0 0
    %5006 = vmatpush1.bf16.msra.mxu0 %v4856
    %5007 = vmatprep.subr.bf16.mxu0 0
    %5008 = vmatpush1.bf16.msra.mxu0 %v4855
    %5009 = vmatprep.subr.bf16.mxu0 0
    %5010 = vmatpush1.bf16.msra.mxu0 %v4854
    %5011 = vmatprep.subr.bf16.mxu0 0
    %5012 = vmatpush1.bf16.msra.mxu0 %v4853
    %5013 = vmatprep.subr.bf16.mxu0 0
    %5014 = vmatpush2.bf16.msra.mxu0 %v4868
    %5015 = vmatprep.subr.bf16.mxu0 0
    %5016 = vmatpush2.bf16.msra.mxu0 %v4867
    %5017 = vmatprep.subr.bf16.mxu0 0
    %5018 = vmatpush2.bf16.msra.mxu0 %v4866
    %5019 = vmatprep.subr.bf16.mxu0 0
    %5020 = vmatpush2.bf16.msra.mxu0 %v4865
    %5021 = vmatprep.subr.bf16.mxu0 0
    %5022 = vmatpush2.bf16.msra.mxu0 %v4864
    %5023 = vmatprep.subr.bf16.mxu0 0
    %5024 = vmatpush2.bf16.msra.mxu0 %v4863
    %5025 = vmatprep.subr.bf16.mxu0 0
    %5026 = vmatpush2.bf16.msra.mxu0 %v4862
    %5027 = vmatprep.subr.bf16.mxu0 0
    %5028 = vmatpush2.bf16.msra.mxu0 %v4861
    %5029 = vmatprep.mubr.bf16.mxu0 %v4525
    %5030 = vmatmul.mubr.bf16.gmra.mxu0 %v4524
    %v5031 = vpop.f32.mrf.mxu0
    %v5032 = vadd.f32 %v4992, %v5031
    %v5033 = vpop.f32.mrf.mxu0
    %v5034 = vpop.f32.mrf.mxu0
    %v5035 = vpop.f32.mrf.mxu0
    %5036 = vdwg.mxu0
    %vm5037 = vcmask 31744
    %v5038 = vsel %vm5037, %v5032, 0.0
    %5039 = vadd.xlane.f32.xlu0 %v5038
    %v5040 = vpop.xlane.xlu0 %5039
    %v5041 = vrcp.pop 4.0
    %v5042 = vmul.f32 %v5040, %v5041
    %v5043 = vsub.f32 %v5032, %v5042
    %5045 = vset.pattern.permute.xlu0 4
    %5046 = vperm.xlu0 %5045, %v5043
    %v5047 = vpop.permute.xlu0 %5046
    %v5049 = vadd.f32 %v5032, %v5047
    %5050 = vst [vmem:[%s11] sm:$0xff] %v5049
    // Predicated region
    $region78: #{dueling_q_forward.1} parent=1 // pred_check
      _
    $region79: #{dueling_q_forward.1} parent=1 // pred_check_branch
      %5052 = sbr.rel (0) target = $region81
    $region80: #{dueling_q_forward.1} parent=1 // pred_region
      _
    $region81: #{dueling_q_forward.1} parent=1 // pred_fallthru
      _
    // Predicated region
    $region82: #{dueling_q_forward.1} parent=1 // pred_check
      _
    $region83: #{dueling_q_forward.1} parent=1 // pred_check_branch
      %5054 = sbr.rel (0) target = $region85
    $region84: #{dueling_q_forward.1} parent=1 // pred_region
      _
    $region85: #{dueling_q_forward.1} parent=1 // pred_fallthru
      _
    %5055 = vsyncpa [#allocation3], 1
    %5056 = vsyncpa [#allocation5], 1
    %5057 = vsyncpa [#allocation8], 1
    %5058 = vsyncpa [#allocation11], 1
    %5059 = vsyncpa [#allocation14], 1

</llo_original>
